<compile_context>
chip_gen: v7x
topology: tpu7x:2x2x1
jax: 0.10.0
libtpu: 0.0.40
codegen_flags: <defaults>
</compile_context>

<pallas_src>
import functools

import jax
import jax.numpy as jnp
from jax import lax
from jax.experimental import pallas as pl
from jax.experimental.pallas import tpu as pltpu


# idx -> (conv_in, conv_out, kernel, stride, padding) of the original Conv2d
CONV_CFG = {
    0:  (3,   96,  7, 2, 1),
    4:  (96,  256, 5, 2, 0),
    8:  (256, 384, 3, 1, 1),
    10: (384, 384, 3, 1, 1),
    12: (384, 256, 3, 1, 1),
}
RELU_IDX = {1, 5, 9, 11, 13}
LRN_IDX = {2, 6}          # LocalResponseNorm -> None in D_ZFNet (skipped)
POOL_IDX = {3, 7, 14}     # MaxPool2d -> MaxUnpool2d
NUM_LAYERS = 15

TM = 128   # flat-output tile (MXU M dim / store sublanes)
TN = 128   # Cout tile       (MXU N dim / store lanes)


def _cdiv(a, b):
    return -(-a // b)


def _round_up(a, b):
    return _cdiv(a, b) * b


def _corr_kernel(x_ref, w_ref, o_ref, *, KY, KX, WP):
    """One (TM, TN) tile of a stride-1 2D cross-correlation over a flat spatial axis.

    x_ref: (1, 1, Lin, Cin)      zero-padded flat input of this (batch, phase);
                                 flat index = row * WP + col, WP % 8 == 0
    w_ref: (1, KY*KX, Cin, TN)   this phase's (zero-padded) sub-kernel taps, one
                                 Cout block of TN lanes
    o_ref: (1, 1, 1, TM, TN)     TM flat output positions x TN output channels
    """
    t = pl.program_id(3)
    m0 = pl.multiple_of(t * TM, TM)
    acc = jnp.zeros((TM, TN), jnp.float32)
    for ky in range(KY):
        # One hoisted slab load per tap row; WP % 8 == 0 keeps the start aligned.
        start = pl.multiple_of(m0 + ky * WP, 8)
        slab = x_ref[0, 0, pl.ds(start, TM + KX - 1), :]
        for kx in range(KX):
            # TODO(synk): per-ky tap fusion (single dot with K = KX*Cin) if these
            # static shifted slices materialize per-kx VMEM copies.
            win = slab[kx:kx + TM, :]                        # (TM, Cin)
            acc = acc + jnp.dot(win, w_ref[0, ky * KX + kx],
                                preferred_element_type=jnp.float32)
    o_ref[0, 0, 0] = acc.astype(o_ref.dtype)


def conv_transpose_nhwc(x_nhwc, w, *, stride, padding, apply_relu=False,
                        compute_dtype=jnp.bfloat16, out_dtype=None):
    """nn.ConvTranspose2d(Cin, Cout, K, stride, padding, bias=False), optionally
    preceded by a fused nn.ReLU.  NHWC in / NHWC out.

    x_nhwc: (N, H, W, Cin);  w: (Cin, Cout, K, K) (torch ConvTranspose layout, i.e.
    the shared torch Conv2d weight (conv_out, conv_in, K, K) read in place).

    Stride > 1 uses output-phase (sub-pixel) decomposition: each of the stride^2
    phases is a plain stride-1 correlation of the *undilated* input with a flipped
    sub-kernel.  All phases, Cout blocks and flat tiles run in ONE pallas_call over
    the grid (batch, phase, cout_block, flat_tile).
    """
    n, hin, win_, cin = x_nhwc.shape
    wcin, cout, K, _ = w.shape
    assert wcin == cin, (wcin, cin)
    s, p = stride, padding
    ho = (hin - 1) * s - 2 * p + K
    wo = (win_ - 1) * s - 2 * p + K
    out_dtype = out_dtype if out_dtype is not None else x_nhwc.dtype

    if apply_relu:
        x_nhwc = jnp.maximum(x_nhwc, 0)       # fused by XLA with the cast/pads below
    xc = x_nhwc.astype(compute_dtype)
    wc = w.astype(compute_dtype)

    # ---- per-phase geometry (sub-pixel decomposition) -----------------------------
    phases = []
    for py in range(s):
        for px in range(s):
            ry, rx = (py + p) % s, (px + p) % s
            ky_n, kx_n = _cdiv(K - ry, s), _cdiv(K - rx, s)
            off_y = (py + p - ry) // s - ky_n + 1
            off_x = (px + p - rx) // s - kx_n + 1
            phases.append((ry, rx, ky_n, kx_n, off_y, off_x))
    KY = max(ph[2] for ph in phases)
    KX = max(ph[3] for ph in phases)
    HO_PH = _cdiv(ho, s)                       # phase-output rows (max over phases)
    WO_PH = _cdiv(wo, s)                       # phase-output cols (max over phases)
    HP = HO_PH + KY - 1                        # common per-phase padded height
    WP = _round_up(WO_PH + KX - 1, 8)          # flat row pitch, sublane aligned

    n_ph = s * s
    cout_pad = _round_up(cout, TN)             # lane-dense output tiles
    n_cb = cout_pad // TN
    lo = HO_PH * WP                            # flat outputs kept per phase
    n_tiles = _cdiv(lo, TM)
    lin = n_tiles * TM + (KY - 1) * WP + KX - 1    # every tap read stays in bounds
    taps = KY * KX

    # ---- stacked per-phase flat inputs and (flipped, zero-padded) sub-kernels -----
    zero = jnp.zeros((), compute_dtype)
    xs, ws = [], []
    for (ry, rx, ky_n, kx_n, off_y, off_x) in phases:
        xp = lax.pad(xc, zero,
                     ((0, 0, 0),
                      (-off_y, HP + off_y - hin, 0),
                      (-off_x, WP + off_x - win_, 0),
                      (0, 0, 0)))
        xp = xp.reshape(n, HP * WP, cin)
        xp = lax.pad(xp, zero, ((0, 0, 0), (0, lin - HP * WP, 0), (0, 0, 0)))
        xs.append(xp)
        wf = jnp.flip(wc[:, :, ry::s, rx::s], axis=(2, 3))    # (cin, cout, ky_n, kx_n)
        wf = jnp.transpose(wf, (2, 3, 0, 1))                  # (ky_n, kx_n, cin, cout)
        wf = lax.pad(wf, zero, ((0, KY - ky_n, 0), (0, KX - kx_n, 0),
                                (0, 0, 0), (0, cout_pad - cout, 0)))
        ws.append(wf.reshape(taps, cin, cout_pad))
    xflat = jnp.stack(xs, axis=1)              # (N, n_ph, lin, cin)
    wstk = jnp.stack(ws, axis=0)               # (n_ph, taps, cin, cout_pad)

    itemsize = jnp.dtype(compute_dtype).itemsize
    need = (2 * lin * cin * itemsize           # input block  (double buffered)
            + 2 * taps * cin * TN * itemsize   # weight block (double buffered)
            + 2 * TM * TN * 4                  # output block (double buffered)
            + 2 * TM * TN * 4)                 # accumulator / headroom
    vmem_bytes = int(min(max(need + (8 << 20), 32 << 20), 48 << 20))

    kernel = functools.partial(_corr_kernel, KY=KY, KX=KX, WP=WP)
    out = pl.pallas_call(
        kernel,
        out_shape=jax.ShapeDtypeStruct((n, n_ph, n_cb, n_tiles * TM, TN), jnp.float32),
        grid_spec=pltpu.PrefetchScalarGridSpec(
            num_scalar_prefetch=0,
            grid=(n, n_ph, n_cb, n_tiles),
            in_specs=[
                pl.BlockSpec((1, 1, lin, cin), lambda b, ph, j, t: (b, ph, 0, 0)),
                pl.BlockSpec((1, taps, cin, TN), lambda b, ph, j, t: (ph, 0, 0, j)),
            ],
            out_specs=pl.BlockSpec((1, 1, 1, TM, TN),
                                   lambda b, ph, j, t: (b, ph, j, t, 0)),
        ),
        compiler_params=pltpu.CompilerParams(
            dimension_semantics=("parallel", "parallel", "parallel", "parallel"),
            vmem_limit_bytes=vmem_bytes),
    )(xflat, wstk)

    # ---- un-flatten, drop padding, and sub-pixel recompose -------------------------
    img = out[:, :, :, :lo, :].reshape(n, n_ph, n_cb, HO_PH, WP, TN)
    img = img[:, :, :, :, :WO_PH, :]
    img = jnp.transpose(img, (0, 1, 3, 4, 2, 5)).reshape(n, n_ph, HO_PH, WO_PH, cout_pad)
    img = img[..., :cout].astype(out_dtype)
    # phase (py, px) owns output pixels (s*oy + py, s*ox + px)
    img = img.reshape(n, s, s, HO_PH, WO_PH, cout)
    img = jnp.transpose(img, (0, 3, 1, 4, 2, 5)).reshape(n, HO_PH * s, WO_PH * s, cout)
    return img[:, :ho, :wo, :]


def conv_transpose_nchw(x, w, *, stride, padding, apply_relu=False,
                        compute_dtype=jnp.bfloat16):
    """NCHW convenience wrapper (used for per-layer validation)."""
    y = conv_transpose_nhwc(jnp.transpose(x, (0, 2, 3, 1)), w,
                            stride=stride, padding=padding, apply_relu=apply_relu,
                            compute_dtype=compute_dtype, out_dtype=x.dtype)
    return jnp.transpose(y, (0, 3, 1, 2))


def d_zfnet_forward(x_nchw, idx_vis, weights, compute_dtype=jnp.bfloat16):
    """D_ZFNet.forward(x, idx_vis, net): walk layers idx_vis..0 in reverse.

    Activations stay NHWC between layers; NCHW only at the module boundary.
    """
    if not 0 <= idx_vis < NUM_LAYERS:
        raise ValueError(
            "idx_vis must in the range {} - {}".format(0, NUM_LAYERS - 1))
    x = jnp.transpose(x_nchw, (0, 2, 3, 1))
    pending_relu = False
    for idx in range(idx_vis, -1, -1):
        if idx in LRN_IDX:
            continue                      # self.layers[idx] is None -> skipped
        elif idx in RELU_IDX:
            pending_relu = True           # fused into the next ConvTranspose wrapper
        elif idx in POOL_IDX:
            # TODO(synk): MaxUnpool2d needs net.pool_locs / net.feature_maps from a
            # ZFNet forward pass (scatter by pooling indices); not exercised here.
            raise NotImplementedError("MaxUnpool2d path requires ZFNet forward state")
        else:
            cfg = CONV_CFG[idx]
            x = conv_transpose_nhwc(x, weights[idx], stride=cfg[3], padding=cfg[4],
                                    apply_relu=pending_relu,
                                    compute_dtype=compute_dtype)
            pending_relu = False
    if pending_relu:
        x = jnp.maximum(x, 0.0)
    return jnp.transpose(x, (0, 3, 1, 2))


def _xla_deconv_ref(x, w, *, stride, padding, apply_relu,
                    compute_dtype=jnp.bfloat16):
    """XLA reference: ConvTranspose2d(relu?(x)) as an lhs-dilated convolution with the
    same bf16-operand / f32-accumulate numerics as the Pallas path."""
    K = w.shape[-1]
    pe = K - 1 - padding
    xr = jnp.transpose(x, (0, 2, 3, 1))
    if apply_relu:
        xr = jnp.maximum(xr, 0.0)
    xr = xr.astype(compute_dtype)
    w_hwio = jnp.transpose(jnp.flip(w, axis=(2, 3)), (2, 3, 0, 1)).astype(compute_dtype)
    y = lax.conv_general_dilated(
        xr, w_hwio, window_strides=(1, 1),
        padding=((pe, pe), (pe, pe)), lhs_dilation=(stride, stride),
        dimension_numbers=("NHWC", "HWIO", "NHWC"),
        preferred_element_type=jnp.float32)
    return jnp.transpose(y, (0, 3, 1, 2)).astype(x.dtype)


if __name__ == "__main__":
    key = jax.random.PRNGKey(0)

    # Deterministic synthetic weights for every (shared) Conv2d / ConvTranspose2d.
    # torch Conv2d weight layout (conv_out, conv_in, K, K); the ConvTranspose2d reads
    # the same tensor as (in_channels=conv_out, out_channels=conv_in, K, K).
    weights = {}
    for idx in sorted(CONV_CFG):
        cin, cout, K, s, p = CONV_CFG[idx]
        key, sub = jax.random.split(key)
        weights[idx] = 0.05 * jax.random.normal(sub, (cout, cin, K, K), jnp.float32)

    # Main demo: visualization from layer idx 2 (LRN=None -> ReLU -> deconv 96->3,
    # k7 s2 p1) on a synthetic 96-channel feature map.
    key, sub = jax.random.split(key)
    x = jax.random.normal(sub, (2, 96, 8, 8), jnp.float32)
    idx_vis = 2
    fwd = jax.jit(functools.partial(d_zfnet_forward, idx_vis=idx_vis))
    out = jax.block_until_ready(fwd(x, weights=weights))
    assert out.shape == (2, 3, 19, 19), out.shape
    ref = _xla_deconv_ref(x, weights[0], stride=2, padding=1, apply_relu=True)
    if not bool(jnp.allclose(out, ref, atol=2e-2, rtol=2e-2)):
        err = float(jnp.max(jnp.abs(out - ref)))
        raise AssertionError("idx_vis=2 path mismatch, max abs err %g" % err)

    # Per-layer validation of every ConvTranspose in CONV_CFG (covers the stride-2
    # phase-decomposition math for layer 4 and the channel-heavy layers 8/10/12).
    test_inputs = {0: (2, 96, 8, 8), 4: (1, 256, 5, 5), 8: (1, 384, 6, 6),
                   10: (1, 384, 6, 6), 12: (1, 256, 6, 6)}
    for idx in sorted(CONV_CFG):
        _, _, K, s, p = CONV_CFG[idx]
        key, sub = jax.random.split(key)
        xi = jax.random.normal(sub, test_inputs[idx], jnp.float32)
        got = jax.block_until_ready(
            conv_transpose_nchw(xi, weights[idx], stride=s, padding=p, apply_relu=True))
        want = _xla_deconv_ref(xi, weights[idx], stride=s, padding=p, apply_relu=True)
        assert got.shape == want.shape, (idx, got.shape, want.shape)
        if not bool(jnp.allclose(got, want, atol=2e-2, rtol=2e-2)):
            err = float(jnp.max(jnp.abs(got - want)))
            raise AssertionError("layer %d deconv mismatch, max abs err %g" % (idx, err))

    print("KERNEL_OK")
</pallas_src>

<mosaic_0001>
module attributes {stable_mosaic.version = 11 : i64} {
  func.func @_corr_kernel(%arg0: i32, %arg1: i32, %arg2: i32, %arg3: i32, %arg4: memref<1x1x307x96xbf16, #tpu.memory_space<vmem>>, %arg5: memref<1x16x96x128xbf16, #tpu.memory_space<vmem>>, %arg6: memref<1x1x1x128x128xf32, #tpu.memory_space<vmem>>) attributes {dimension_semantics = [#tpu.dimension_semantics<parallel>, #tpu.dimension_semantics<parallel>, #tpu.dimension_semantics<parallel>, #tpu.dimension_semantics<parallel>], iteration_bounds = array<i64: 2, 4, 1, 2>, scalar_prefetch = 0 : i64, scratch_operands = 0 : i64, tpu.core_type = #tpu.core_type<tc>, window_params = [{transform_indices = @transform_0, window_bounds = array<i64: 1, 1, 307, 96>}, {transform_indices = @transform_1, window_bounds = array<i64: 1, 16, 96, 128>}, {transform_indices = @transform_2, window_bounds = array<i64: 1, 1, 1, 128, 128>}]} {
    %c128_i32 = arith.constant 128 : i32
    %0 = arith.muli %arg3, %c128_i32 : i32
    %1 = tpu.assume_multiple %0, 128 : i32
    %cst = arith.constant 0.000000e+00 : f32
    %2 = vector.broadcast %cst : f32 to vector<128x128xf32>
    %c0_i32 = arith.constant 0 : i32
    %3 = arith.addi %1, %c0_i32 : i32
    %4 = tpu.assume_multiple %3, 8 : i32
    %c0 = arith.constant 0 : index
    %c0_0 = arith.constant 0 : index
    %5 = arith.index_cast %4 : i32 to index
    %c0_1 = arith.constant 0 : index
    %6 = vector.load %arg4[%c0, %c0_0, %5, %c0_1] : memref<1x1x307x96xbf16, #tpu.memory_space<vmem>>, vector<1x1x131x96xbf16>
    %7 = vector.shape_cast %6 : vector<1x1x131x96xbf16> to vector<131x96xbf16>
    %8 = vector.extract_strided_slice %7 {offsets = [0, 0], sizes = [128, 96], strides = [1, 1]} : vector<131x96xbf16> to vector<128x96xbf16>
    %c0_2 = arith.constant 0 : index
    %c0_3 = arith.constant 0 : index
    %c0_4 = arith.constant 0 : index
    %c0_5 = arith.constant 0 : index
    %9 = vector.load %arg5[%c0_2, %c0_3, %c0_4, %c0_5] : memref<1x16x96x128xbf16, #tpu.memory_space<vmem>>, vector<1x1x96x128xbf16>
    %10 = vector.shape_cast %9 : vector<1x1x96x128xbf16> to vector<96x128xbf16>
    %cst_6 = arith.constant dense<0.000000e+00> : vector<128x128xf32>
    %11 = tpu.matmul %8, %10, %cst_6 {dimension_numbers = #tpu.dot_dimension_numbers<[1], [0], [0], [1], [0, 0, 1, 1], [], []>} : vector<128x96xbf16>, vector<96x128xbf16>, vector<128x128xf32> -> vector<128x128xf32>
    %12 = arith.addf %2, %11 : vector<128x128xf32>
    %13 = vector.extract_strided_slice %7 {offsets = [1, 0], sizes = [128, 96], strides = [1, 1]} : vector<131x96xbf16> to vector<128x96xbf16>
    %c0_7 = arith.constant 0 : index
    %c1 = arith.constant 1 : index
    %c0_8 = arith.constant 0 : index
    %c0_9 = arith.constant 0 : index
    %14 = vector.load %arg5[%c0_7, %c1, %c0_8, %c0_9] : memref<1x16x96x128xbf16, #tpu.memory_space<vmem>>, vector<1x1x96x128xbf16>
    %15 = vector.shape_cast %14 : vector<1x1x96x128xbf16> to vector<96x128xbf16>
    %cst_10 = arith.constant dense<0.000000e+00> : vector<128x128xf32>
    %16 = tpu.matmul %13, %15, %cst_10 {dimension_numbers = #tpu.dot_dimension_numbers<[1], [0], [0], [1], [0, 0, 1, 1], [], []>} : vector<128x96xbf16>, vector<96x128xbf16>, vector<128x128xf32> -> vector<128x128xf32>
    %17 = arith.addf %12, %16 : vector<128x128xf32>
    %18 = vector.extract_strided_slice %7 {offsets = [2, 0], sizes = [128, 96], strides = [1, 1]} : vector<131x96xbf16> to vector<128x96xbf16>
    %c0_11 = arith.constant 0 : index
    %c2 = arith.constant 2 : index
    %c0_12 = arith.constant 0 : index
    %c0_13 = arith.constant 0 : index
    %19 = vector.load %arg5[%c0_11, %c2, %c0_12, %c0_13] : memref<1x16x96x128xbf16, #tpu.memory_space<vmem>>, vector<1x1x96x128xbf16>
    %20 = vector.shape_cast %19 : vector<1x1x96x128xbf16> to vector<96x128xbf16>
    %cst_14 = arith.constant dense<0.000000e+00> : vector<128x128xf32>
    %21 = tpu.matmul %18, %20, %cst_14 {dimension_numbers = #tpu.dot_dimension_numbers<[1], [0], [0], [1], [0, 0, 1, 1], [], []>} : vector<128x96xbf16>, vector<96x128xbf16>, vector<128x128xf32> -> vector<128x128xf32>
    %22 = arith.addf %17, %21 : vector<128x128xf32>
    %23 = vector.extract_strided_slice %7 {offsets = [3, 0], sizes = [128, 96], strides = [1, 1]} : vector<131x96xbf16> to vector<128x96xbf16>
    %c0_15 = arith.constant 0 : index
    %c3 = arith.constant 3 : index
    %c0_16 = arith.constant 0 : index
    %c0_17 = arith.constant 0 : index
    %24 = vector.load %arg5[%c0_15, %c3, %c0_16, %c0_17] : memref<1x16x96x128xbf16, #tpu.memory_space<vmem>>, vector<1x1x96x128xbf16>
    %25 = vector.shape_cast %24 : vector<1x1x96x128xbf16> to vector<96x128xbf16>
    %cst_18 = arith.constant dense<0.000000e+00> : vector<128x128xf32>
    %26 = tpu.matmul %23, %25, %cst_18 {dimension_numbers = #tpu.dot_dimension_numbers<[1], [0], [0], [1], [0, 0, 1, 1], [], []>} : vector<128x96xbf16>, vector<96x128xbf16>, vector<128x128xf32> -> vector<128x128xf32>
    %27 = arith.addf %22, %26 : vector<128x128xf32>
    %c16_i32 = arith.constant 16 : i32
    %28 = arith.addi %1, %c16_i32 : i32
    %29 = tpu.assume_multiple %28, 8 : i32
    %c0_19 = arith.constant 0 : index
    %c0_20 = arith.constant 0 : index
    %30 = arith.index_cast %29 : i32 to index
    %c0_21 = arith.constant 0 : index
    %31 = vector.load %arg4[%c0_19, %c0_20, %30, %c0_21] : memref<1x1x307x96xbf16, #tpu.memory_space<vmem>>, vector<1x1x131x96xbf16>
    %32 = vector.shape_cast %31 : vector<1x1x131x96xbf16> to vector<131x96xbf16>
    %33 = vector.extract_strided_slice %32 {offsets = [0, 0], sizes = [128, 96], strides = [1, 1]} : vector<131x96xbf16> to vector<128x96xbf16>
    %c0_22 = arith.constant 0 : index
    %c4 = arith.constant 4 : index
    %c0_23 = arith.constant 0 : index
    %c0_24 = arith.constant 0 : index
    %34 = vector.load %arg5[%c0_22, %c4, %c0_23, %c0_24] : memref<1x16x96x128xbf16, #tpu.memory_space<vmem>>, vector<1x1x96x128xbf16>
    %35 = vector.shape_cast %34 : vector<1x1x96x128xbf16> to vector<96x128xbf16>
    %cst_25 = arith.constant dense<0.000000e+00> : vector<128x128xf32>
    %36 = tpu.matmul %33, %35, %cst_25 {dimension_numbers = #tpu.dot_dimension_numbers<[1], [0], [0], [1], [0, 0, 1, 1], [], []>} : vector<128x96xbf16>, vector<96x128xbf16>, vector<128x128xf32> -> vector<128x128xf32>
    %37 = arith.addf %27, %36 : vector<128x128xf32>
    %38 = vector.extract_strided_slice %32 {offsets = [1, 0], sizes = [128, 96], strides = [1, 1]} : vector<131x96xbf16> to vector<128x96xbf16>
    %c0_26 = arith.constant 0 : index
    %c5 = arith.constant 5 : index
    %c0_27 = arith.constant 0 : index
    %c0_28 = arith.constant 0 : index
    %39 = vector.load %arg5[%c0_26, %c5, %c0_27, %c0_28] : memref<1x16x96x128xbf16, #tpu.memory_space<vmem>>, vector<1x1x96x128xbf16>
    %40 = vector.shape_cast %39 : vector<1x1x96x128xbf16> to vector<96x128xbf16>
    %cst_29 = arith.constant dense<0.000000e+00> : vector<128x128xf32>
    %41 = tpu.matmul %38, %40, %cst_29 {dimension_numbers = #tpu.dot_dimension_numbers<[1], [0], [0], [1], [0, 0, 1, 1], [], []>} : vector<128x96xbf16>, vector<96x128xbf16>, vector<128x128xf32> -> vector<128x128xf32>
    %42 = arith.addf %37, %41 : vector<128x128xf32>
    %43 = vector.extract_strided_slice %32 {offsets = [2, 0], sizes = [128, 96], strides = [1, 1]} : vector<131x96xbf16> to vector<128x96xbf16>
    %c0_30 = arith.constant 0 : index
    %c6 = arith.constant 6 : index
    %c0_31 = arith.constant 0 : index
    %c0_32 = arith.constant 0 : index
    %44 = vector.load %arg5[%c0_30, %c6, %c0_31, %c0_32] : memref<1x16x96x128xbf16, #tpu.memory_space<vmem>>, vector<1x1x96x128xbf16>
    %45 = vector.shape_cast %44 : vector<1x1x96x128xbf16> to vector<96x128xbf16>
    %cst_33 = arith.constant dense<0.000000e+00> : vector<128x128xf32>
    %46 = tpu.matmul %43, %45, %cst_33 {dimension_numbers = #tpu.dot_dimension_numbers<[1], [0], [0], [1], [0, 0, 1, 1], [], []>} : vector<128x96xbf16>, vector<96x128xbf16>, vector<128x128xf32> -> vector<128x128xf32>
    %47 = arith.addf %42, %46 : vector<128x128xf32>
    %48 = vector.extract_strided_slice %32 {offsets = [3, 0], sizes = [128, 96], strides = [1, 1]} : vector<131x96xbf16> to vector<128x96xbf16>
    %c0_34 = arith.constant 0 : index
    %c7 = arith.constant 7 : index
    %c0_35 = arith.constant 0 : index
    %c0_36 = arith.constant 0 : index
    %49 = vector.load %arg5[%c0_34, %c7, %c0_35, %c0_36] : memref<1x16x96x128xbf16, #tpu.memory_space<vmem>>, vector<1x1x96x128xbf16>
    %50 = vector.shape_cast %49 : vector<1x1x96x128xbf16> to vector<96x128xbf16>
    %cst_37 = arith.constant dense<0.000000e+00> : vector<128x128xf32>
    %51 = tpu.matmul %48, %50, %cst_37 {dimension_numbers = #tpu.dot_dimension_numbers<[1], [0], [0], [1], [0, 0, 1, 1], [], []>} : vector<128x96xbf16>, vector<96x128xbf16>, vector<128x128xf32> -> vector<128x128xf32>
    %52 = arith.addf %47, %51 : vector<128x128xf32>
    %c32_i32 = arith.constant 32 : i32
    %53 = arith.addi %1, %c32_i32 : i32
    %54 = tpu.assume_multiple %53, 8 : i32
    %c0_38 = arith.constant 0 : index
    %c0_39 = arith.constant 0 : index
    %55 = arith.index_cast %54 : i32 to index
    %c0_40 = arith.constant 0 : index
    %56 = vector.load %arg4[%c0_38, %c0_39, %55, %c0_40] : memref<1x1x307x96xbf16, #tpu.memory_space<vmem>>, vector<1x1x131x96xbf16>
    %57 = vector.shape_cast %56 : vector<1x1x131x96xbf16> to vector<131x96xbf16>
    %58 = vector.extract_strided_slice %57 {offsets = [0, 0], sizes = [128, 96], strides = [1, 1]} : vector<131x96xbf16> to vector<128x96xbf16>
    %c0_41 = arith.constant 0 : index
    %c8 = arith.constant 8 : index
    %c0_42 = arith.constant 0 : index
    %c0_43 = arith.constant 0 : index
    %59 = vector.load %arg5[%c0_41, %c8, %c0_42, %c0_43] : memref<1x16x96x128xbf16, #tpu.memory_space<vmem>>, vector<1x1x96x128xbf16>
    %60 = vector.shape_cast %59 : vector<1x1x96x128xbf16> to vector<96x128xbf16>
    %cst_44 = arith.constant dense<0.000000e+00> : vector<128x128xf32>
    %61 = tpu.matmul %58, %60, %cst_44 {dimension_numbers = #tpu.dot_dimension_numbers<[1], [0], [0], [1], [0, 0, 1, 1], [], []>} : vector<128x96xbf16>, vector<96x128xbf16>, vector<128x128xf32> -> vector<128x128xf32>
    %62 = arith.addf %52, %61 : vector<128x128xf32>
    %63 = vector.extract_strided_slice %57 {offsets = [1, 0], sizes = [128, 96], strides = [1, 1]} : vector<131x96xbf16> to vector<128x96xbf16>
    %c0_45 = arith.constant 0 : index
    %c9 = arith.constant 9 : index
    %c0_46 = arith.constant 0 : index
    %c0_47 = arith.constant 0 : index
    %64 = vector.load %arg5[%c0_45, %c9, %c0_46, %c0_47] : memref<1x16x96x128xbf16, #tpu.memory_space<vmem>>, vector<1x1x96x128xbf16>
    %65 = vector.shape_cast %64 : vector<1x1x96x128xbf16> to vector<96x128xbf16>
    %cst_48 = arith.constant dense<0.000000e+00> : vector<128x128xf32>
    %66 = tpu.matmul %63, %65, %cst_48 {dimension_numbers = #tpu.dot_dimension_numbers<[1], [0], [0], [1], [0, 0, 1, 1], [], []>} : vector<128x96xbf16>, vector<96x128xbf16>, vector<128x128xf32> -> vector<128x128xf32>
    %67 = arith.addf %62, %66 : vector<128x128xf32>
    %68 = vector.extract_strided_slice %57 {offsets = [2, 0], sizes = [128, 96], strides = [1, 1]} : vector<131x96xbf16> to vector<128x96xbf16>
    %c0_49 = arith.constant 0 : index
    %c10 = arith.constant 10 : index
    %c0_50 = arith.constant 0 : index
    %c0_51 = arith.constant 0 : index
    %69 = vector.load %arg5[%c0_49, %c10, %c0_50, %c0_51] : memref<1x16x96x128xbf16, #tpu.memory_space<vmem>>, vector<1x1x96x128xbf16>
    %70 = vector.shape_cast %69 : vector<1x1x96x128xbf16> to vector<96x128xbf16>
    %cst_52 = arith.constant dense<0.000000e+00> : vector<128x128xf32>
    %71 = tpu.matmul %68, %70, %cst_52 {dimension_numbers = #tpu.dot_dimension_numbers<[1], [0], [0], [1], [0, 0, 1, 1], [], []>} : vector<128x96xbf16>, vector<96x128xbf16>, vector<128x128xf32> -> vector<128x128xf32>
    %72 = arith.addf %67, %71 : vector<128x128xf32>
    %73 = vector.extract_strided_slice %57 {offsets = [3, 0], sizes = [128, 96], strides = [1, 1]} : vector<131x96xbf16> to vector<128x96xbf16>
    %c0_53 = arith.constant 0 : index
    %c11 = arith.constant 11 : index
    %c0_54 = arith.constant 0 : index
    %c0_55 = arith.constant 0 : index
    %74 = vector.load %arg5[%c0_53, %c11, %c0_54, %c0_55] : memref<1x16x96x128xbf16, #tpu.memory_space<vmem>>, vector<1x1x96x128xbf16>
    %75 = vector.shape_cast %74 : vector<1x1x96x128xbf16> to vector<96x128xbf16>
    %cst_56 = arith.constant dense<0.000000e+00> : vector<128x128xf32>
    %76 = tpu.matmul %73, %75, %cst_56 {dimension_numbers = #tpu.dot_dimension_numbers<[1], [0], [0], [1], [0, 0, 1, 1], [], []>} : vector<128x96xbf16>, vector<96x128xbf16>, vector<128x128xf32> -> vector<128x128xf32>
    %77 = arith.addf %72, %76 : vector<128x128xf32>
    %c48_i32 = arith.constant 48 : i32
    %78 = arith.addi %1, %c48_i32 : i32
    %79 = tpu.assume_multiple %78, 8 : i32
    %c0_57 = arith.constant 0 : index
    %c0_58 = arith.constant 0 : index
    %80 = arith.index_cast %79 : i32 to index
    %c0_59 = arith.constant 0 : index
    %81 = vector.load %arg4[%c0_57, %c0_58, %80, %c0_59] : memref<1x1x307x96xbf16, #tpu.memory_space<vmem>>, vector<1x1x131x96xbf16>
    %82 = vector.shape_cast %81 : vector<1x1x131x96xbf16> to vector<131x96xbf16>
    %83 = vector.extract_strided_slice %82 {offsets = [0, 0], sizes = [128, 96], strides = [1, 1]} : vector<131x96xbf16> to vector<128x96xbf16>
    %c0_60 = arith.constant 0 : index
    %c12 = arith.constant 12 : index
    %c0_61 = arith.constant 0 : index
    %c0_62 = arith.constant 0 : index
    %84 = vector.load %arg5[%c0_60, %c12, %c0_61, %c0_62] : memref<1x16x96x128xbf16, #tpu.memory_space<vmem>>, vector<1x1x96x128xbf16>
    %85 = vector.shape_cast %84 : vector<1x1x96x128xbf16> to vector<96x128xbf16>
    %cst_63 = arith.constant dense<0.000000e+00> : vector<128x128xf32>
    %86 = tpu.matmul %83, %85, %cst_63 {dimension_numbers = #tpu.dot_dimension_numbers<[1], [0], [0], [1], [0, 0, 1, 1], [], []>} : vector<128x96xbf16>, vector<96x128xbf16>, vector<128x128xf32> -> vector<128x128xf32>
    %87 = arith.addf %77, %86 : vector<128x128xf32>
    %88 = vector.extract_strided_slice %82 {offsets = [1, 0], sizes = [128, 96], strides = [1, 1]} : vector<131x96xbf16> to vector<128x96xbf16>
    %c0_64 = arith.constant 0 : index
    %c13 = arith.constant 13 : index
    %c0_65 = arith.constant 0 : index
    %c0_66 = arith.constant 0 : index
    %89 = vector.load %arg5[%c0_64, %c13, %c0_65, %c0_66] : memref<1x16x96x128xbf16, #tpu.memory_space<vmem>>, vector<1x1x96x128xbf16>
    %90 = vector.shape_cast %89 : vector<1x1x96x128xbf16> to vector<96x128xbf16>
    %cst_67 = arith.constant dense<0.000000e+00> : vector<128x128xf32>
    %91 = tpu.matmul %88, %90, %cst_67 {dimension_numbers = #tpu.dot_dimension_numbers<[1], [0], [0], [1], [0, 0, 1, 1], [], []>} : vector<128x96xbf16>, vector<96x128xbf16>, vector<128x128xf32> -> vector<128x128xf32>
    %92 = arith.addf %87, %91 : vector<128x128xf32>
    %93 = vector.extract_strided_slice %82 {offsets = [2, 0], sizes = [128, 96], strides = [1, 1]} : vector<131x96xbf16> to vector<128x96xbf16>
    %c0_68 = arith.constant 0 : index
    %c14 = arith.constant 14 : index
    %c0_69 = arith.constant 0 : index
    %c0_70 = arith.constant 0 : index
    %94 = vector.load %arg5[%c0_68, %c14, %c0_69, %c0_70] : memref<1x16x96x128xbf16, #tpu.memory_space<vmem>>, vector<1x1x96x128xbf16>
    %95 = vector.shape_cast %94 : vector<1x1x96x128xbf16> to vector<96x128xbf16>
    %cst_71 = arith.constant dense<0.000000e+00> : vector<128x128xf32>
    %96 = tpu.matmul %93, %95, %cst_71 {dimension_numbers = #tpu.dot_dimension_numbers<[1], [0], [0], [1], [0, 0, 1, 1], [], []>} : vector<128x96xbf16>, vector<96x128xbf16>, vector<128x128xf32> -> vector<128x128xf32>
    %97 = arith.addf %92, %96 : vector<128x128xf32>
    %98 = vector.extract_strided_slice %82 {offsets = [3, 0], sizes = [128, 96], strides = [1, 1]} : vector<131x96xbf16> to vector<128x96xbf16>
    %c0_72 = arith.constant 0 : index
    %c15 = arith.constant 15 : index
    %c0_73 = arith.constant 0 : index
    %c0_74 = arith.constant 0 : index
    %99 = vector.load %arg5[%c0_72, %c15, %c0_73, %c0_74] : memref<1x16x96x128xbf16, #tpu.memory_space<vmem>>, vector<1x1x96x128xbf16>
    %100 = vector.shape_cast %99 : vector<1x1x96x128xbf16> to vector<96x128xbf16>
    %cst_75 = arith.constant dense<0.000000e+00> : vector<128x128xf32>
    %101 = tpu.matmul %98, %100, %cst_75 {dimension_numbers = #tpu.dot_dimension_numbers<[1], [0], [0], [1], [0, 0, 1, 1], [], []>} : vector<128x96xbf16>, vector<96x128xbf16>, vector<128x128xf32> -> vector<128x128xf32>
    %102 = arith.addf %97, %101 : vector<128x128xf32>
    %c0_76 = arith.constant 0 : index
    %c0_77 = arith.constant 0 : index
    %c0_78 = arith.constant 0 : index
    %c0_79 = arith.constant 0 : index
    %c0_80 = arith.constant 0 : index
    %103 = vector.load %arg6[%c0_76, %c0_77, %c0_78, %c0_79, %c0_80] : memref<1x1x1x128x128xf32, #tpu.memory_space<vmem>>, vector<1x1x1x128x128xf32>
    %104 = vector.shape_cast %103 : vector<1x1x1x128x128xf32> to vector<128x128xf32>
    %105 = vector.shape_cast %102 : vector<128x128xf32> to vector<1x1x1x128x128xf32>
    tpu.vector_store %arg6[%c0_76, %c0_77, %c0_78, %c0_79, %c0_80], %105 {strides = array<i32>} : memref<1x1x1x128x128xf32, #tpu.memory_space<vmem>>, vector<1x1x1x128x128xf32>,
    return
  }
  func.func @transform_0(%arg0: i32, %arg1: i32, %arg2: i32, %arg3: i32) -> (i32, i32, i32, i32) {
    %c0_i32 = arith.constant 0 : i32
    %c0_i32_0 = arith.constant 0 : i32
    %c0_i32_1 = arith.constant 0 : i32
    return %arg0, %arg1, %c0_i32, %c0_i32_0 : i32, i32, i32, i32
  }
  func.func @transform_1(%arg0: i32, %arg1: i32, %arg2: i32, %arg3: i32) -> (i32, i32, i32, i32) {
    %c0_i32 = arith.constant 0 : i32
    %c0_i32_0 = arith.constant 0 : i32
    %c0_i32_1 = arith.constant 0 : i32
    return %arg1, %c0_i32, %c0_i32_0, %arg2 : i32, i32, i32, i32
  }
  func.func @transform_2(%arg0: i32, %arg1: i32, %arg2: i32, %arg3: i32) -> (i32, i32, i32, i32, i32) {
    %c0_i32 = arith.constant 0 : i32
    %c0_i32_0 = arith.constant 0 : i32
    return %arg0, %arg1, %arg2, %arg3, %c0_i32 : i32, i32, i32, i32, i32
  }
}

</mosaic_0001>

<llo_original>
// kernel: d_zfnet_forward.1
$region0: #{d_zfnet_forward.1}
  #allocation0 [shape = 'u32[]', space=smem, size = 0x4, offset = 0x4, fixed_abs, tag = 'smem constant byte address 0x4 - core index']
  #allocation1 [shape = 'u32[144,128]{1,0:T(1,128)}', space=vmem, size = 0x12000, scoped, tag = 'internal scratch']
  %s0 = inlined_call_operand.vmem [shape: bf16[2,4,307,96], index: 0, kind: input, shape index: {}]
  %s1 = inlined_call_operand.vmem [shape: bf16[4,16,96,128], index: 1, kind: input, shape index: {}]
  %s2 = inlined_call_operand.vmem [shape: f32[2,4,1,256,128], index: 2, kind: output, shape index: {}]
  %s3 = sld [smem:[#allocation0]]
  $region41: #{d_zfnet_forward.1} parent=0
    _
  %s5 = ssub.s32 1, %s3
  %s6 = scalar_select 0, %s5, %s3
  loop: start=0, step=1, limit=18
  $region2: #{d_zfnet_forward.1} parent=0 // loop_pre_header
    _
  $region3: #{d_zfnet_forward.1} parent=0 // loop_header
    %s8 = sphi 0, %s12
    %p9 = scmp.ge.s32.totalorder %s8, 18
    %s15 = sphi 0, %s41
    %s16 = sphi 0, %s37
    %s17 = sphi 0, %s33
    %s18 = sphi 0, %s29
    %s19 = sphi 0, %s15
    %s20 = sphi 0, %s16
    %s21 = sphi 0, %s17
    %s22 = sphi 0, %s18
    %s23 = sphi 0, %s19
    %s24 = sphi 0, %s20
    %s25 = sphi 0, %s21
    %s26 = sphi 0, %s22
    %s46 = sphi 0, %s48
    %s49 = sphi 0, %s46
    %s50 = sphi 0, %s49
    %s66 = sphi 0, %s50
    %s74 = sphi 0, %s76
    %s77 = sphi 0, %s74
    %s78 = sphi 0, %s77
    %s94 = sphi 0, %s78
    %s106 = sphi 0, %s108
    %s109 = sphi 0, %s106
    %s110 = sphi 0, %s109
    %s126 = sphi 0, %s110
  $region4: #{d_zfnet_forward.1} parent=0 // loop_header_branch
    %11 = sbr.rel (%p9) target = $region8
  $region5: #{d_zfnet_forward.1} parent=0 // loop_body
    %s13 = ssub.s32 %s8, 1
    %s14 = ssub.s32 %s8, 2
    %s27 = sadd.s32 1, %s18
    %p28 = scmp.ge.s32.totalorder %s27, 2
    %s29 = scalar_select %p28, 0, %s27
    %s30 = sadd.s32 1, %s17
    %s31 = scalar_select %p28, %s30, %s17
    %p32 = scmp.ge.s32.totalorder %s31, 1
    %s33 = scalar_select %p32, 0, %s31
    %s34 = sadd.s32 1, %s16
    %s35 = scalar_select %p32, %s34, %s16
    %p36 = scmp.ge.s32.totalorder %s35, 4
    %s37 = scalar_select %p36, 0, %s35
    %s38 = sadd.s32 1, %s15
    %s39 = scalar_select %p36, %s38, %s15
    %p40 = scmp.ge.s32.totalorder %s39, 2
    %s41 = scalar_select %p40, 0, %s39
    %s42 = ssub.s32 %s15, %s41
    %s43 = ssub.s32 %s16, %s37
    %s44 = sor.u32 %s42, %s43
    %p45 = scmp.eq.s32.totalorder %s44, 0
    %s47 = sadd.s32 %s46, 1
    %s48 = scalar_select %p45, %s46, %s47
    %p51 = pneg %p45
    %p52 = scmp.eq.s32.totalorder %s8, 15
    %p53 = por %p51, %p52
    %p54 = scmp.ne.s32.totalorder %s46, %s49
    %p55 = scmp.eq.s32.totalorder %s8, 0
    %p56 = por %p54, %p55
    %p57 = scmp.ne.s32.totalorder %s46, %s49
    %p58 = scmp.eq.s32.totalorder %s13, 15
    %p59 = por %p57, %p58
    %p60 = scmp.ne.s32.totalorder %s49, %s50
    %p61 = scmp.eq.s32.totalorder %s13, 0
    %p62 = por %p60, %p61
    %p63 = scmp.ne.s32.totalorder %s49, %s50
    %p64 = scmp.eq.s32.totalorder %s14, 15
    %p65 = por %p63, %p64
    %p67 = scmp.ne.s32.totalorder %s50, %s66
    %p68 = scmp.eq.s32.totalorder %s14, 0
    %p69 = por %p67, %p68
    %s70 = ssub.s32 %s16, %s37
    %s71 = ssub.s32 %s17, %s33
    %s72 = sor.u32 %s70, %s71
    %p73 = scmp.eq.s32.totalorder %s72, 0
    %s75 = sadd.s32 %s74, 1
    %s76 = scalar_select %p73, %s74, %s75
    %p79 = pneg %p73
    %p80 = scmp.eq.s32.totalorder %s8, 15
    %p81 = por %p79, %p80
    %p82 = scmp.ne.s32.totalorder %s74, %s77
    %p83 = scmp.eq.s32.totalorder %s8, 0
    %p84 = por %p82, %p83
    %p85 = scmp.ne.s32.totalorder %s74, %s77
    %p86 = scmp.eq.s32.totalorder %s13, 15
    %p87 = por %p85, %p86
    %p88 = scmp.ne.s32.totalorder %s77, %s78
    %p89 = scmp.eq.s32.totalorder %s13, 0
    %p90 = por %p88, %p89
    %p91 = scmp.ne.s32.totalorder %s77, %s78
    %p92 = scmp.eq.s32.totalorder %s14, 15
    %p93 = por %p91, %p92
    %p95 = scmp.ne.s32.totalorder %s78, %s94
    %p96 = scmp.eq.s32.totalorder %s14, 0
    %p97 = por %p95, %p96
    %s98 = ssub.s32 %s15, %s41
    %s99 = ssub.s32 %s16, %s37
    %s100 = sor.u32 %s98, %s99
    %s101 = ssub.s32 %s17, %s33
    %s102 = sor.u32 %s100, %s101
    %s103 = ssub.s32 %s18, %s29
    %s104 = sor.u32 %s102, %s103
    %p105 = scmp.eq.s32.totalorder %s104, 0
    %s107 = sadd.s32 %s106, 1
    %s108 = scalar_select %p105, %s106, %s107
    %p111 = pneg %p105
    %p112 = scmp.eq.s32.totalorder %s8, 15
    %p113 = por %p111, %p112
    %p114 = scmp.ne.s32.totalorder %s106, %s109
    %p115 = scmp.eq.s32.totalorder %s8, 0
    %p116 = por %p114, %p115
    %p117 = scmp.ne.s32.totalorder %s106, %s109
    %p118 = scmp.eq.s32.totalorder %s13, 15
    %p119 = por %p117, %p118
    %p120 = scmp.ne.s32.totalorder %s109, %s110
    %p121 = scmp.eq.s32.totalorder %s13, 0
    %p122 = por %p120, %p121
    %p123 = scmp.ne.s32.totalorder %s109, %s110
    %p124 = scmp.eq.s32.totalorder %s14, 15
    %p125 = por %p123, %p124
    %p127 = scmp.ne.s32.totalorder %s110, %s126
    %p128 = scmp.eq.s32.totalorder %s14, 0
    %p129 = por %p127, %p128
    %p130 = scmp.le.s32.totalorder 1, %s8
    %p131 = scmp.lt.s32.totalorder %s8, 17
    %p132 = pnand %p130, %p131
    %p133 = pneg %p132
    // Predicated region
    $region9: #{d_zfnet_forward.1} parent=5 // pred_check
      _
    $region10: #{d_zfnet_forward.1} parent=5 // pred_check_branch
      %135 = sbr.rel (%p132) target = $region12
    $region11: #{d_zfnet_forward.1} parent=5 // pred_region
      %s136 = ssub.s32 %s8, 1
    $region12: #{d_zfnet_forward.1} parent=5 // pred_fallthru
      _
    %p137 = scmp.lt.s32.totalorder %s8, 16
    // Predicated region
    $region13: #{d_zfnet_forward.1} parent=5 // pred_check
      %p138 = pneg %p137
    $region14: #{d_zfnet_forward.1} parent=5 // pred_check_branch
      %140 = sbr.rel (%p138) target = $region16
    $region15: #{d_zfnet_forward.1} parent=5 // pred_region
      // Predicated region
      $region17: #{d_zfnet_forward.1} parent=15 // pred_check
        %p141 = pneg %p56
      $region18: #{d_zfnet_forward.1} parent=15 // pred_check_branch
        %143 = sbr.rel (%p141) target = $region20
      $region19: #{d_zfnet_forward.1} parent=15 // pred_region
        %p144 = scmp.lt.s32.totalorder %s15, 1
        %s145 = scalar_select %p144, %s15, 1
        %p146 = scmp.lt.s32.totalorder %s16, 3
        %s147 = scalar_select %p146, %s16, 3
        %s148 = smul.addr %s147, 39
        %s149 = smul.addr %s145, 156
        %s150 = sadd.s32 %s148, %s149
        %s151 = smul.addr %s150, 4
        %s152 = scalar_lea.vmem %s0, %s151
      $region20: #{d_zfnet_forward.1} parent=15 // pred_fallthru
        _
      // Predicated region
      $region21: #{d_zfnet_forward.1} parent=15 // pred_check
        %p153 = pneg %p84
      $region22: #{d_zfnet_forward.1} parent=15 // pred_check_branch
        %155 = sbr.rel (%p153) target = $region24
      $region23: #{d_zfnet_forward.1} parent=15 // pred_region
        %p156 = scmp.lt.s32.totalorder %s16, 3
        %s157 = scalar_select %p156, %s16, 3
        %p158 = scmp.lt.s32.totalorder %s17, 0
        %s159 = scalar_select %p158, %s17, 0
        %s160 = smul.addr %s157, 192
        %s161 = sadd.s32 %s159, %s160
        %s162 = smul.addr %s161, 4
        %s163 = scalar_lea.vmem %s1, %s162
      $region24: #{d_zfnet_forward.1} parent=15 // pred_fallthru
        _
    $region16: #{d_zfnet_forward.1} parent=5 // pred_fallthru
      _
    %p164 = scmp.le.s32.totalorder 1, %s8
    %p165 = scmp.lt.s32.totalorder %s8, 17
    %p166 = pnand %p164, %p165
    %p167 = pneg %p166
    // Predicated region
    $region25: #{d_zfnet_forward.1} parent=5 // pred_check
      _
    $region26: #{d_zfnet_forward.1} parent=5 // pred_check_branch
      %169 = sbr.rel (%p166) target = $region28
    $region27: #{d_zfnet_forward.1} parent=5 // pred_region
      %s170 = ssub.s32 %s8, 1
      %p171 = scmp.lt.s32.totalorder %s19, 1
      %s172 = scalar_select %p171, %s19, 1
      %p173 = scmp.lt.s32.totalorder %s20, 3
      %s174 = scalar_select %p173, %s20, 3
      %s175 = smul.addr %s174, 39
      %s176 = smul.addr %s172, 156
      %s177 = sadd.s32 %s175, %s176
      %s178 = smul.addr %s177, 4
      %s179 = scalar_lea.vmem %s0, %s178
      %p180 = pneg %p62
      %p181 = pneg %p59
      %p182 = scmp.lt.s32.totalorder %s20, 3
      %s183 = scalar_select %p182, %s20, 3
      %p184 = scmp.lt.s32.totalorder %s21, 0
      %s185 = scalar_select %p184, %s21, 0
      %s186 = smul.addr %s183, 192
      %s187 = sadd.s32 %s185, %s186
      %s188 = smul.addr %s187, 4
      %s189 = scalar_lea.vmem %s1, %s188
      %p190 = pneg %p90
      %p191 = pneg %p87
      %p192 = pneg %p122
      %p193 = pneg %p119
      %s194 = smul.u32 16, %s22
      %p195 = scmp.lt.s32.totalorder %s19, 1
      %s196 = scalar_select %p195, %s19, 1
      %p197 = scmp.lt.s32.totalorder %s20, 3
      %s198 = scalar_select %p197, %s20, 3
      %p199 = scmp.lt.s32.totalorder %s21, 0
      %s200 = scalar_select %p199, %s21, 0
      %p201 = scmp.lt.s32.totalorder %s194, 31
      %s202 = scalar_select %p201, %s194, 31
      %s203 = smul.addr %s200, 32
      %s204 = sadd.s32 %s202, %s203
      %s205 = smul.addr %s198, 32
      %s206 = sadd.s32 %s204, %s205
      %s207 = smul.addr %s196, 128
      %s208 = sadd.s32 %s206, %s207
      %s209 = smul.addr %s208, 8
      %s210 = scalar_lea.vmem %s2, %s209
      %p211 = scmp.lt.s32.totalorder %s19, 1
      %s212 = scalar_select %p211, %s19, 1
      %p213 = scmp.lt.s32.totalorder %s20, 3
      %s214 = scalar_select %p213, %s20, 3
      %s215 = smul.addr %s214, 39
      %s216 = smul.addr %s212, 156
      %s217 = sadd.s32 %s215, %s216
      %s218 = smul.addr %s217, 4
      %s219 = scalar_lea.vmem %s0, %s218
      %p220 = scmp.lt.s32.totalorder %s20, 3
      %s221 = scalar_select %p220, %s20, 3
      %p222 = scmp.lt.s32.totalorder %s21, 0
      %s223 = scalar_select %p222, %s21, 0
      %s224 = smul.addr %s221, 192
      %s225 = sadd.s32 %s223, %s224
      %s226 = smul.addr %s225, 4
      %s227 = scalar_lea.vmem %s1, %s226
      %s228 = smul.u32 16, %s22
      %p229 = scmp.lt.s32.totalorder %s19, 1
      %s230 = scalar_select %p229, %s19, 1
      %p231 = scmp.lt.s32.totalorder %s20, 3
      %s232 = scalar_select %p231, %s20, 3
      %p233 = scmp.lt.s32.totalorder %s21, 0
      %s234 = scalar_select %p233, %s21, 0
      %p235 = scmp.lt.s32.totalorder %s228, 31
      %s236 = scalar_select %p235, %s228, 31
      %s237 = smul.addr %s234, 32
      %s238 = sadd.s32 %s236, %s237
      %s239 = smul.addr %s232, 32
      %s240 = sadd.s32 %s238, %s239
      %s241 = smul.addr %s230, 128
      %s242 = sadd.s32 %s240, %s241
      %s243 = smul.addr %s242, 8
      %s244 = scalar_lea.vmem %s2, %s243
      %s245 = smul.u32 16, %s22
      %s247 = smul.u32 %s22, 128
      %s248 = sshra.s32 %s247, 3
      %s249 = sand.u32 %s247, 7
      %s250 = smul.addr %s248, 4
      %s251 = scalar_lea.vmem %s219, %s250
      %v252 = vld [vmem:[%s251] sm:$0xf]
      %v253 = vld [vmem:[%s251 + $0x4] sm:$0xf]
      %v254 = vld [vmem:[%s251 + $0x8] sm:$0xf]
      %v255 = vld [vmem:[%s251 + $0xc] sm:$0xf]
      %v256 = vld [vmem:[%s251 + $0x10] sm:$0xf]
      %v257 = vld [vmem:[%s251 + $0x14] sm:$0xf]
      %v258 = vld [vmem:[%s251 + $0x18] sm:$0xf]
      %v259 = vld [vmem:[%s251 + $0x1c] sm:$0xf]
      %v260 = vld [vmem:[%s251 + $0x20] sm:$0xf]
      %v261 = vld [vmem:[%s251 + $0x24] sm:$0xf]
      %v262 = vld [vmem:[%s251 + $0x28] sm:$0xf]
      %v263 = vld [vmem:[%s251 + $0x2c] sm:$0xf]
      %v264 = vld [vmem:[%s251 + $0x30] sm:$0xf]
      %v265 = vld [vmem:[%s251 + $0x34] sm:$0xf]
      %v266 = vld [vmem:[%s251 + $0x38] sm:$0xf]
      %v267 = vld [vmem:[%s251 + $0x3c] sm:$0xf]
      %v268 = vld [vmem:[%s251 + $0x40] sm:$0x3]
      %v269 = vld [vmem:[%s227] sm:$0xf]
      %v270 = vld [vmem:[%s227 + $0x4] sm:$0xf]
      %v271 = vld [vmem:[%s227 + $0x8] sm:$0xf]
      %v272 = vld [vmem:[%s227 + $0xc] sm:$0xf]
      %v273 = vld [vmem:[%s227 + $0x10] sm:$0xf]
      %v274 = vld [vmem:[%s227 + $0x14] sm:$0xf]
      %v275 = vld [vmem:[%s227 + $0x18] sm:$0xf]
      %v276 = vld [vmem:[%s227 + $0x1c] sm:$0xf]
      %v277 = vld [vmem:[%s227 + $0x20] sm:$0xf]
      %v278 = vld [vmem:[%s227 + $0x24] sm:$0xf]
      %v279 = vld [vmem:[%s227 + $0x28] sm:$0xf]
      %v280 = vld [vmem:[%s227 + $0x2c] sm:$0xf]
      %s281 = scalar_lea.vmem %s227, 48
      %v282 = vld [vmem:[%s281] sm:$0xf]
      %v283 = vld [vmem:[%s281 + $0x4] sm:$0xf]
      %v284 = vld [vmem:[%s281 + $0x8] sm:$0xf]
      %v285 = vld [vmem:[%s281 + $0xc] sm:$0xf]
      %v286 = vld [vmem:[%s281 + $0x10] sm:$0xf]
      %v287 = vld [vmem:[%s281 + $0x14] sm:$0xf]
      %v288 = vld [vmem:[%s281 + $0x18] sm:$0xf]
      %v289 = vld [vmem:[%s281 + $0x1c] sm:$0xf]
      %v290 = vld [vmem:[%s281 + $0x20] sm:$0xf]
      %v291 = vld [vmem:[%s281 + $0x24] sm:$0xf]
      %v292 = vld [vmem:[%s281 + $0x28] sm:$0xf]
      %v293 = vld [vmem:[%s281 + $0x2c] sm:$0xf]
      %v311 = vunpack.c.l.b16 %v252
      %v312 = vunpack.c.l.b16 %v253
      %v313 = vunpack.c.l.b16 %v254
      %v314 = vunpack.c.l.b16 %v255
      %v315 = vunpack.c.l.b16 %v256
      %v316 = vunpack.c.l.b16 %v257
      %v317 = vunpack.c.l.b16 %v258
      %v318 = vunpack.c.l.b16 %v259
      %v319 = vunpack.c.l.b16 %v260
      %v320 = vunpack.c.l.b16 %v261
      %v321 = vunpack.c.l.b16 %v262
      %v322 = vunpack.c.l.b16 %v263
      %v323 = vunpack.c.l.b16 %v264
      %v324 = vunpack.c.l.b16 %v265
      %v325 = vunpack.c.l.b16 %v266
      %v326 = vunpack.c.l.b16 %v267
      %v327 = vunpack.c.l.b16 %v268
      %v328 = vpack.c.b16 %v312, %v311
      %v329 = vpack.c.b16 %v314, %v313
      %v330 = vpack.c.b16 %v316, %v315
      %v331 = vpack.c.b16 %v318, %v317
      %v332 = vpack.c.b16 %v320, %v319
      %v333 = vpack.c.b16 %v322, %v321
      %v334 = vpack.c.b16 %v324, %v323
      %v335 = vpack.c.b16 %v326, %v325
      %v336 = vpack.c.b16 %v327, %v327
      %vm337 = vsmask.f32 7424
      %v339 = vshrl.u32 %v328, 16
      %v341 = vshll.u32 %v328, 16
      %v343 = vrot.slane %v341, 1
      %v344 = vor.u32 %v339, %v343
      %v346 = vshll.u32 %v329, 16
      %v348 = vrot.slane %v346, 1
      %v349 = vsel %vm337, %v344, %v348
      %v350 = vshrl.u32 %v329, 16
      %v352 = vor.u32 %v350, %v348
      %v354 = vshll.u32 %v330, 16
      %v356 = vrot.slane %v354, 1
      %v357 = vsel %vm337, %v352, %v356
      %v358 = vshrl.u32 %v330, 16
      %v360 = vor.u32 %v358, %v356
      %v362 = vshll.u32 %v331, 16
      %v364 = vrot.slane %v362, 1
      %v365 = vsel %vm337, %v360, %v364
      %v366 = vshrl.u32 %v331, 16
      %v368 = vor.u32 %v366, %v364
      %v370 = vshll.u32 %v332, 16
      %v372 = vrot.slane %v370, 1
      %v373 = vsel %vm337, %v368, %v372
      %v374 = vshrl.u32 %v332, 16
      %v376 = vor.u32 %v374, %v372
      %v378 = vshll.u32 %v333, 16
      %v380 = vrot.slane %v378, 1
      %v381 = vsel %vm337, %v376, %v380
      %v382 = vshrl.u32 %v333, 16
      %v384 = vor.u32 %v382, %v380
      %v386 = vshll.u32 %v334, 16
      %v388 = vrot.slane %v386, 1
      %v389 = vsel %vm337, %v384, %v388
      %v390 = vshrl.u32 %v334, 16
      %v392 = vor.u32 %v390, %v388
      %v394 = vshll.u32 %v335, 16
      %v396 = vrot.slane %v394, 1
      %v397 = vsel %vm337, %v392, %v396
      %v398 = vshrl.u32 %v335, 16
      %v400 = vor.u32 %v398, %v396
      %v402 = vshll.u32 %v336, 16
      %v404 = vrot.slane %v402, 1
      %v405 = vsel %vm337, %v400, %v404
      %v418 = vunpack.c.l.b16 %v282
      %v419 = vunpack.c.l.b16 %v283
      %v420 = vunpack.c.l.b16 %v284
      %v421 = vunpack.c.l.b16 %v285
      %v422 = vunpack.c.l.b16 %v286
      %v423 = vunpack.c.l.b16 %v287
      %v424 = vunpack.c.l.b16 %v288
      %v425 = vunpack.c.l.b16 %v289
      %v426 = vunpack.c.l.b16 %v290
      %v427 = vunpack.c.l.b16 %v291
      %v428 = vunpack.c.l.b16 %v292
      %v429 = vunpack.c.l.b16 %v293
      %v430 = vpack.c.b16 %v419, %v418
      %v431 = vpack.c.b16 %v421, %v420
      %v432 = vpack.c.b16 %v423, %v422
      %v433 = vpack.c.b16 %v425, %v424
      %v434 = vpack.c.b16 %v427, %v426
      %v435 = vpack.c.b16 %v429, %v428
      %vm442 = vcmask 785408
      %v444 = vsel %vm442, %v349, 0
      %v447 = vsel %vm442, %v357, 0
      %v450 = vsel %vm442, %v365, 0
      %v453 = vsel %vm442, %v373, 0
      %v456 = vsel %vm442, %v381, 0
      %v459 = vsel %vm442, %v389, 0
      %v462 = vsel %vm442, %v397, 0
      %v465 = vsel %vm442, %v405, 0
      %467 = vmatprep.subr.bf16.mxu0 0
      %468 = vmatpush1.bf16.msra.mxu0 %v430
      %469 = vmatprep.subr.bf16.mxu0 0
      %470 = vmatpush1.bf16.msra.mxu0 %v431
      %471 = vmatprep.subr.bf16.mxu0 0
      %472 = vmatpush1.bf16.msra.mxu0 %v432
      %473 = vmatprep.subr.bf16.mxu0 0
      %474 = vmatpush1.bf16.msra.mxu0 %v433
      %475 = vmatprep.subr.bf16.mxu0 0
      %476 = vmatpush1.bf16.msra.mxu0 %v434
      %477 = vmatprep.subr.bf16.mxu0 0
      %478 = vmatpush1.bf16.msra.mxu0 %v435
      %479 = vmatprep.subr.bf16.mxu0 0
      %480 = vmatpush1.bf16.msra.mxu0 0
      %481 = vmatprep.subr.bf16.mxu0 0
      %482 = vmatpush1.bf16.msra.mxu0 0
      %483 = vmatprep.subr.bf16.mxu0 0
      %484 = vmatpush1.bf16.msra.mxu0 0
      %485 = vmatprep.subr.bf16.mxu0 0
      %486 = vmatpush1.bf16.msra.mxu0 0
      %487 = vmatprep.subr.bf16.mxu0 0
      %488 = vmatpush1.bf16.msra.mxu0 0
      %489 = vmatprep.subr.bf16.mxu0 0
      %490 = vmatpush1.bf16.msra.mxu0 0
      %491 = vmatprep.subr.bf16.mxu0 0
      %492 = vmatpush1.bf16.msra.mxu0 0
      %493 = vmatprep.subr.bf16.mxu0 0
      %494 = vmatpush1.bf16.msra.mxu0 0
      %495 = vmatprep.subr.bf16.mxu0 0
      %496 = vmatpush1.bf16.msra.mxu0 0
      %497 = vmatprep.subr.bf16.mxu0 0
      %498 = vmatpush1.bf16.msra.mxu0 0
      %499 = vmatprep.mubr.bf16.mxu0 0
      %500 = vmatmul.mubr.bf16.gmra.mrb[0].mxu0 %v444
      %v501 = vpop.f32.mrb[0].mxu0
      %v502 = vadd.f32 0.0, %v501
      %v503 = vpop.f32.mrb[0].mxu0
      %v504 = vpop.f32.mrb[0].mxu0
      %v505 = vadd.f32 0.0, %v504
      %v506 = vpop.f32.mrb[0].mxu0
      %507 = vmatprep.mubr.bf16.mxu0 0
      %508 = vmatmul.mubr.bf16.gmra.mrb[0].mxu0 %v447
      %v509 = vpop.f32.mrb[0].mxu0
      %v510 = vadd.f32 0.0, %v509
      %v511 = vpop.f32.mrb[0].mxu0
      %v512 = vpop.f32.mrb[0].mxu0
      %v513 = vadd.f32 0.0, %v512
      %v514 = vpop.f32.mrb[0].mxu0
      %515 = vmatprep.mubr.bf16.mxu0 0
      %516 = vmatmul.mubr.bf16.gmra.mrb[0].mxu0 %v450
      %v517 = vpop.f32.mrb[0].mxu0
      %v518 = vadd.f32 0.0, %v517
      %v519 = vpop.f32.mrb[0].mxu0
      %v520 = vpop.f32.mrb[0].mxu0
      %v521 = vadd.f32 0.0, %v520
      %v522 = vpop.f32.mrb[0].mxu0
      %523 = vmatprep.mubr.bf16.mxu0 0
      %524 = vmatmul.mubr.bf16.gmra.mrb[0].mxu0 %v453
      %v525 = vpop.f32.mrb[0].mxu0
      %v526 = vadd.f32 0.0, %v525
      %v527 = vpop.f32.mrb[0].mxu0
      %v528 = vpop.f32.mrb[0].mxu0
      %v529 = vadd.f32 0.0, %v528
      %v530 = vpop.f32.mrb[0].mxu0
      %531 = vmatprep.mubr.bf16.mxu0 0
      %532 = vmatmul.mubr.bf16.gmra.mrb[0].mxu0 %v456
      %v533 = vpop.f32.mrb[0].mxu0
      %v534 = vadd.f32 0.0, %v533
      %v535 = vpop.f32.mrb[0].mxu0
      %v536 = vpop.f32.mrb[0].mxu0
      %v537 = vadd.f32 0.0, %v536
      %v538 = vpop.f32.mrb[0].mxu0
      %539 = vmatprep.mubr.bf16.mxu0 0
      %540 = vmatmul.mubr.bf16.gmra.mrb[0].mxu0 %v459
      %v541 = vpop.f32.mrb[0].mxu0
      %v542 = vadd.f32 0.0, %v541
      %v543 = vpop.f32.mrb[0].mxu0
      %v544 = vpop.f32.mrb[0].mxu0
      %v545 = vadd.f32 0.0, %v544
      %v546 = vpop.f32.mrb[0].mxu0
      %547 = vmatprep.mubr.bf16.mxu0 0
      %548 = vmatmul.mubr.bf16.gmra.mrb[0].mxu0 %v462
      %v549 = vpop.f32.mrb[0].mxu0
      %v550 = vadd.f32 0.0, %v549
      %v551 = vpop.f32.mrb[0].mxu0
      %v552 = vpop.f32.mrb[0].mxu0
      %v553 = vadd.f32 0.0, %v552
      %v554 = vpop.f32.mrb[0].mxu0
      %555 = vmatprep.mubr.bf16.mxu0 0
      %556 = vmatmul.mubr.bf16.gmra.mrb[0].mxu0 %v465
      %v557 = vpop.f32.mrb[0].mxu0
      %v558 = vadd.f32 0.0, %v557
      %v559 = vpop.f32.mrb[0].mxu0
      %v560 = vpop.f32.mrb[0].mxu0
      %v561 = vadd.f32 0.0, %v560
      %v562 = vpop.f32.mrb[0].mxu0
      %563 = vdwg.mxu0
      %v576 = vunpack.c.l.b16 %v269
      %v577 = vunpack.c.l.b16 %v270
      %v578 = vunpack.c.l.b16 %v271
      %v579 = vunpack.c.l.b16 %v272
      %v580 = vunpack.c.l.b16 %v273
      %v581 = vunpack.c.l.b16 %v274
      %v582 = vunpack.c.l.b16 %v275
      %v583 = vunpack.c.l.b16 %v276
      %v584 = vunpack.c.l.b16 %v277
      %v585 = vunpack.c.l.b16 %v278
      %v586 = vunpack.c.l.b16 %v279
      %v587 = vunpack.c.l.b16 %v280
      %v588 = vpack.c.b16 %v577, %v576
      %v589 = vpack.c.b16 %v579, %v578
      %v590 = vpack.c.b16 %v581, %v580
      %v591 = vpack.c.b16 %v583, %v582
      %v592 = vpack.c.b16 %v585, %v584
      %v593 = vpack.c.b16 %v587, %v586
      %v600 = vsel %vm442, %v328, 0
      %v602 = vsel %vm442, %v329, 0
      %v604 = vsel %vm442, %v330, 0
      %v606 = vsel %vm442, %v331, 0
      %v608 = vsel %vm442, %v332, 0
      %v610 = vsel %vm442, %v333, 0
      %v612 = vsel %vm442, %v334, 0
      %v614 = vsel %vm442, %v335, 0
      %616 = vmatprep.subr.bf16.mxu0 0
      %617 = vmatpush1.bf16.msra.mxu0 %v588
      %618 = vmatprep.subr.bf16.mxu0 0
      %619 = vmatpush1.bf16.msra.mxu0 %v589
      %620 = vmatprep.subr.bf16.mxu0 0
      %621 = vmatpush1.bf16.msra.mxu0 %v590
      %622 = vmatprep.subr.bf16.mxu0 0
      %623 = vmatpush1.bf16.msra.mxu0 %v591
      %624 = vmatprep.subr.bf16.mxu0 0
      %625 = vmatpush1.bf16.msra.mxu0 %v592
      %626 = vmatprep.subr.bf16.mxu0 0
      %627 = vmatpush1.bf16.msra.mxu0 %v593
      %628 = vmatprep.subr.bf16.mxu0 0
      %629 = vmatpush1.bf16.msra.mxu0 0
      %630 = vmatprep.subr.bf16.mxu0 0
      %631 = vmatpush1.bf16.msra.mxu0 0
      %632 = vmatprep.subr.bf16.mxu0 0
      %633 = vmatpush1.bf16.msra.mxu0 0
      %634 = vmatprep.subr.bf16.mxu0 0
      %635 = vmatpush1.bf16.msra.mxu0 0
      %636 = vmatprep.subr.bf16.mxu0 0
      %637 = vmatpush1.bf16.msra.mxu0 0
      %638 = vmatprep.subr.bf16.mxu0 0
      %639 = vmatpush1.bf16.msra.mxu0 0
      %640 = vmatprep.subr.bf16.mxu0 0
      %641 = vmatpush1.bf16.msra.mxu0 0
      %642 = vmatprep.subr.bf16.mxu0 0
      %643 = vmatpush1.bf16.msra.mxu0 0
      %644 = vmatprep.subr.bf16.mxu0 0
      %645 = vmatpush1.bf16.msra.mxu0 0
      %646 = vmatprep.subr.bf16.mxu0 0
      %647 = vmatpush1.bf16.msra.mxu0 0
      %648 = vmatprep.mubr.bf16.mxu0 0
      %649 = vmatmul.mubr.bf16.gmra.mrb[0].mxu0 %v600
      %v650 = vpop.f32.mrb[0].mxu0
      %v651 = vadd.f32 %v502, %v650
      %v652 = vpop.f32.mrb[0].mxu0
      %v653 = vpop.f32.mrb[0].mxu0
      %v654 = vadd.f32 %v505, %v653
      %v655 = vpop.f32.mrb[0].mxu0
      %656 = vmatprep.mubr.bf16.mxu0 0
      %657 = vmatmul.mubr.bf16.gmra.mrb[0].mxu0 %v602
      %v658 = vpop.f32.mrb[0].mxu0
      %v659 = vadd.f32 %v510, %v658
      %v660 = vpop.f32.mrb[0].mxu0
      %v661 = vpop.f32.mrb[0].mxu0
      %v662 = vadd.f32 %v513, %v661
      %v663 = vpop.f32.mrb[0].mxu0
      %664 = vmatprep.mubr.bf16.mxu0 0
      %665 = vmatmul.mubr.bf16.gmra.mrb[0].mxu0 %v604
      %v666 = vpop.f32.mrb[0].mxu0
      %v667 = vadd.f32 %v518, %v666
      %v668 = vpop.f32.mrb[0].mxu0
      %v669 = vpop.f32.mrb[0].mxu0
      %v670 = vadd.f32 %v521, %v669
      %v671 = vpop.f32.mrb[0].mxu0
      %672 = vmatprep.mubr.bf16.mxu0 0
      %673 = vmatmul.mubr.bf16.gmra.mrb[0].mxu0 %v606
      %v674 = vpop.f32.mrb[0].mxu0
      %v675 = vadd.f32 %v526, %v674
      %v676 = vpop.f32.mrb[0].mxu0
      %v677 = vpop.f32.mrb[0].mxu0
      %v678 = vadd.f32 %v529, %v677
      %v679 = vpop.f32.mrb[0].mxu0
      %680 = vmatprep.mubr.bf16.mxu0 0
      %681 = vmatmul.mubr.bf16.gmra.mrb[0].mxu0 %v608
      %v682 = vpop.f32.mrb[0].mxu0
      %v683 = vadd.f32 %v534, %v682
      %v684 = vpop.f32.mrb[0].mxu0
      %v685 = vpop.f32.mrb[0].mxu0
      %v686 = vadd.f32 %v537, %v685
      %v687 = vpop.f32.mrb[0].mxu0
      %688 = vmatprep.mubr.bf16.mxu0 0
      %689 = vmatmul.mubr.bf16.gmra.mrb[0].mxu0 %v610
      %v690 = vpop.f32.mrb[0].mxu0
      %v691 = vadd.f32 %v542, %v690
      %v692 = vpop.f32.mrb[0].mxu0
      %v693 = vpop.f32.mrb[0].mxu0
      %v694 = vadd.f32 %v545, %v693
      %v695 = vpop.f32.mrb[0].mxu0
      %696 = vmatprep.mubr.bf16.mxu0 0
      %697 = vmatmul.mubr.bf16.gmra.mrb[0].mxu0 %v612
      %v698 = vpop.f32.mrb[0].mxu0
      %v699 = vadd.f32 %v550, %v698
      %v700 = vpop.f32.mrb[0].mxu0
      %v701 = vpop.f32.mrb[0].mxu0
      %v702 = vadd.f32 %v553, %v701
      %v703 = vpop.f32.mrb[0].mxu0
      %704 = vmatprep.mubr.bf16.mxu0 0
      %705 = vmatmul.mubr.bf16.gmra.mrb[0].mxu0 %v614
      %v706 = vpop.f32.mrb[0].mxu0
      %v707 = vadd.f32 %v558, %v706
      %v708 = vpop.f32.mrb[0].mxu0
      %v709 = vpop.f32.mrb[0].mxu0
      %v710 = vadd.f32 %v561, %v709
      %v711 = vpop.f32.mrb[0].mxu0
      %712 = vdwg.mxu0
      %s713 = scalar_lea.vmem %s227, 96
      %v714 = vld [vmem:[%s713] sm:$0xf]
      %v715 = vld [vmem:[%s713 + $0x4] sm:$0xf]
      %v716 = vld [vmem:[%s713 + $0x8] sm:$0xf]
      %v717 = vld [vmem:[%s713 + $0xc] sm:$0xf]
      %v718 = vld [vmem:[%s713 + $0x10] sm:$0xf]
      %v719 = vld [vmem:[%s713 + $0x14] sm:$0xf]
      %v720 = vld [vmem:[%s713 + $0x18] sm:$0xf]
      %v721 = vld [vmem:[%s713 + $0x1c] sm:$0xf]
      %v722 = vld [vmem:[%s713 + $0x20] sm:$0xf]
      %v723 = vld [vmem:[%s713 + $0x24] sm:$0xf]
      %v724 = vld [vmem:[%s713 + $0x28] sm:$0xf]
      %v725 = vld [vmem:[%s713 + $0x2c] sm:$0xf]
      %vm726 = vcmask 1046528
      %v727 = vrot.slane %v328, 1
      %v728 = vrot.slane %v329, 1
      %v729 = vsel %vm726, %v727, %v728
      %v730 = vrot.slane %v330, 1
      %v731 = vsel %vm726, %v728, %v730
      %v732 = vrot.slane %v331, 1
      %v733 = vsel %vm726, %v730, %v732
      %v734 = vrot.slane %v332, 1
      %v735 = vsel %vm726, %v732, %v734
      %v736 = vrot.slane %v333, 1
      %v737 = vsel %vm726, %v734, %v736
      %v738 = vrot.slane %v334, 1
      %v739 = vsel %vm726, %v736, %v738
      %v740 = vrot.slane %v335, 1
      %v741 = vsel %vm726, %v738, %v740
      %v742 = vrot.slane %v336, 1
      %v743 = vsel %vm726, %v740, %v742
      %v756 = vunpack.c.l.b16 %v714
      %v757 = vunpack.c.l.b16 %v715
      %v758 = vunpack.c.l.b16 %v716
      %v759 = vunpack.c.l.b16 %v717
      %v760 = vunpack.c.l.b16 %v718
      %v761 = vunpack.c.l.b16 %v719
      %v762 = vunpack.c.l.b16 %v720
      %v763 = vunpack.c.l.b16 %v721
      %v764 = vunpack.c.l.b16 %v722
      %v765 = vunpack.c.l.b16 %v723
      %v766 = vunpack.c.l.b16 %v724
      %v767 = vunpack.c.l.b16 %v725
      %v768 = vpack.c.b16 %v757, %v756
      %v769 = vpack.c.b16 %v759, %v758
      %v770 = vpack.c.b16 %v761, %v760
      %v771 = vpack.c.b16 %v763, %v762
      %v772 = vpack.c.b16 %v765, %v764
      %v773 = vpack.c.b16 %v767, %v766
      %v781 = vsel %vm442, %v729, 0
      %v784 = vsel %vm442, %v731, 0
      %v787 = vsel %vm442, %v733, 0
      %v790 = vsel %vm442, %v735, 0
      %v793 = vsel %vm442, %v737, 0
      %v796 = vsel %vm442, %v739, 0
      %v799 = vsel %vm442, %v741, 0
      %v802 = vsel %vm442, %v743, 0
      %804 = vmatprep.subr.bf16.mxu0 0
      %805 = vmatpush1.bf16.msra.mxu0 %v768
      %806 = vmatprep.subr.bf16.mxu0 0
      %807 = vmatpush1.bf16.msra.mxu0 %v769
      %808 = vmatprep.subr.bf16.mxu0 0
      %809 = vmatpush1.bf16.msra.mxu0 %v770
      %810 = vmatprep.subr.bf16.mxu0 0
      %811 = vmatpush1.bf16.msra.mxu0 %v771
      %812 = vmatprep.subr.bf16.mxu0 0
      %813 = vmatpush1.bf16.msra.mxu0 %v772
      %814 = vmatprep.subr.bf16.mxu0 0
      %815 = vmatpush1.bf16.msra.mxu0 %v773
      %816 = vmatprep.subr.bf16.mxu0 0
      %817 = vmatpush1.bf16.msra.mxu0 0
      %818 = vmatprep.subr.bf16.mxu0 0
      %819 = vmatpush1.bf16.msra.mxu0 0
      %820 = vmatprep.subr.bf16.mxu0 0
      %821 = vmatpush1.bf16.msra.mxu0 0
      %822 = vmatprep.subr.bf16.mxu0 0
      %823 = vmatpush1.bf16.msra.mxu0 0
      %824 = vmatprep.subr.bf16.mxu0 0
      %825 = vmatpush1.bf16.msra.mxu0 0
      %826 = vmatprep.subr.bf16.mxu0 0
      %827 = vmatpush1.bf16.msra.mxu0 0
      %828 = vmatprep.subr.bf16.mxu0 0
      %829 = vmatpush1.bf16.msra.mxu0 0
      %830 = vmatprep.subr.bf16.mxu0 0
      %831 = vmatpush1.bf16.msra.mxu0 0
      %832 = vmatprep.subr.bf16.mxu0 0
      %833 = vmatpush1.bf16.msra.mxu0 0
      %834 = vmatprep.subr.bf16.mxu0 0
      %835 = vmatpush1.bf16.msra.mxu0 0
      %836 = vmatprep.mubr.bf16.mxu0 0
      %837 = vmatmul.mubr.bf16.gmra.mrb[0].mxu0 %v781
      %v838 = vpop.f32.mrb[0].mxu0
      %v839 = vadd.f32 0.0, %v838
      %v840 = vpop.f32.mrb[0].mxu0
      %v841 = vpop.f32.mrb[0].mxu0
      %v842 = vadd.f32 0.0, %v841
      %v843 = vpop.f32.mrb[0].mxu0
      %844 = vmatprep.mubr.bf16.mxu0 0
      %845 = vmatmul.mubr.bf16.gmra.mrb[0].mxu0 %v784
      %v846 = vpop.f32.mrb[0].mxu0
      %v847 = vadd.f32 0.0, %v846
      %v848 = vpop.f32.mrb[0].mxu0
      %v849 = vpop.f32.mrb[0].mxu0
      %v850 = vadd.f32 0.0, %v849
      %v851 = vpop.f32.mrb[0].mxu0
      %852 = vmatprep.mubr.bf16.mxu0 0
      %853 = vmatmul.mubr.bf16.gmra.mrb[0].mxu0 %v787
      %v854 = vpop.f32.mrb[0].mxu0
      %v855 = vadd.f32 0.0, %v854
      %v856 = vpop.f32.mrb[0].mxu0
      %v857 = vpop.f32.mrb[0].mxu0
      %v858 = vadd.f32 0.0, %v857
      %v859 = vpop.f32.mrb[0].mxu0
      %860 = vmatprep.mubr.bf16.mxu0 0
      %861 = vmatmul.mubr.bf16.gmra.mrb[0].mxu0 %v790
      %v862 = vpop.f32.mrb[0].mxu0
      %v863 = vadd.f32 0.0, %v862
      %v864 = vpop.f32.mrb[0].mxu0
      %v865 = vpop.f32.mrb[0].mxu0
      %v866 = vadd.f32 0.0, %v865
      %v867 = vpop.f32.mrb[0].mxu0
      %868 = vmatprep.mubr.bf16.mxu0 0
      %869 = vmatmul.mubr.bf16.gmra.mrb[0].mxu0 %v793
      %v870 = vpop.f32.mrb[0].mxu0
      %v871 = vadd.f32 0.0, %v870
      %v872 = vpop.f32.mrb[0].mxu0
      %v873 = vpop.f32.mrb[0].mxu0
      %v874 = vadd.f32 0.0, %v873
      %v875 = vpop.f32.mrb[0].mxu0
      %876 = vmatprep.mubr.bf16.mxu0 0
      %877 = vmatmul.mubr.bf16.gmra.mrb[0].mxu0 %v796
      %v878 = vpop.f32.mrb[0].mxu0
      %v879 = vadd.f32 0.0, %v878
      %v880 = vpop.f32.mrb[0].mxu0
      %v881 = vpop.f32.mrb[0].mxu0
      %v882 = vadd.f32 0.0, %v881
      %v883 = vpop.f32.mrb[0].mxu0
      %884 = vmatprep.mubr.bf16.mxu0 0
      %885 = vmatmul.mubr.bf16.gmra.mrb[0].mxu0 %v799
      %v886 = vpop.f32.mrb[0].mxu0
      %v887 = vadd.f32 0.0, %v886
      %v888 = vpop.f32.mrb[0].mxu0
      %v889 = vpop.f32.mrb[0].mxu0
      %v890 = vadd.f32 0.0, %v889
      %v891 = vpop.f32.mrb[0].mxu0
      %892 = vmatprep.mubr.bf16.mxu0 0
      %893 = vmatmul.mubr.bf16.gmra.mrb[0].mxu0 %v802
      %v894 = vpop.f32.mrb[0].mxu0
      %v895 = vadd.f32 0.0, %v894
      %v896 = vpop.f32.mrb[0].mxu0
      %v897 = vpop.f32.mrb[0].mxu0
      %v898 = vadd.f32 0.0, %v897
      %v899 = vpop.f32.mrb[0].mxu0
      %900 = vdwg.mxu0
      %v901 = vadd.f32 %v651, %v839
      %v902 = vadd.f32 %v654, %v842
      %v903 = vadd.f32 %v659, %v847
      %v904 = vadd.f32 %v662, %v850
      %v905 = vadd.f32 %v667, %v855
      %v906 = vadd.f32 %v670, %v858
      %v907 = vadd.f32 %v675, %v863
      %v908 = vadd.f32 %v678, %v866
      %v909 = vadd.f32 %v683, %v871
      %v910 = vadd.f32 %v686, %v874
      %v911 = vadd.f32 %v691, %v879
      %v912 = vadd.f32 %v694, %v882
      %v913 = vadd.f32 %v699, %v887
      %v914 = vadd.f32 %v702, %v890
      %v915 = vadd.f32 %v707, %v895
      %v916 = vadd.f32 %v710, %v898
      %s917 = scalar_lea.vmem %s227, 144
      %v918 = vld [vmem:[%s917] sm:$0xf]
      %v919 = vld [vmem:[%s917 + $0x4] sm:$0xf]
      %v920 = vld [vmem:[%s917 + $0x8] sm:$0xf]
      %v921 = vld [vmem:[%s917 + $0xc] sm:$0xf]
      %v922 = vld [vmem:[%s917 + $0x10] sm:$0xf]
      %v923 = vld [vmem:[%s917 + $0x14] sm:$0xf]
      %v924 = vld [vmem:[%s917 + $0x18] sm:$0xf]
      %v925 = vld [vmem:[%s917 + $0x1c] sm:$0xf]
      %v926 = vld [vmem:[%s917 + $0x20] sm:$0xf]
      %v927 = vld [vmem:[%s917 + $0x24] sm:$0xf]
      %v928 = vld [vmem:[%s917 + $0x28] sm:$0xf]
      %v929 = vld [vmem:[%s917 + $0x2c] sm:$0xf]
      %vm930 = vsmask.f32 6400
      %v931 = vrot.slane %v339, 1
      %v932 = vrot.slane %v341, 2
      %v933 = vor.u32 %v931, %v932
      %v934 = vrot.slane %v350, 1
      %v935 = vrot.slane %v346, 2
      %v936 = vor.u32 %v934, %v935
      %v937 = vsel %vm930, %v933, %v936
      %v938 = vrot.slane %v358, 1
      %v939 = vrot.slane %v354, 2
      %v940 = vor.u32 %v938, %v939
      %v941 = vsel %vm930, %v936, %v940
      %v942 = vrot.slane %v366, 1
      %v943 = vrot.slane %v362, 2
      %v944 = vor.u32 %v942, %v943
      %v945 = vsel %vm930, %v940, %v944
      %v946 = vrot.slane %v374, 1
      %v947 = vrot.slane %v370, 2
      %v948 = vor.u32 %v946, %v947
      %v949 = vsel %vm930, %v944, %v948
      %v950 = vrot.slane %v382, 1
      %v951 = vrot.slane %v378, 2
      %v952 = vor.u32 %v950, %v951
      %v953 = vsel %vm930, %v948, %v952
      %v954 = vrot.slane %v390, 1
      %v955 = vrot.slane %v386, 2
      %v956 = vor.u32 %v954, %v955
      %v957 = vsel %vm930, %v952, %v956
      %v958 = vrot.slane %v398, 1
      %v959 = vrot.slane %v394, 2
      %v960 = vor.u32 %v958, %v959
      %v961 = vsel %vm930, %v956, %v960
      %v962 = vshrl.u32 %v336, 16
      %v964 = vrot.slane %v962, 1
      %v965 = vrot.slane %v402, 2
      %v966 = vor.u32 %v964, %v965
      %v967 = vsel %vm930, %v960, %v966
      %v980 = vunpack.c.l.b16 %v918
      %v981 = vunpack.c.l.b16 %v919
      %v982 = vunpack.c.l.b16 %v920
      %v983 = vunpack.c.l.b16 %v921
      %v984 = vunpack.c.l.b16 %v922
      %v985 = vunpack.c.l.b16 %v923
      %v986 = vunpack.c.l.b16 %v924
      %v987 = vunpack.c.l.b16 %v925
      %v988 = vunpack.c.l.b16 %v926
      %v989 = vunpack.c.l.b16 %v927
      %v990 = vunpack.c.l.b16 %v928
      %v991 = vunpack.c.l.b16 %v929
      %v992 = vpack.c.b16 %v981, %v980
      %v993 = vpack.c.b16 %v983, %v982
      %v994 = vpack.c.b16 %v985, %v984
      %v995 = vpack.c.b16 %v987, %v986
      %v996 = vpack.c.b16 %v989, %v988
      %v997 = vpack.c.b16 %v991, %v990
      %v1005 = vsel %vm442, %v937, 0
      %v1008 = vsel %vm442, %v941, 0
      %v1011 = vsel %vm442, %v945, 0
      %v1014 = vsel %vm442, %v949, 0
      %v1017 = vsel %vm442, %v953, 0
      %v1020 = vsel %vm442, %v957, 0
      %v1023 = vsel %vm442, %v961, 0
      %v1026 = vsel %vm442, %v967, 0
      %1028 = vmatprep.subr.bf16.mxu0 0
      %1029 = vmatpush1.bf16.msra.mxu0 %v992
      %1030 = vmatprep.subr.bf16.mxu0 0
      %1031 = vmatpush1.bf16.msra.mxu0 %v993
      %1032 = vmatprep.subr.bf16.mxu0 0
      %1033 = vmatpush1.bf16.msra.mxu0 %v994
      %1034 = vmatprep.subr.bf16.mxu0 0
      %1035 = vmatpush1.bf16.msra.mxu0 %v995
      %1036 = vmatprep.subr.bf16.mxu0 0
      %1037 = vmatpush1.bf16.msra.mxu0 %v996
      %1038 = vmatprep.subr.bf16.mxu0 0
      %1039 = vmatpush1.bf16.msra.mxu0 %v997
      %1040 = vmatprep.subr.bf16.mxu0 0
      %1041 = vmatpush1.bf16.msra.mxu0 0
      %1042 = vmatprep.subr.bf16.mxu0 0
      %1043 = vmatpush1.bf16.msra.mxu0 0
      %1044 = vmatprep.subr.bf16.mxu0 0
      %1045 = vmatpush1.bf16.msra.mxu0 0
      %1046 = vmatprep.subr.bf16.mxu0 0
      %1047 = vmatpush1.bf16.msra.mxu0 0
      %1048 = vmatprep.subr.bf16.mxu0 0
      %1049 = vmatpush1.bf16.msra.mxu0 0
      %1050 = vmatprep.subr.bf16.mxu0 0
      %1051 = vmatpush1.bf16.msra.mxu0 0
      %1052 = vmatprep.subr.bf16.mxu0 0
      %1053 = vmatpush1.bf16.msra.mxu0 0
      %1054 = vmatprep.subr.bf16.mxu0 0
      %1055 = vmatpush1.bf16.msra.mxu0 0
      %1056 = vmatprep.subr.bf16.mxu0 0
      %1057 = vmatpush1.bf16.msra.mxu0 0
      %1058 = vmatprep.subr.bf16.mxu0 0
      %1059 = vmatpush1.bf16.msra.mxu0 0
      %1060 = vmatprep.mubr.bf16.mxu0 0
      %1061 = vmatmul.mubr.bf16.gmra.mrb[0].mxu0 %v1005
      %v1062 = vpop.f32.mrb[0].mxu0
      %v1063 = vadd.f32 0.0, %v1062
      %v1064 = vpop.f32.mrb[0].mxu0
      %v1065 = vpop.f32.mrb[0].mxu0
      %v1066 = vadd.f32 0.0, %v1065
      %v1067 = vpop.f32.mrb[0].mxu0
      %1068 = vmatprep.mubr.bf16.mxu0 0
      %1069 = vmatmul.mubr.bf16.gmra.mrb[0].mxu0 %v1008
      %v1070 = vpop.f32.mrb[0].mxu0
      %v1071 = vadd.f32 0.0, %v1070
      %v1072 = vpop.f32.mrb[0].mxu0
      %v1073 = vpop.f32.mrb[0].mxu0
      %v1074 = vadd.f32 0.0, %v1073
      %v1075 = vpop.f32.mrb[0].mxu0
      %1076 = vmatprep.mubr.bf16.mxu0 0
      %1077 = vmatmul.mubr.bf16.gmra.mrb[0].mxu0 %v1011
      %v1078 = vpop.f32.mrb[0].mxu0
      %v1079 = vadd.f32 0.0, %v1078
      %v1080 = vpop.f32.mrb[0].mxu0
      %v1081 = vpop.f32.mrb[0].mxu0
      %v1082 = vadd.f32 0.0, %v1081
      %v1083 = vpop.f32.mrb[0].mxu0
      %1084 = vmatprep.mubr.bf16.mxu0 0
      %1085 = vmatmul.mubr.bf16.gmra.mrb[0].mxu0 %v1014
      %v1086 = vpop.f32.mrb[0].mxu0
      %v1087 = vadd.f32 0.0, %v1086
      %v1088 = vpop.f32.mrb[0].mxu0
      %v1089 = vpop.f32.mrb[0].mxu0
      %v1090 = vadd.f32 0.0, %v1089
      %v1091 = vpop.f32.mrb[0].mxu0
      %1092 = vmatprep.mubr.bf16.mxu0 0
      %1093 = vmatmul.mubr.bf16.gmra.mrb[0].mxu0 %v1017
      %v1094 = vpop.f32.mrb[0].mxu0
      %v1095 = vadd.f32 0.0, %v1094
      %v1096 = vpop.f32.mrb[0].mxu0
      %v1097 = vpop.f32.mrb[0].mxu0
      %v1098 = vadd.f32 0.0, %v1097
      %v1099 = vpop.f32.mrb[0].mxu0
      %1100 = vmatprep.mubr.bf16.mxu0 0
      %1101 = vmatmul.mubr.bf16.gmra.mrb[0].mxu0 %v1020
      %v1102 = vpop.f32.mrb[0].mxu0
      %v1103 = vadd.f32 0.0, %v1102
      %v1104 = vpop.f32.mrb[0].mxu0
      %v1105 = vpop.f32.mrb[0].mxu0
      %v1106 = vadd.f32 0.0, %v1105
      %v1107 = vpop.f32.mrb[0].mxu0
      %1108 = vmatprep.mubr.bf16.mxu0 0
      %1109 = vmatmul.mubr.bf16.gmra.mrb[0].mxu0 %v1023
      %v1110 = vpop.f32.mrb[0].mxu0
      %v1111 = vadd.f32 0.0, %v1110
      %v1112 = vpop.f32.mrb[0].mxu0
      %v1113 = vpop.f32.mrb[0].mxu0
      %v1114 = vadd.f32 0.0, %v1113
      %v1115 = vpop.f32.mrb[0].mxu0
      %1116 = vmatprep.mubr.bf16.mxu0 0
      %1117 = vmatmul.mubr.bf16.gmra.mrb[0].mxu0 %v1026
      %v1118 = vpop.f32.mrb[0].mxu0
      %v1119 = vadd.f32 0.0, %v1118
      %v1120 = vpop.f32.mrb[0].mxu0
      %v1121 = vpop.f32.mrb[0].mxu0
      %v1122 = vadd.f32 0.0, %v1121
      %v1123 = vpop.f32.mrb[0].mxu0
      %1124 = vdwg.mxu0
      %v1125 = vadd.f32 %v901, %v1063
      %v1126 = vadd.f32 %v902, %v1066
      %v1127 = vadd.f32 %v903, %v1071
      %v1128 = vadd.f32 %v904, %v1074
      %v1129 = vadd.f32 %v905, %v1079
      %v1130 = vadd.f32 %v906, %v1082
      %v1131 = vadd.f32 %v907, %v1087
      %v1132 = vadd.f32 %v908, %v1090
      %v1133 = vadd.f32 %v909, %v1095
      %v1134 = vadd.f32 %v910, %v1098
      %v1135 = vadd.f32 %v911, %v1103
      %v1136 = vadd.f32 %v912, %v1106
      %v1137 = vadd.f32 %v913, %v1111
      %v1138 = vadd.f32 %v914, %v1114
      %v1139 = vadd.f32 %v915, %v1119
      %v1140 = vadd.f32 %v916, %v1122
      %s1141 = sadd.s32 %s247, 16
      %s1142 = sshra.s32 %s1141, 3
      %s1143 = sand.u32 %s1141, 7
      %s1144 = smul.addr %s1142, 4
      %s1145 = scalar_lea.vmem %s219, %s1144
      %v1146 = vld [vmem:[%s1145] sm:$0xf]
      %v1147 = vld [vmem:[%s1145 + $0x4] sm:$0xf]
      %v1148 = vld [vmem:[%s1145 + $0x8] sm:$0xf]
      %v1149 = vld [vmem:[%s1145 + $0xc] sm:$0xf]
      %v1150 = vld [vmem:[%s1145 + $0x10] sm:$0xf]
      %v1151 = vld [vmem:[%s1145 + $0x14] sm:$0xf]
      %v1152 = vld [vmem:[%s1145 + $0x18] sm:$0xf]
      %v1153 = vld [vmem:[%s1145 + $0x1c] sm:$0xf]
      %v1154 = vld [vmem:[%s1145 + $0x20] sm:$0xf]
      %v1155 = vld [vmem:[%s1145 + $0x24] sm:$0xf]
      %v1156 = vld [vmem:[%s1145 + $0x28] sm:$0xf]
      %v1157 = vld [vmem:[%s1145 + $0x2c] sm:$0xf]
      %v1158 = vld [vmem:[%s1145 + $0x30] sm:$0xf]
      %v1159 = vld [vmem:[%s1145 + $0x34] sm:$0xf]
      %v1160 = vld [vmem:[%s1145 + $0x38] sm:$0xf]
      %v1161 = vld [vmem:[%s1145 + $0x3c] sm:$0xf]
      %v1162 = vld [vmem:[%s1145 + $0x40] sm:$0x3]
      %s1163 = scalar_lea.vmem %s227, 192
      %v1164 = vld [vmem:[%s1163] sm:$0xf]
      %v1165 = vld [vmem:[%s1163 + $0x4] sm:$0xf]
      %v1166 = vld [vmem:[%s1163 + $0x8] sm:$0xf]
      %v1167 = vld [vmem:[%s1163 + $0xc] sm:$0xf]
      %v1168 = vld [vmem:[%s1163 + $0x10] sm:$0xf]
      %v1169 = vld [vmem:[%s1163 + $0x14] sm:$0xf]
      %v1170 = vld [vmem:[%s1163 + $0x18] sm:$0xf]
      %v1171 = vld [vmem:[%s1163 + $0x1c] sm:$0xf]
      %v1172 = vld [vmem:[%s1163 + $0x20] sm:$0xf]
      %v1173 = vld [vmem:[%s1163 + $0x24] sm:$0xf]
      %v1174 = vld [vmem:[%s1163 + $0x28] sm:$0xf]
      %v1175 = vld [vmem:[%s1163 + $0x2c] sm:$0xf]
      %v1192 = vunpack.c.l.b16 %v1146
      %v1193 = vunpack.c.l.b16 %v1147
      %v1194 = vunpack.c.l.b16 %v1148
      %v1195 = vunpack.c.l.b16 %v1149
      %v1196 = vunpack.c.l.b16 %v1150
      %v1197 = vunpack.c.l.b16 %v1151
      %v1198 = vunpack.c.l.b16 %v1152
      %v1199 = vunpack.c.l.b16 %v1153
      %v1200 = vunpack.c.l.b16 %v1154
      %v1201 = vunpack.c.l.b16 %v1155
      %v1202 = vunpack.c.l.b16 %v1156
      %v1203 = vunpack.c.l.b16 %v1157
      %v1204 = vunpack.c.l.b16 %v1158
      %v1205 = vunpack.c.l.b16 %v1159
      %v1206 = vunpack.c.l.b16 %v1160
      %v1207 = vunpack.c.l.b16 %v1161
      %v1208 = vpack.c.b16 %v1193, %v1192
      %v1209 = vpack.c.b16 %v1195, %v1194
      %v1210 = vpack.c.b16 %v1197, %v1196
      %v1211 = vpack.c.b16 %v1199, %v1198
      %v1212 = vpack.c.b16 %v1201, %v1200
      %v1213 = vpack.c.b16 %v1203, %v1202
      %v1214 = vpack.c.b16 %v1205, %v1204
      %v1215 = vpack.c.b16 %v1207, %v1206
      %v1228 = vunpack.c.l.b16 %v1164
      %v1229 = vunpack.c.l.b16 %v1165
      %v1230 = vunpack.c.l.b16 %v1166
      %v1231 = vunpack.c.l.b16 %v1167
      %v1232 = vunpack.c.l.b16 %v1168
      %v1233 = vunpack.c.l.b16 %v1169
      %v1234 = vunpack.c.l.b16 %v1170
      %v1235 = vunpack.c.l.b16 %v1171
      %v1236 = vunpack.c.l.b16 %v1172
      %v1237 = vunpack.c.l.b16 %v1173
      %v1238 = vunpack.c.l.b16 %v1174
      %v1239 = vunpack.c.l.b16 %v1175
      %v1240 = vpack.c.b16 %v1229, %v1228
      %v1241 = vpack.c.b16 %v1231, %v1230
      %v1242 = vpack.c.b16 %v1233, %v1232
      %v1243 = vpack.c.b16 %v1235, %v1234
      %v1244 = vpack.c.b16 %v1237, %v1236
      %v1245 = vpack.c.b16 %v1239, %v1238
      %v1253 = vsel %vm442, %v1208, 0
      %v1256 = vsel %vm442, %v1209, 0
      %v1259 = vsel %vm442, %v1210, 0
      %v1262 = vsel %vm442, %v1211, 0
      %v1265 = vsel %vm442, %v1212, 0
      %v1268 = vsel %vm442, %v1213, 0
      %v1271 = vsel %vm442, %v1214, 0
      %v1274 = vsel %vm442, %v1215, 0
      %1276 = vmatprep.subr.bf16.mxu0 0
      %1277 = vmatpush1.bf16.msra.mxu0 %v1240
      %1278 = vmatprep.subr.bf16.mxu0 0
      %1279 = vmatpush1.bf16.msra.mxu0 %v1241
      %1280 = vmatprep.subr.bf16.mxu0 0
      %1281 = vmatpush1.bf16.msra.mxu0 %v1242
      %1282 = vmatprep.subr.bf16.mxu0 0
      %1283 = vmatpush1.bf16.msra.mxu0 %v1243
      %1284 = vmatprep.subr.bf16.mxu0 0
      %1285 = vmatpush1.bf16.msra.mxu0 %v1244
      %1286 = vmatprep.subr.bf16.mxu0 0
      %1287 = vmatpush1.bf16.msra.mxu0 %v1245
      %1288 = vmatprep.subr.bf16.mxu0 0
      %1289 = vmatpush1.bf16.msra.mxu0 0
      %1290 = vmatprep.subr.bf16.mxu0 0
      %1291 = vmatpush1.bf16.msra.mxu0 0
      %1292 = vmatprep.subr.bf16.mxu0 0
      %1293 = vmatpush1.bf16.msra.mxu0 0
      %1294 = vmatprep.subr.bf16.mxu0 0
      %1295 = vmatpush1.bf16.msra.mxu0 0
      %1296 = vmatprep.subr.bf16.mxu0 0
      %1297 = vmatpush1.bf16.msra.mxu0 0
      %1298 = vmatprep.subr.bf16.mxu0 0
      %1299 = vmatpush1.bf16.msra.mxu0 0
      %1300 = vmatprep.subr.bf16.mxu0 0
      %1301 = vmatpush1.bf16.msra.mxu0 0
      %1302 = vmatprep.subr.bf16.mxu0 0
      %1303 = vmatpush1.bf16.msra.mxu0 0
      %1304 = vmatprep.subr.bf16.mxu0 0
      %1305 = vmatpush1.bf16.msra.mxu0 0
      %1306 = vmatprep.subr.bf16.mxu0 0
      %1307 = vmatpush1.bf16.msra.mxu0 0
      %1308 = vmatprep.mubr.bf16.mxu0 0
      %1309 = vmatmul.mubr.bf16.gmra.mrb[0].mxu0 %v1253
      %v1310 = vpop.f32.mrb[0].mxu0
      %v1311 = vadd.f32 0.0, %v1310
      %v1312 = vpop.f32.mrb[0].mxu0
      %v1313 = vpop.f32.mrb[0].mxu0
      %v1314 = vadd.f32 0.0, %v1313
      %v1315 = vpop.f32.mrb[0].mxu0
      %1316 = vmatprep.mubr.bf16.mxu0 0
      %1317 = vmatmul.mubr.bf16.gmra.mrb[0].mxu0 %v1256
      %v1318 = vpop.f32.mrb[0].mxu0
      %v1319 = vadd.f32 0.0, %v1318
      %v1320 = vpop.f32.mrb[0].mxu0
      %v1321 = vpop.f32.mrb[0].mxu0
      %v1322 = vadd.f32 0.0, %v1321
      %v1323 = vpop.f32.mrb[0].mxu0
      %1324 = vmatprep.mubr.bf16.mxu0 0
      %1325 = vmatmul.mubr.bf16.gmra.mrb[0].mxu0 %v1259
      %v1326 = vpop.f32.mrb[0].mxu0
      %v1327 = vadd.f32 0.0, %v1326
      %v1328 = vpop.f32.mrb[0].mxu0
      %v1329 = vpop.f32.mrb[0].mxu0
      %v1330 = vadd.f32 0.0, %v1329
      %v1331 = vpop.f32.mrb[0].mxu0
      %1332 = vmatprep.mubr.bf16.mxu0 0
      %1333 = vmatmul.mubr.bf16.gmra.mrb[0].mxu0 %v1262
      %v1334 = vpop.f32.mrb[0].mxu0
      %v1335 = vadd.f32 0.0, %v1334
      %v1336 = vpop.f32.mrb[0].mxu0
      %v1337 = vpop.f32.mrb[0].mxu0
      %v1338 = vadd.f32 0.0, %v1337
      %v1339 = vpop.f32.mrb[0].mxu0
      %1340 = vmatprep.mubr.bf16.mxu0 0
      %1341 = vmatmul.mubr.bf16.gmra.mrb[0].mxu0 %v1265
      %v1342 = vpop.f32.mrb[0].mxu0
      %v1343 = vadd.f32 0.0, %v1342
      %v1344 = vpop.f32.mrb[0].mxu0
      %v1345 = vpop.f32.mrb[0].mxu0
      %v1346 = vadd.f32 0.0, %v1345
      %v1347 = vpop.f32.mrb[0].mxu0
      %1348 = vmatprep.mubr.bf16.mxu0 0
      %1349 = vmatmul.mubr.bf16.gmra.mrb[0].mxu0 %v1268
      %v1350 = vpop.f32.mrb[0].mxu0
      %v1351 = vadd.f32 0.0, %v1350
      %v1352 = vpop.f32.mrb[0].mxu0
      %v1353 = vpop.f32.mrb[0].mxu0
      %v1354 = vadd.f32 0.0, %v1353
      %v1355 = vpop.f32.mrb[0].mxu0
      %1356 = vmatprep.mubr.bf16.mxu0 0
      %1357 = vmatmul.mubr.bf16.gmra.mrb[0].mxu0 %v1271
      %v1358 = vpop.f32.mrb[0].mxu0
      %v1359 = vadd.f32 0.0, %v1358
      %v1360 = vpop.f32.mrb[0].mxu0
      %v1361 = vpop.f32.mrb[0].mxu0
      %v1362 = vadd.f32 0.0, %v1361
      %v1363 = vpop.f32.mrb[0].mxu0
      %1364 = vmatprep.mubr.bf16.mxu0 0
      %1365 = vmatmul.mubr.bf16.gmra.mrb[0].mxu0 %v1274
      %v1366 = vpop.f32.mrb[0].mxu0
      %v1367 = vadd.f32 0.0, %v1366
      %v1368 = vpop.f32.mrb[0].mxu0
      %v1369 = vpop.f32.mrb[0].mxu0
      %v1370 = vadd.f32 0.0, %v1369
      %v1371 = vpop.f32.mrb[0].mxu0
      %1372 = vdwg.mxu0
      %v1373 = vadd.f32 %v1125, %v1311
      %v1374 = vadd.f32 %v1126, %v1314
      %v1375 = vadd.f32 %v1127, %v1319
      %v1376 = vadd.f32 %v1128, %v1322
      %v1377 = vadd.f32 %v1129, %v1327
      %v1378 = vadd.f32 %v1130, %v1330
      %v1379 = vadd.f32 %v1131, %v1335
      %v1380 = vadd.f32 %v1132, %v1338
      %v1381 = vadd.f32 %v1133, %v1343
      %v1382 = vadd.f32 %v1134, %v1346
      %v1383 = vadd.f32 %v1135, %v1351
      %v1384 = vadd.f32 %v1136, %v1354
      %v1385 = vadd.f32 %v1137, %v1359
      %v1386 = vadd.f32 %v1138, %v1362
      %v1387 = vadd.f32 %v1139, %v1367
      %v1388 = vadd.f32 %v1140, %v1370
      %s1389 = scalar_lea.vmem %s227, 240
      %v1390 = vld [vmem:[%s1389] sm:$0xf]
      %v1391 = vld [vmem:[%s1389 + $0x4] sm:$0xf]
      %v1392 = vld [vmem:[%s1389 + $0x8] sm:$0xf]
      %v1393 = vld [vmem:[%s1389 + $0xc] sm:$0xf]
      %v1394 = vld [vmem:[%s1389 + $0x10] sm:$0xf]
      %v1395 = vld [vmem:[%s1389 + $0x14] sm:$0xf]
      %v1396 = vld [vmem:[%s1389 + $0x18] sm:$0xf]
      %v1397 = vld [vmem:[%s1389 + $0x1c] sm:$0xf]
      %v1398 = vld [vmem:[%s1389 + $0x20] sm:$0xf]
      %v1399 = vld [vmem:[%s1389 + $0x24] sm:$0xf]
      %v1400 = vld [vmem:[%s1389 + $0x28] sm:$0xf]
      %v1401 = vld [vmem:[%s1389 + $0x2c] sm:$0xf]
      %v1403 = vunpack.c.l.b16 %v1162
      %v1404 = vpack.c.b16 %v1403, %v1403
      %v1405 = vshrl.u32 %v1208, 16
      %v1407 = vshll.u32 %v1208, 16
      %v1409 = vrot.slane %v1407, 1
      %v1410 = vor.u32 %v1405, %v1409
      %v1411 = vshll.u32 %v1209, 16
      %v1413 = vrot.slane %v1411, 1
      %v1414 = vsel %vm337, %v1410, %v1413
      %v1415 = vshrl.u32 %v1209, 16
      %v1417 = vor.u32 %v1415, %v1413
      %v1418 = vshll.u32 %v1210, 16
      %v1420 = vrot.slane %v1418, 1
      %v1421 = vsel %vm337, %v1417, %v1420
      %v1422 = vshrl.u32 %v1210, 16
      %v1424 = vor.u32 %v1422, %v1420
      %v1425 = vshll.u32 %v1211, 16
      %v1427 = vrot.slane %v1425, 1
      %v1428 = vsel %vm337, %v1424, %v1427
      %v1429 = vshrl.u32 %v1211, 16
      %v1431 = vor.u32 %v1429, %v1427
      %v1432 = vshll.u32 %v1212, 16
      %v1434 = vrot.slane %v1432, 1
      %v1435 = vsel %vm337, %v1431, %v1434
      %v1436 = vshrl.u32 %v1212, 16
      %v1438 = vor.u32 %v1436, %v1434
      %v1439 = vshll.u32 %v1213, 16
      %v1441 = vrot.slane %v1439, 1
      %v1442 = vsel %vm337, %v1438, %v1441
      %v1443 = vshrl.u32 %v1213, 16
      %v1445 = vor.u32 %v1443, %v1441
      %v1446 = vshll.u32 %v1214, 16
      %v1448 = vrot.slane %v1446, 1
      %v1449 = vsel %vm337, %v1445, %v1448
      %v1450 = vshrl.u32 %v1214, 16
      %v1452 = vor.u32 %v1450, %v1448
      %v1453 = vshll.u32 %v1215, 16
      %v1455 = vrot.slane %v1453, 1
      %v1456 = vsel %vm337, %v1452, %v1455
      %v1457 = vshrl.u32 %v1215, 16
      %v1459 = vor.u32 %v1457, %v1455
      %v1461 = vshll.u32 %v1404, 16
      %v1463 = vrot.slane %v1461, 1
      %v1464 = vsel %vm337, %v1459, %v1463
      %v1477 = vunpack.c.l.b16 %v1390
      %v1478 = vunpack.c.l.b16 %v1391
      %v1479 = vunpack.c.l.b16 %v1392
      %v1480 = vunpack.c.l.b16 %v1393
      %v1481 = vunpack.c.l.b16 %v1394
      %v1482 = vunpack.c.l.b16 %v1395
      %v1483 = vunpack.c.l.b16 %v1396
      %v1484 = vunpack.c.l.b16 %v1397
      %v1485 = vunpack.c.l.b16 %v1398
      %v1486 = vunpack.c.l.b16 %v1399
      %v1487 = vunpack.c.l.b16 %v1400
      %v1488 = vunpack.c.l.b16 %v1401
      %v1489 = vpack.c.b16 %v1478, %v1477
      %v1490 = vpack.c.b16 %v1480, %v1479
      %v1491 = vpack.c.b16 %v1482, %v1481
      %v1492 = vpack.c.b16 %v1484, %v1483
      %v1493 = vpack.c.b16 %v1486, %v1485
      %v1494 = vpack.c.b16 %v1488, %v1487
      %v1502 = vsel %vm442, %v1414, 0
      %v1505 = vsel %vm442, %v1421, 0
      %v1508 = vsel %vm442, %v1428, 0
      %v1511 = vsel %vm442, %v1435, 0
      %v1514 = vsel %vm442, %v1442, 0
      %v1517 = vsel %vm442, %v1449, 0
      %v1520 = vsel %vm442, %v1456, 0
      %v1523 = vsel %vm442, %v1464, 0
      %1525 = vmatprep.subr.bf16.mxu0 0
      %1526 = vmatpush1.bf16.msra.mxu0 %v1489
      %1527 = vmatprep.subr.bf16.mxu0 0
      %1528 = vmatpush1.bf16.msra.mxu0 %v1490
      %1529 = vmatprep.subr.bf16.mxu0 0
      %1530 = vmatpush1.bf16.msra.mxu0 %v1491
      %1531 = vmatprep.subr.bf16.mxu0 0
      %1532 = vmatpush1.bf16.msra.mxu0 %v1492
      %1533 = vmatprep.subr.bf16.mxu0 0
      %1534 = vmatpush1.bf16.msra.mxu0 %v1493
      %1535 = vmatprep.subr.bf16.mxu0 0
      %1536 = vmatpush1.bf16.msra.mxu0 %v1494
      %1537 = vmatprep.subr.bf16.mxu0 0
      %1538 = vmatpush1.bf16.msra.mxu0 0
      %1539 = vmatprep.subr.bf16.mxu0 0
      %1540 = vmatpush1.bf16.msra.mxu0 0
      %1541 = vmatprep.subr.bf16.mxu0 0
      %1542 = vmatpush1.bf16.msra.mxu0 0
      %1543 = vmatprep.subr.bf16.mxu0 0
      %1544 = vmatpush1.bf16.msra.mxu0 0
      %1545 = vmatprep.subr.bf16.mxu0 0
      %1546 = vmatpush1.bf16.msra.mxu0 0
      %1547 = vmatprep.subr.bf16.mxu0 0
      %1548 = vmatpush1.bf16.msra.mxu0 0
      %1549 = vmatprep.subr.bf16.mxu0 0
      %1550 = vmatpush1.bf16.msra.mxu0 0
      %1551 = vmatprep.subr.bf16.mxu0 0
      %1552 = vmatpush1.bf16.msra.mxu0 0
      %1553 = vmatprep.subr.bf16.mxu0 0
      %1554 = vmatpush1.bf16.msra.mxu0 0
      %1555 = vmatprep.subr.bf16.mxu0 0
      %1556 = vmatpush1.bf16.msra.mxu0 0
      %1557 = vmatprep.mubr.bf16.mxu0 0
      %1558 = vmatmul.mubr.bf16.gmra.mrb[0].mxu0 %v1502
      %v1559 = vpop.f32.mrb[0].mxu0
      %v1560 = vadd.f32 0.0, %v1559
      %v1561 = vpop.f32.mrb[0].mxu0
      %v1562 = vpop.f32.mrb[0].mxu0
      %v1563 = vadd.f32 0.0, %v1562
      %v1564 = vpop.f32.mrb[0].mxu0
      %1565 = vmatprep.mubr.bf16.mxu0 0
      %1566 = vmatmul.mubr.bf16.gmra.mrb[0].mxu0 %v1505
      %v1567 = vpop.f32.mrb[0].mxu0
      %v1568 = vadd.f32 0.0, %v1567
      %v1569 = vpop.f32.mrb[0].mxu0
      %v1570 = vpop.f32.mrb[0].mxu0
      %v1571 = vadd.f32 0.0, %v1570
      %v1572 = vpop.f32.mrb[0].mxu0
      %1573 = vmatprep.mubr.bf16.mxu0 0
      %1574 = vmatmul.mubr.bf16.gmra.mrb[0].mxu0 %v1508
      %v1575 = vpop.f32.mrb[0].mxu0
      %v1576 = vadd.f32 0.0, %v1575
      %v1577 = vpop.f32.mrb[0].mxu0
      %v1578 = vpop.f32.mrb[0].mxu0
      %v1579 = vadd.f32 0.0, %v1578
      %v1580 = vpop.f32.mrb[0].mxu0
      %1581 = vmatprep.mubr.bf16.mxu0 0
      %1582 = vmatmul.mubr.bf16.gmra.mrb[0].mxu0 %v1511
      %v1583 = vpop.f32.mrb[0].mxu0
      %v1584 = vadd.f32 0.0, %v1583
      %v1585 = vpop.f32.mrb[0].mxu0
      %v1586 = vpop.f32.mrb[0].mxu0
      %v1587 = vadd.f32 0.0, %v1586
      %v1588 = vpop.f32.mrb[0].mxu0
      %1589 = vmatprep.mubr.bf16.mxu0 0
      %1590 = vmatmul.mubr.bf16.gmra.mrb[0].mxu0 %v1514
      %v1591 = vpop.f32.mrb[0].mxu0
      %v1592 = vadd.f32 0.0, %v1591
      %v1593 = vpop.f32.mrb[0].mxu0
      %v1594 = vpop.f32.mrb[0].mxu0
      %v1595 = vadd.f32 0.0, %v1594
      %v1596 = vpop.f32.mrb[0].mxu0
      %1597 = vmatprep.mubr.bf16.mxu0 0
      %1598 = vmatmul.mubr.bf16.gmra.mrb[0].mxu0 %v1517
      %v1599 = vpop.f32.mrb[0].mxu0
      %v1600 = vadd.f32 0.0, %v1599
      %v1601 = vpop.f32.mrb[0].mxu0
      %v1602 = vpop.f32.mrb[0].mxu0
      %v1603 = vadd.f32 0.0, %v1602
      %v1604 = vpop.f32.mrb[0].mxu0
      %1605 = vmatprep.mubr.bf16.mxu0 0
      %1606 = vmatmul.mubr.bf16.gmra.mrb[0].mxu0 %v1520
      %v1607 = vpop.f32.mrb[0].mxu0
      %v1608 = vadd.f32 0.0, %v1607
      %v1609 = vpop.f32.mrb[0].mxu0
      %v1610 = vpop.f32.mrb[0].mxu0
      %v1611 = vadd.f32 0.0, %v1610
      %v1612 = vpop.f32.mrb[0].mxu0
      %1613 = vmatprep.mubr.bf16.mxu0 0
      %1614 = vmatmul.mubr.bf16.gmra.mrb[0].mxu0 %v1523
      %v1615 = vpop.f32.mrb[0].mxu0
      %v1616 = vadd.f32 0.0, %v1615
      %v1617 = vpop.f32.mrb[0].mxu0
      %v1618 = vpop.f32.mrb[0].mxu0
      %v1619 = vadd.f32 0.0, %v1618
      %v1620 = vpop.f32.mrb[0].mxu0
      %1621 = vdwg.mxu0
      %v1622 = vadd.f32 %v1373, %v1560
      %v1623 = vadd.f32 %v1374, %v1563
      %v1624 = vadd.f32 %v1375, %v1568
      %v1625 = vadd.f32 %v1376, %v1571
      %v1626 = vadd.f32 %v1377, %v1576
      %v1627 = vadd.f32 %v1378, %v1579
      %v1628 = vadd.f32 %v1379, %v1584
      %v1629 = vadd.f32 %v1380, %v1587
      %v1630 = vadd.f32 %v1381, %v1592
      %v1631 = vadd.f32 %v1382, %v1595
      %v1632 = vadd.f32 %v1383, %v1600
      %v1633 = vadd.f32 %v1384, %v1603
      %v1634 = vadd.f32 %v1385, %v1608
      %v1635 = vadd.f32 %v1386, %v1611
      %v1636 = vadd.f32 %v1387, %v1616
      %v1637 = vadd.f32 %v1388, %v1619
      %s1638 = scalar_lea.vmem %s227, 288
      %v1639 = vld [vmem:[%s1638] sm:$0xf]
      %v1640 = vld [vmem:[%s1638 + $0x4] sm:$0xf]
      %v1641 = vld [vmem:[%s1638 + $0x8] sm:$0xf]
      %v1642 = vld [vmem:[%s1638 + $0xc] sm:$0xf]
      %v1643 = vld [vmem:[%s1638 + $0x10] sm:$0xf]
      %v1644 = vld [vmem:[%s1638 + $0x14] sm:$0xf]
      %v1645 = vld [vmem:[%s1638 + $0x18] sm:$0xf]
      %v1646 = vld [vmem:[%s1638 + $0x1c] sm:$0xf]
      %v1647 = vld [vmem:[%s1638 + $0x20] sm:$0xf]
      %v1648 = vld [vmem:[%s1638 + $0x24] sm:$0xf]
      %v1649 = vld [vmem:[%s1638 + $0x28] sm:$0xf]
      %v1650 = vld [vmem:[%s1638 + $0x2c] sm:$0xf]
      %v1651 = vrot.slane %v1208, 1
      %v1652 = vrot.slane %v1209, 1
      %v1653 = vsel %vm726, %v1651, %v1652
      %v1654 = vrot.slane %v1210, 1
      %v1655 = vsel %vm726, %v1652, %v1654
      %v1656 = vrot.slane %v1211, 1
      %v1657 = vsel %vm726, %v1654, %v1656
      %v1658 = vrot.slane %v1212, 1
      %v1659 = vsel %vm726, %v1656, %v1658
      %v1660 = vrot.slane %v1213, 1
      %v1661 = vsel %vm726, %v1658, %v1660
      %v1662 = vrot.slane %v1214, 1
      %v1663 = vsel %vm726, %v1660, %v1662
      %v1664 = vrot.slane %v1215, 1
      %v1665 = vsel %vm726, %v1662, %v1664
      %v1666 = vrot.slane %v1404, 1
      %v1667 = vsel %vm726, %v1664, %v1666
      %v1680 = vunpack.c.l.b16 %v1639
      %v1681 = vunpack.c.l.b16 %v1640
      %v1682 = vunpack.c.l.b16 %v1641
      %v1683 = vunpack.c.l.b16 %v1642
      %v1684 = vunpack.c.l.b16 %v1643
      %v1685 = vunpack.c.l.b16 %v1644
      %v1686 = vunpack.c.l.b16 %v1645
      %v1687 = vunpack.c.l.b16 %v1646
      %v1688 = vunpack.c.l.b16 %v1647
      %v1689 = vunpack.c.l.b16 %v1648
      %v1690 = vunpack.c.l.b16 %v1649
      %v1691 = vunpack.c.l.b16 %v1650
      %v1692 = vpack.c.b16 %v1681, %v1680
      %v1693 = vpack.c.b16 %v1683, %v1682
      %v1694 = vpack.c.b16 %v1685, %v1684
      %v1695 = vpack.c.b16 %v1687, %v1686
      %v1696 = vpack.c.b16 %v1689, %v1688
      %v1697 = vpack.c.b16 %v1691, %v1690
      %v1705 = vsel %vm442, %v1653, 0
      %v1708 = vsel %vm442, %v1655, 0
      %v1711 = vsel %vm442, %v1657, 0
      %v1714 = vsel %vm442, %v1659, 0
      %v1717 = vsel %vm442, %v1661, 0
      %v1720 = vsel %vm442, %v1663, 0
      %v1723 = vsel %vm442, %v1665, 0
      %v1726 = vsel %vm442, %v1667, 0
      %1728 = vmatprep.subr.bf16.mxu0 0
      %1729 = vmatpush1.bf16.msra.mxu0 %v1692
      %1730 = vmatprep.subr.bf16.mxu0 0
      %1731 = vmatpush1.bf16.msra.mxu0 %v1693
      %1732 = vmatprep.subr.bf16.mxu0 0
      %1733 = vmatpush1.bf16.msra.mxu0 %v1694
      %1734 = vmatprep.subr.bf16.mxu0 0
      %1735 = vmatpush1.bf16.msra.mxu0 %v1695
      %1736 = vmatprep.subr.bf16.mxu0 0
      %1737 = vmatpush1.bf16.msra.mxu0 %v1696
      %1738 = vmatprep.subr.bf16.mxu0 0
      %1739 = vmatpush1.bf16.msra.mxu0 %v1697
      %1740 = vmatprep.subr.bf16.mxu0 0
      %1741 = vmatpush1.bf16.msra.mxu0 0
      %1742 = vmatprep.subr.bf16.mxu0 0
      %1743 = vmatpush1.bf16.msra.mxu0 0
      %1744 = vmatprep.subr.bf16.mxu0 0
      %1745 = vmatpush1.bf16.msra.mxu0 0
      %1746 = vmatprep.subr.bf16.mxu0 0
      %1747 = vmatpush1.bf16.msra.mxu0 0
      %1748 = vmatprep.subr.bf16.mxu0 0
      %1749 = vmatpush1.bf16.msra.mxu0 0
      %1750 = vmatprep.subr.bf16.mxu0 0
      %1751 = vmatpush1.bf16.msra.mxu0 0
      %1752 = vmatprep.subr.bf16.mxu0 0
      %1753 = vmatpush1.bf16.msra.mxu0 0
      %1754 = vmatprep.subr.bf16.mxu0 0
      %1755 = vmatpush1.bf16.msra.mxu0 0
      %1756 = vmatprep.subr.bf16.mxu0 0
      %1757 = vmatpush1.bf16.msra.mxu0 0
      %1758 = vmatprep.subr.bf16.mxu0 0
      %1759 = vmatpush1.bf16.msra.mxu0 0
      %1760 = vmatprep.mubr.bf16.mxu0 0
      %1761 = vmatmul.mubr.bf16.gmra.mrb[0].mxu0 %v1705
      %v1762 = vpop.f32.mrb[0].mxu0
      %v1763 = vadd.f32 0.0, %v1762
      %v1764 = vpop.f32.mrb[0].mxu0
      %v1765 = vpop.f32.mrb[0].mxu0
      %v1766 = vadd.f32 0.0, %v1765
      %v1767 = vpop.f32.mrb[0].mxu0
      %1768 = vmatprep.mubr.bf16.mxu0 0
      %1769 = vmatmul.mubr.bf16.gmra.mrb[0].mxu0 %v1708
      %v1770 = vpop.f32.mrb[0].mxu0
      %v1771 = vadd.f32 0.0, %v1770
      %v1772 = vpop.f32.mrb[0].mxu0
      %v1773 = vpop.f32.mrb[0].mxu0
      %v1774 = vadd.f32 0.0, %v1773
      %v1775 = vpop.f32.mrb[0].mxu0
      %1776 = vmatprep.mubr.bf16.mxu0 0
      %1777 = vmatmul.mubr.bf16.gmra.mrb[0].mxu0 %v1711
      %v1778 = vpop.f32.mrb[0].mxu0
      %v1779 = vadd.f32 0.0, %v1778
      %v1780 = vpop.f32.mrb[0].mxu0
      %v1781 = vpop.f32.mrb[0].mxu0
      %v1782 = vadd.f32 0.0, %v1781
      %v1783 = vpop.f32.mrb[0].mxu0
      %1784 = vmatprep.mubr.bf16.mxu0 0
      %1785 = vmatmul.mubr.bf16.gmra.mrb[0].mxu0 %v1714
      %v1786 = vpop.f32.mrb[0].mxu0
      %v1787 = vadd.f32 0.0, %v1786
      %v1788 = vpop.f32.mrb[0].mxu0
      %v1789 = vpop.f32.mrb[0].mxu0
      %v1790 = vadd.f32 0.0, %v1789
      %v1791 = vpop.f32.mrb[0].mxu0
      %1792 = vmatprep.mubr.bf16.mxu0 0
      %1793 = vmatmul.mubr.bf16.gmra.mrb[0].mxu0 %v1717
      %v1794 = vpop.f32.mrb[0].mxu0
      %v1795 = vadd.f32 0.0, %v1794
      %v1796 = vpop.f32.mrb[0].mxu0
      %v1797 = vpop.f32.mrb[0].mxu0
      %v1798 = vadd.f32 0.0, %v1797
      %v1799 = vpop.f32.mrb[0].mxu0
      %1800 = vmatprep.mubr.bf16.mxu0 0
      %1801 = vmatmul.mubr.bf16.gmra.mrb[0].mxu0 %v1720
      %v1802 = vpop.f32.mrb[0].mxu0
      %v1803 = vadd.f32 0.0, %v1802
      %v1804 = vpop.f32.mrb[0].mxu0
      %v1805 = vpop.f32.mrb[0].mxu0
      %v1806 = vadd.f32 0.0, %v1805
      %v1807 = vpop.f32.mrb[0].mxu0
      %1808 = vmatprep.mubr.bf16.mxu0 0
      %1809 = vmatmul.mubr.bf16.gmra.mrb[0].mxu0 %v1723
      %v1810 = vpop.f32.mrb[0].mxu0
      %v1811 = vadd.f32 0.0, %v1810
      %v1812 = vpop.f32.mrb[0].mxu0
      %v1813 = vpop.f32.mrb[0].mxu0
      %v1814 = vadd.f32 0.0, %v1813
      %v1815 = vpop.f32.mrb[0].mxu0
      %1816 = vmatprep.mubr.bf16.mxu0 0
      %1817 = vmatmul.mubr.bf16.gmra.mrb[0].mxu0 %v1726
      %v1818 = vpop.f32.mrb[0].mxu0
      %v1819 = vadd.f32 0.0, %v1818
      %v1820 = vpop.f32.mrb[0].mxu0
      %v1821 = vpop.f32.mrb[0].mxu0
      %v1822 = vadd.f32 0.0, %v1821
      %v1823 = vpop.f32.mrb[0].mxu0
      %1824 = vdwg.mxu0
      %v1825 = vadd.f32 %v1622, %v1763
      %v1826 = vadd.f32 %v1623, %v1766
      %v1827 = vadd.f32 %v1624, %v1771
      %v1828 = vadd.f32 %v1625, %v1774
      %v1829 = vadd.f32 %v1626, %v1779
      %v1830 = vadd.f32 %v1627, %v1782
      %v1831 = vadd.f32 %v1628, %v1787
      %v1832 = vadd.f32 %v1629, %v1790
      %v1833 = vadd.f32 %v1630, %v1795
      %v1834 = vadd.f32 %v1631, %v1798
      %v1835 = vadd.f32 %v1632, %v1803
      %v1836 = vadd.f32 %v1633, %v1806
      %v1837 = vadd.f32 %v1634, %v1811
      %v1838 = vadd.f32 %v1635, %v1814
      %v1839 = vadd.f32 %v1636, %v1819
      %v1840 = vadd.f32 %v1637, %v1822
      %s1841 = scalar_lea.vmem %s227, 336
      %v1842 = vld [vmem:[%s1841] sm:$0xf]
      %v1843 = vld [vmem:[%s1841 + $0x4] sm:$0xf]
      %v1844 = vld [vmem:[%s1841 + $0x8] sm:$0xf]
      %v1845 = vld [vmem:[%s1841 + $0xc] sm:$0xf]
      %v1846 = vld [vmem:[%s1841 + $0x10] sm:$0xf]
      %v1847 = vld [vmem:[%s1841 + $0x14] sm:$0xf]
      %v1848 = vld [vmem:[%s1841 + $0x18] sm:$0xf]
      %v1849 = vld [vmem:[%s1841 + $0x1c] sm:$0xf]
      %v1850 = vld [vmem:[%s1841 + $0x20] sm:$0xf]
      %v1851 = vld [vmem:[%s1841 + $0x24] sm:$0xf]
      %v1852 = vld [vmem:[%s1841 + $0x28] sm:$0xf]
      %v1853 = vld [vmem:[%s1841 + $0x2c] sm:$0xf]
      %v1854 = vrot.slane %v1405, 1
      %v1855 = vrot.slane %v1407, 2
      %v1856 = vor.u32 %v1854, %v1855
      %v1857 = vrot.slane %v1415, 1
      %v1858 = vrot.slane %v1411, 2
      %v1859 = vor.u32 %v1857, %v1858
      %v1860 = vsel %vm930, %v1856, %v1859
      %v1861 = vrot.slane %v1422, 1
      %v1862 = vrot.slane %v1418, 2
      %v1863 = vor.u32 %v1861, %v1862
      %v1864 = vsel %vm930, %v1859, %v1863
      %v1865 = vrot.slane %v1429, 1
      %v1866 = vrot.slane %v1425, 2
      %v1867 = vor.u32 %v1865, %v1866
      %v1868 = vsel %vm930, %v1863, %v1867
      %v1869 = vrot.slane %v1436, 1
      %v1870 = vrot.slane %v1432, 2
      %v1871 = vor.u32 %v1869, %v1870
      %v1872 = vsel %vm930, %v1867, %v1871
      %v1873 = vrot.slane %v1443, 1
      %v1874 = vrot.slane %v1439, 2
      %v1875 = vor.u32 %v1873, %v1874
      %v1876 = vsel %vm930, %v1871, %v1875
      %v1877 = vrot.slane %v1450, 1
      %v1878 = vrot.slane %v1446, 2
      %v1879 = vor.u32 %v1877, %v1878
      %v1880 = vsel %vm930, %v1875, %v1879
      %v1881 = vrot.slane %v1457, 1
      %v1882 = vrot.slane %v1453, 2
      %v1883 = vor.u32 %v1881, %v1882
      %v1884 = vsel %vm930, %v1879, %v1883
      %v1885 = vshrl.u32 %v1404, 16
      %v1887 = vrot.slane %v1885, 1
      %v1888 = vrot.slane %v1461, 2
      %v1889 = vor.u32 %v1887, %v1888
      %v1890 = vsel %vm930, %v1883, %v1889
      %v1903 = vunpack.c.l.b16 %v1842
      %v1904 = vunpack.c.l.b16 %v1843
      %v1905 = vunpack.c.l.b16 %v1844
      %v1906 = vunpack.c.l.b16 %v1845
      %v1907 = vunpack.c.l.b16 %v1846
      %v1908 = vunpack.c.l.b16 %v1847
      %v1909 = vunpack.c.l.b16 %v1848
      %v1910 = vunpack.c.l.b16 %v1849
      %v1911 = vunpack.c.l.b16 %v1850
      %v1912 = vunpack.c.l.b16 %v1851
      %v1913 = vunpack.c.l.b16 %v1852
      %v1914 = vunpack.c.l.b16 %v1853
      %v1915 = vpack.c.b16 %v1904, %v1903
      %v1916 = vpack.c.b16 %v1906, %v1905
      %v1917 = vpack.c.b16 %v1908, %v1907
      %v1918 = vpack.c.b16 %v1910, %v1909
      %v1919 = vpack.c.b16 %v1912, %v1911
      %v1920 = vpack.c.b16 %v1914, %v1913
      %v1928 = vsel %vm442, %v1860, 0
      %v1931 = vsel %vm442, %v1864, 0
      %v1934 = vsel %vm442, %v1868, 0
      %v1937 = vsel %vm442, %v1872, 0
      %v1940 = vsel %vm442, %v1876, 0
      %v1943 = vsel %vm442, %v1880, 0
      %v1946 = vsel %vm442, %v1884, 0
      %v1949 = vsel %vm442, %v1890, 0
      %1951 = vmatprep.subr.bf16.mxu0 0
      %1952 = vmatpush1.bf16.msra.mxu0 %v1915
      %1953 = vmatprep.subr.bf16.mxu0 0
      %1954 = vmatpush1.bf16.msra.mxu0 %v1916
      %1955 = vmatprep.subr.bf16.mxu0 0
      %1956 = vmatpush1.bf16.msra.mxu0 %v1917
      %1957 = vmatprep.subr.bf16.mxu0 0
      %1958 = vmatpush1.bf16.msra.mxu0 %v1918
      %1959 = vmatprep.subr.bf16.mxu0 0
      %1960 = vmatpush1.bf16.msra.mxu0 %v1919
      %1961 = vmatprep.subr.bf16.mxu0 0
      %1962 = vmatpush1.bf16.msra.mxu0 %v1920
      %1963 = vmatprep.subr.bf16.mxu0 0
      %1964 = vmatpush1.bf16.msra.mxu0 0
      %1965 = vmatprep.subr.bf16.mxu0 0
      %1966 = vmatpush1.bf16.msra.mxu0 0
      %1967 = vmatprep.subr.bf16.mxu0 0
      %1968 = vmatpush1.bf16.msra.mxu0 0
      %1969 = vmatprep.subr.bf16.mxu0 0
      %1970 = vmatpush1.bf16.msra.mxu0 0
      %1971 = vmatprep.subr.bf16.mxu0 0
      %1972 = vmatpush1.bf16.msra.mxu0 0
      %1973 = vmatprep.subr.bf16.mxu0 0
      %1974 = vmatpush1.bf16.msra.mxu0 0
      %1975 = vmatprep.subr.bf16.mxu0 0
      %1976 = vmatpush1.bf16.msra.mxu0 0
      %1977 = vmatprep.subr.bf16.mxu0 0
      %1978 = vmatpush1.bf16.msra.mxu0 0
      %1979 = vmatprep.subr.bf16.mxu0 0
      %1980 = vmatpush1.bf16.msra.mxu0 0
      %1981 = vmatprep.subr.bf16.mxu0 0
      %1982 = vmatpush1.bf16.msra.mxu0 0
      %1983 = vmatprep.mubr.bf16.mxu0 0
      %1984 = vmatmul.mubr.bf16.gmra.mrb[0].mxu0 %v1928
      %v1985 = vpop.f32.mrb[0].mxu0
      %v1986 = vadd.f32 0.0, %v1985
      %v1987 = vpop.f32.mrb[0].mxu0
      %v1988 = vpop.f32.mrb[0].mxu0
      %v1989 = vadd.f32 0.0, %v1988
      %v1990 = vpop.f32.mrb[0].mxu0
      %1991 = vmatprep.mubr.bf16.mxu0 0
      %1992 = vmatmul.mubr.bf16.gmra.mrb[0].mxu0 %v1931
      %v1993 = vpop.f32.mrb[0].mxu0
      %v1994 = vadd.f32 0.0, %v1993
      %v1995 = vpop.f32.mrb[0].mxu0
      %v1996 = vpop.f32.mrb[0].mxu0
      %v1997 = vadd.f32 0.0, %v1996
      %v1998 = vpop.f32.mrb[0].mxu0
      %1999 = vmatprep.mubr.bf16.mxu0 0
      %2000 = vmatmul.mubr.bf16.gmra.mrb[0].mxu0 %v1934
      %v2001 = vpop.f32.mrb[0].mxu0
      %v2002 = vadd.f32 0.0, %v2001
      %v2003 = vpop.f32.mrb[0].mxu0
      %v2004 = vpop.f32.mrb[0].mxu0
      %v2005 = vadd.f32 0.0, %v2004
      %v2006 = vpop.f32.mrb[0].mxu0
      %2007 = vmatprep.mubr.bf16.mxu0 0
      %2008 = vmatmul.mubr.bf16.gmra.mrb[0].mxu0 %v1937
      %v2009 = vpop.f32.mrb[0].mxu0
      %v2010 = vadd.f32 0.0, %v2009
      %v2011 = vpop.f32.mrb[0].mxu0
      %v2012 = vpop.f32.mrb[0].mxu0
      %v2013 = vadd.f32 0.0, %v2012
      %v2014 = vpop.f32.mrb[0].mxu0
      %2015 = vmatprep.mubr.bf16.mxu0 0
      %2016 = vmatmul.mubr.bf16.gmra.mrb[0].mxu0 %v1940
      %v2017 = vpop.f32.mrb[0].mxu0
      %v2018 = vadd.f32 0.0, %v2017
      %v2019 = vpop.f32.mrb[0].mxu0
      %v2020 = vpop.f32.mrb[0].mxu0
      %v2021 = vadd.f32 0.0, %v2020
      %v2022 = vpop.f32.mrb[0].mxu0
      %2023 = vmatprep.mubr.bf16.mxu0 0
      %2024 = vmatmul.mubr.bf16.gmra.mrb[0].mxu0 %v1943
      %v2025 = vpop.f32.mrb[0].mxu0
      %v2026 = vadd.f32 0.0, %v2025
      %v2027 = vpop.f32.mrb[0].mxu0
      %v2028 = vpop.f32.mrb[0].mxu0
      %v2029 = vadd.f32 0.0, %v2028
      %v2030 = vpop.f32.mrb[0].mxu0
      %2031 = vmatprep.mubr.bf16.mxu0 0
      %2032 = vmatmul.mubr.bf16.gmra.mrb[0].mxu0 %v1946
      %v2033 = vpop.f32.mrb[0].mxu0
      %v2034 = vadd.f32 0.0, %v2033
      %v2035 = vpop.f32.mrb[0].mxu0
      %v2036 = vpop.f32.mrb[0].mxu0
      %v2037 = vadd.f32 0.0, %v2036
      %v2038 = vpop.f32.mrb[0].mxu0
      %2039 = vmatprep.mubr.bf16.mxu0 0
      %2040 = vmatmul.mubr.bf16.gmra.mrb[0].mxu0 %v1949
      %v2041 = vpop.f32.mrb[0].mxu0
      %v2042 = vadd.f32 0.0, %v2041
      %v2043 = vpop.f32.mrb[0].mxu0
      %v2044 = vpop.f32.mrb[0].mxu0
      %v2045 = vadd.f32 0.0, %v2044
      %v2046 = vpop.f32.mrb[0].mxu0
      %2047 = vdwg.mxu0
      %v2048 = vadd.f32 %v1825, %v1986
      %v2049 = vadd.f32 %v1826, %v1989
      %v2050 = vadd.f32 %v1827, %v1994
      %v2051 = vadd.f32 %v1828, %v1997
      %v2052 = vadd.f32 %v1829, %v2002
      %v2053 = vadd.f32 %v1830, %v2005
      %v2054 = vadd.f32 %v1831, %v2010
      %v2055 = vadd.f32 %v1832, %v2013
      %v2056 = vadd.f32 %v1833, %v2018
      %v2057 = vadd.f32 %v1834, %v2021
      %v2058 = vadd.f32 %v1835, %v2026
      %v2059 = vadd.f32 %v1836, %v2029
      %v2060 = vadd.f32 %v1837, %v2034
      %v2061 = vadd.f32 %v1838, %v2037
      %v2062 = vadd.f32 %v1839, %v2042
      %v2063 = vadd.f32 %v1840, %v2045
      %s2064 = sadd.s32 %s247, 32
      %s2065 = sshra.s32 %s2064, 3
      %s2066 = sand.u32 %s2064, 7
      %s2067 = smul.addr %s2065, 4
      %s2068 = scalar_lea.vmem %s219, %s2067
      %v2069 = vld [vmem:[%s2068] sm:$0xf]
      %v2070 = vld [vmem:[%s2068 + $0x4] sm:$0xf]
      %v2071 = vld [vmem:[%s2068 + $0x8] sm:$0xf]
      %v2072 = vld [vmem:[%s2068 + $0xc] sm:$0xf]
      %v2073 = vld [vmem:[%s2068 + $0x10] sm:$0xf]
      %v2074 = vld [vmem:[%s2068 + $0x14] sm:$0xf]
      %v2075 = vld [vmem:[%s2068 + $0x18] sm:$0xf]
      %v2076 = vld [vmem:[%s2068 + $0x1c] sm:$0xf]
      %v2077 = vld [vmem:[%s2068 + $0x20] sm:$0xf]
      %v2078 = vld [vmem:[%s2068 + $0x24] sm:$0xf]
      %v2079 = vld [vmem:[%s2068 + $0x28] sm:$0xf]
      %v2080 = vld [vmem:[%s2068 + $0x2c] sm:$0xf]
      %v2081 = vld [vmem:[%s2068 + $0x30] sm:$0xf]
      %v2082 = vld [vmem:[%s2068 + $0x34] sm:$0xf]
      %v2083 = vld [vmem:[%s2068 + $0x38] sm:$0xf]
      %v2084 = vld [vmem:[%s2068 + $0x3c] sm:$0xf]
      %v2085 = vld [vmem:[%s2068 + $0x40] sm:$0x3]
      %s2086 = scalar_lea.vmem %s227, 384
      %v2087 = vld [vmem:[%s2086] sm:$0xf]
      %v2088 = vld [vmem:[%s2086 + $0x4] sm:$0xf]
      %v2089 = vld [vmem:[%s2086 + $0x8] sm:$0xf]
      %v2090 = vld [vmem:[%s2086 + $0xc] sm:$0xf]
      %v2091 = vld [vmem:[%s2086 + $0x10] sm:$0xf]
      %v2092 = vld [vmem:[%s2086 + $0x14] sm:$0xf]
      %v2093 = vld [vmem:[%s2086 + $0x18] sm:$0xf]
      %v2094 = vld [vmem:[%s2086 + $0x1c] sm:$0xf]
      %v2095 = vld [vmem:[%s2086 + $0x20] sm:$0xf]
      %v2096 = vld [vmem:[%s2086 + $0x24] sm:$0xf]
      %v2097 = vld [vmem:[%s2086 + $0x28] sm:$0xf]
      %v2098 = vld [vmem:[%s2086 + $0x2c] sm:$0xf]
      %v2115 = vunpack.c.l.b16 %v2069
      %v2116 = vunpack.c.l.b16 %v2070
      %v2117 = vunpack.c.l.b16 %v2071
      %v2118 = vunpack.c.l.b16 %v2072
      %v2119 = vunpack.c.l.b16 %v2073
      %v2120 = vunpack.c.l.b16 %v2074
      %v2121 = vunpack.c.l.b16 %v2075
      %v2122 = vunpack.c.l.b16 %v2076
      %v2123 = vunpack.c.l.b16 %v2077
      %v2124 = vunpack.c.l.b16 %v2078
      %v2125 = vunpack.c.l.b16 %v2079
      %v2126 = vunpack.c.l.b16 %v2080
      %v2127 = vunpack.c.l.b16 %v2081
      %v2128 = vunpack.c.l.b16 %v2082
      %v2129 = vunpack.c.l.b16 %v2083
      %v2130 = vunpack.c.l.b16 %v2084
      %v2131 = vpack.c.b16 %v2116, %v2115
      %v2132 = vpack.c.b16 %v2118, %v2117
      %v2133 = vpack.c.b16 %v2120, %v2119
      %v2134 = vpack.c.b16 %v2122, %v2121
      %v2135 = vpack.c.b16 %v2124, %v2123
      %v2136 = vpack.c.b16 %v2126, %v2125
      %v2137 = vpack.c.b16 %v2128, %v2127
      %v2138 = vpack.c.b16 %v2130, %v2129
      %v2151 = vunpack.c.l.b16 %v2087
      %v2152 = vunpack.c.l.b16 %v2088
      %v2153 = vunpack.c.l.b16 %v2089
      %v2154 = vunpack.c.l.b16 %v2090
      %v2155 = vunpack.c.l.b16 %v2091
      %v2156 = vunpack.c.l.b16 %v2092
      %v2157 = vunpack.c.l.b16 %v2093
      %v2158 = vunpack.c.l.b16 %v2094
      %v2159 = vunpack.c.l.b16 %v2095
      %v2160 = vunpack.c.l.b16 %v2096
      %v2161 = vunpack.c.l.b16 %v2097
      %v2162 = vunpack.c.l.b16 %v2098
      %v2163 = vpack.c.b16 %v2152, %v2151
      %v2164 = vpack.c.b16 %v2154, %v2153
      %v2165 = vpack.c.b16 %v2156, %v2155
      %v2166 = vpack.c.b16 %v2158, %v2157
      %v2167 = vpack.c.b16 %v2160, %v2159
      %v2168 = vpack.c.b16 %v2162, %v2161
      %v2176 = vsel %vm442, %v2131, 0
      %v2179 = vsel %vm442, %v2132, 0
      %v2182 = vsel %vm442, %v2133, 0
      %v2185 = vsel %vm442, %v2134, 0
      %v2188 = vsel %vm442, %v2135, 0
      %v2191 = vsel %vm442, %v2136, 0
      %v2194 = vsel %vm442, %v2137, 0
      %v2197 = vsel %vm442, %v2138, 0
      %2199 = vmatprep.subr.bf16.mxu0 0
      %2200 = vmatpush1.bf16.msra.mxu0 %v2163
      %2201 = vmatprep.subr.bf16.mxu0 0
      %2202 = vmatpush1.bf16.msra.mxu0 %v2164
      %2203 = vmatprep.subr.bf16.mxu0 0
      %2204 = vmatpush1.bf16.msra.mxu0 %v2165
      %2205 = vmatprep.subr.bf16.mxu0 0
      %2206 = vmatpush1.bf16.msra.mxu0 %v2166
      %2207 = vmatprep.subr.bf16.mxu0 0
      %2208 = vmatpush1.bf16.msra.mxu0 %v2167
      %2209 = vmatprep.subr.bf16.mxu0 0
      %2210 = vmatpush1.bf16.msra.mxu0 %v2168
      %2211 = vmatprep.subr.bf16.mxu0 0
      %2212 = vmatpush1.bf16.msra.mxu0 0
      %2213 = vmatprep.subr.bf16.mxu0 0
      %2214 = vmatpush1.bf16.msra.mxu0 0
      %2215 = vmatprep.subr.bf16.mxu0 0
      %2216 = vmatpush1.bf16.msra.mxu0 0
      %2217 = vmatprep.subr.bf16.mxu0 0
      %2218 = vmatpush1.bf16.msra.mxu0 0
      %2219 = vmatprep.subr.bf16.mxu0 0
      %2220 = vmatpush1.bf16.msra.mxu0 0
      %2221 = vmatprep.subr.bf16.mxu0 0
      %2222 = vmatpush1.bf16.msra.mxu0 0
      %2223 = vmatprep.subr.bf16.mxu0 0
      %2224 = vmatpush1.bf16.msra.mxu0 0
      %2225 = vmatprep.subr.bf16.mxu0 0
      %2226 = vmatpush1.bf16.msra.mxu0 0
      %2227 = vmatprep.subr.bf16.mxu0 0
      %2228 = vmatpush1.bf16.msra.mxu0 0
      %2229 = vmatprep.subr.bf16.mxu0 0
      %2230 = vmatpush1.bf16.msra.mxu0 0
      %2231 = vmatprep.mubr.bf16.mxu0 0
      %2232 = vmatmul.mubr.bf16.gmra.mrb[0].mxu0 %v2176
      %v2233 = vpop.f32.mrb[0].mxu0
      %v2234 = vadd.f32 0.0, %v2233
      %v2235 = vpop.f32.mrb[0].mxu0
      %v2236 = vpop.f32.mrb[0].mxu0
      %v2237 = vadd.f32 0.0, %v2236
      %v2238 = vpop.f32.mrb[0].mxu0
      %2239 = vmatprep.mubr.bf16.mxu0 0
      %2240 = vmatmul.mubr.bf16.gmra.mrb[0].mxu0 %v2179
      %v2241 = vpop.f32.mrb[0].mxu0
      %v2242 = vadd.f32 0.0, %v2241
      %v2243 = vpop.f32.mrb[0].mxu0
      %v2244 = vpop.f32.mrb[0].mxu0
      %v2245 = vadd.f32 0.0, %v2244
      %v2246 = vpop.f32.mrb[0].mxu0
      %2247 = vmatprep.mubr.bf16.mxu0 0
      %2248 = vmatmul.mubr.bf16.gmra.mrb[0].mxu0 %v2182
      %v2249 = vpop.f32.mrb[0].mxu0
      %v2250 = vadd.f32 0.0, %v2249
      %v2251 = vpop.f32.mrb[0].mxu0
      %v2252 = vpop.f32.mrb[0].mxu0
      %v2253 = vadd.f32 0.0, %v2252
      %v2254 = vpop.f32.mrb[0].mxu0
      %2255 = vmatprep.mubr.bf16.mxu0 0
      %2256 = vmatmul.mubr.bf16.gmra.mrb[0].mxu0 %v2185
      %v2257 = vpop.f32.mrb[0].mxu0
      %v2258 = vadd.f32 0.0, %v2257
      %v2259 = vpop.f32.mrb[0].mxu0
      %v2260 = vpop.f32.mrb[0].mxu0
      %v2261 = vadd.f32 0.0, %v2260
      %v2262 = vpop.f32.mrb[0].mxu0
      %2263 = vmatprep.mubr.bf16.mxu0 0
      %2264 = vmatmul.mubr.bf16.gmra.mrb[0].mxu0 %v2188
      %v2265 = vpop.f32.mrb[0].mxu0
      %v2266 = vadd.f32 0.0, %v2265
      %v2267 = vpop.f32.mrb[0].mxu0
      %v2268 = vpop.f32.mrb[0].mxu0
      %v2269 = vadd.f32 0.0, %v2268
      %v2270 = vpop.f32.mrb[0].mxu0
      %2271 = vmatprep.mubr.bf16.mxu0 0
      %2272 = vmatmul.mubr.bf16.gmra.mrb[0].mxu0 %v2191
      %v2273 = vpop.f32.mrb[0].mxu0
      %v2274 = vadd.f32 0.0, %v2273
      %v2275 = vpop.f32.mrb[0].mxu0
      %v2276 = vpop.f32.mrb[0].mxu0
      %v2277 = vadd.f32 0.0, %v2276
      %v2278 = vpop.f32.mrb[0].mxu0
      %2279 = vmatprep.mubr.bf16.mxu0 0
      %2280 = vmatmul.mubr.bf16.gmra.mrb[0].mxu0 %v2194
      %v2281 = vpop.f32.mrb[0].mxu0
      %v2282 = vadd.f32 0.0, %v2281
      %v2283 = vpop.f32.mrb[0].mxu0
      %v2284 = vpop.f32.mrb[0].mxu0
      %v2285 = vadd.f32 0.0, %v2284
      %v2286 = vpop.f32.mrb[0].mxu0
      %2287 = vmatprep.mubr.bf16.mxu0 0
      %2288 = vmatmul.mubr.bf16.gmra.mrb[0].mxu0 %v2197
      %v2289 = vpop.f32.mrb[0].mxu0
      %v2290 = vadd.f32 0.0, %v2289
      %v2291 = vpop.f32.mrb[0].mxu0
      %v2292 = vpop.f32.mrb[0].mxu0
      %v2293 = vadd.f32 0.0, %v2292
      %v2294 = vpop.f32.mrb[0].mxu0
      %2295 = vdwg.mxu0
      %v2296 = vadd.f32 %v2048, %v2234
      %v2297 = vadd.f32 %v2049, %v2237
      %v2298 = vadd.f32 %v2050, %v2242
      %v2299 = vadd.f32 %v2051, %v2245
      %v2300 = vadd.f32 %v2052, %v2250
      %v2301 = vadd.f32 %v2053, %v2253
      %v2302 = vadd.f32 %v2054, %v2258
      %v2303 = vadd.f32 %v2055, %v2261
      %v2304 = vadd.f32 %v2056, %v2266
      %v2305 = vadd.f32 %v2057, %v2269
      %v2306 = vadd.f32 %v2058, %v2274
      %v2307 = vadd.f32 %v2059, %v2277
      %v2308 = vadd.f32 %v2060, %v2282
      %v2309 = vadd.f32 %v2061, %v2285
      %v2310 = vadd.f32 %v2062, %v2290
      %v2311 = vadd.f32 %v2063, %v2293
      %s2312 = scalar_lea.vmem %s227, 432
      %v2313 = vld [vmem:[%s2312] sm:$0xf]
      %v2314 = vld [vmem:[%s2312 + $0x4] sm:$0xf]
      %v2315 = vld [vmem:[%s2312 + $0x8] sm:$0xf]
      %v2316 = vld [vmem:[%s2312 + $0xc] sm:$0xf]
      %v2317 = vld [vmem:[%s2312 + $0x10] sm:$0xf]
      %v2318 = vld [vmem:[%s2312 + $0x14] sm:$0xf]
      %v2319 = vld [vmem:[%s2312 + $0x18] sm:$0xf]
      %v2320 = vld [vmem:[%s2312 + $0x1c] sm:$0xf]
      %v2321 = vld [vmem:[%s2312 + $0x20] sm:$0xf]
      %v2322 = vld [vmem:[%s2312 + $0x24] sm:$0xf]
      %v2323 = vld [vmem:[%s2312 + $0x28] sm:$0xf]
      %v2324 = vld [vmem:[%s2312 + $0x2c] sm:$0xf]
      %v2326 = vunpack.c.l.b16 %v2085
      %v2327 = vpack.c.b16 %v2326, %v2326
      %v2328 = vshrl.u32 %v2131, 16
      %v2330 = vshll.u32 %v2131, 16
      %v2332 = vrot.slane %v2330, 1
      %v2333 = vor.u32 %v2328, %v2332
      %v2334 = vshll.u32 %v2132, 16
      %v2336 = vrot.slane %v2334, 1
      %v2337 = vsel %vm337, %v2333, %v2336
      %v2338 = vshrl.u32 %v2132, 16
      %v2340 = vor.u32 %v2338, %v2336
      %v2341 = vshll.u32 %v2133, 16
      %v2343 = vrot.slane %v2341, 1
      %v2344 = vsel %vm337, %v2340, %v2343
      %v2345 = vshrl.u32 %v2133, 16
      %v2347 = vor.u32 %v2345, %v2343
      %v2348 = vshll.u32 %v2134, 16
      %v2350 = vrot.slane %v2348, 1
      %v2351 = vsel %vm337, %v2347, %v2350
      %v2352 = vshrl.u32 %v2134, 16
      %v2354 = vor.u32 %v2352, %v2350
      %v2355 = vshll.u32 %v2135, 16
      %v2357 = vrot.slane %v2355, 1
      %v2358 = vsel %vm337, %v2354, %v2357
      %v2359 = vshrl.u32 %v2135, 16
      %v2361 = vor.u32 %v2359, %v2357
      %v2362 = vshll.u32 %v2136, 16
      %v2364 = vrot.slane %v2362, 1
      %v2365 = vsel %vm337, %v2361, %v2364
      %v2366 = vshrl.u32 %v2136, 16
      %v2368 = vor.u32 %v2366, %v2364
      %v2369 = vshll.u32 %v2137, 16
      %v2371 = vrot.slane %v2369, 1
      %v2372 = vsel %vm337, %v2368, %v2371
      %v2373 = vshrl.u32 %v2137, 16
      %v2375 = vor.u32 %v2373, %v2371
      %v2376 = vshll.u32 %v2138, 16
      %v2378 = vrot.slane %v2376, 1
      %v2379 = vsel %vm337, %v2375, %v2378
      %v2380 = vshrl.u32 %v2138, 16
      %v2382 = vor.u32 %v2380, %v2378
      %v2384 = vshll.u32 %v2327, 16
      %v2386 = vrot.slane %v2384, 1
      %v2387 = vsel %vm337, %v2382, %v2386
      %v2400 = vunpack.c.l.b16 %v2313
      %v2401 = vunpack.c.l.b16 %v2314
      %v2402 = vunpack.c.l.b16 %v2315
      %v2403 = vunpack.c.l.b16 %v2316
      %v2404 = vunpack.c.l.b16 %v2317
      %v2405 = vunpack.c.l.b16 %v2318
      %v2406 = vunpack.c.l.b16 %v2319
      %v2407 = vunpack.c.l.b16 %v2320
      %v2408 = vunpack.c.l.b16 %v2321
      %v2409 = vunpack.c.l.b16 %v2322
      %v2410 = vunpack.c.l.b16 %v2323
      %v2411 = vunpack.c.l.b16 %v2324
      %v2412 = vpack.c.b16 %v2401, %v2400
      %v2413 = vpack.c.b16 %v2403, %v2402
      %v2414 = vpack.c.b16 %v2405, %v2404
      %v2415 = vpack.c.b16 %v2407, %v2406
      %v2416 = vpack.c.b16 %v2409, %v2408
      %v2417 = vpack.c.b16 %v2411, %v2410
      %v2425 = vsel %vm442, %v2337, 0
      %v2428 = vsel %vm442, %v2344, 0
      %v2431 = vsel %vm442, %v2351, 0
      %v2434 = vsel %vm442, %v2358, 0
      %v2437 = vsel %vm442, %v2365, 0
      %v2440 = vsel %vm442, %v2372, 0
      %v2443 = vsel %vm442, %v2379, 0
      %v2446 = vsel %vm442, %v2387, 0
      %2448 = vmatprep.subr.bf16.mxu0 0
      %2449 = vmatpush1.bf16.msra.mxu0 %v2412
      %2450 = vmatprep.subr.bf16.mxu0 0
      %2451 = vmatpush1.bf16.msra.mxu0 %v2413
      %2452 = vmatprep.subr.bf16.mxu0 0
      %2453 = vmatpush1.bf16.msra.mxu0 %v2414
      %2454 = vmatprep.subr.bf16.mxu0 0
      %2455 = vmatpush1.bf16.msra.mxu0 %v2415
      %2456 = vmatprep.subr.bf16.mxu0 0
      %2457 = vmatpush1.bf16.msra.mxu0 %v2416
      %2458 = vmatprep.subr.bf16.mxu0 0
      %2459 = vmatpush1.bf16.msra.mxu0 %v2417
      %2460 = vmatprep.subr.bf16.mxu0 0
      %2461 = vmatpush1.bf16.msra.mxu0 0
      %2462 = vmatprep.subr.bf16.mxu0 0
      %2463 = vmatpush1.bf16.msra.mxu0 0
      %2464 = vmatprep.subr.bf16.mxu0 0
      %2465 = vmatpush1.bf16.msra.mxu0 0
      %2466 = vmatprep.subr.bf16.mxu0 0
      %2467 = vmatpush1.bf16.msra.mxu0 0
      %2468 = vmatprep.subr.bf16.mxu0 0
      %2469 = vmatpush1.bf16.msra.mxu0 0
      %2470 = vmatprep.subr.bf16.mxu0 0
      %2471 = vmatpush1.bf16.msra.mxu0 0
      %2472 = vmatprep.subr.bf16.mxu0 0
      %2473 = vmatpush1.bf16.msra.mxu0 0
      %2474 = vmatprep.subr.bf16.mxu0 0
      %2475 = vmatpush1.bf16.msra.mxu0 0
      %2476 = vmatprep.subr.bf16.mxu0 0
      %2477 = vmatpush1.bf16.msra.mxu0 0
      %2478 = vmatprep.subr.bf16.mxu0 0
      %2479 = vmatpush1.bf16.msra.mxu0 0
      %2480 = vmatprep.mubr.bf16.mxu0 0
      %2481 = vmatmul.mubr.bf16.gmra.mrb[0].mxu0 %v2425
      %v2482 = vpop.f32.mrb[0].mxu0
      %v2483 = vadd.f32 0.0, %v2482
      %v2484 = vpop.f32.mrb[0].mxu0
      %v2485 = vpop.f32.mrb[0].mxu0
      %v2486 = vadd.f32 0.0, %v2485
      %v2487 = vpop.f32.mrb[0].mxu0
      %2488 = vmatprep.mubr.bf16.mxu0 0
      %2489 = vmatmul.mubr.bf16.gmra.mrb[0].mxu0 %v2428
      %v2490 = vpop.f32.mrb[0].mxu0
      %v2491 = vadd.f32 0.0, %v2490
      %v2492 = vpop.f32.mrb[0].mxu0
      %v2493 = vpop.f32.mrb[0].mxu0
      %v2494 = vadd.f32 0.0, %v2493
      %v2495 = vpop.f32.mrb[0].mxu0
      %2496 = vmatprep.mubr.bf16.mxu0 0
      %2497 = vmatmul.mubr.bf16.gmra.mrb[0].mxu0 %v2431
      %v2498 = vpop.f32.mrb[0].mxu0
      %v2499 = vadd.f32 0.0, %v2498
      %v2500 = vpop.f32.mrb[0].mxu0
      %v2501 = vpop.f32.mrb[0].mxu0
      %v2502 = vadd.f32 0.0, %v2501
      %v2503 = vpop.f32.mrb[0].mxu0
      %2504 = vmatprep.mubr.bf16.mxu0 0
      %2505 = vmatmul.mubr.bf16.gmra.mrb[0].mxu0 %v2434
      %v2506 = vpop.f32.mrb[0].mxu0
      %v2507 = vadd.f32 0.0, %v2506
      %v2508 = vpop.f32.mrb[0].mxu0
      %v2509 = vpop.f32.mrb[0].mxu0
      %v2510 = vadd.f32 0.0, %v2509
      %v2511 = vpop.f32.mrb[0].mxu0
      %2512 = vmatprep.mubr.bf16.mxu0 0
      %2513 = vmatmul.mubr.bf16.gmra.mrb[0].mxu0 %v2437
      %v2514 = vpop.f32.mrb[0].mxu0
      %v2515 = vadd.f32 0.0, %v2514
      %v2516 = vpop.f32.mrb[0].mxu0
      %v2517 = vpop.f32.mrb[0].mxu0
      %v2518 = vadd.f32 0.0, %v2517
      %v2519 = vpop.f32.mrb[0].mxu0
      %2520 = vmatprep.mubr.bf16.mxu0 0
      %2521 = vmatmul.mubr.bf16.gmra.mrb[0].mxu0 %v2440
      %v2522 = vpop.f32.mrb[0].mxu0
      %v2523 = vadd.f32 0.0, %v2522
      %v2524 = vpop.f32.mrb[0].mxu0
      %v2525 = vpop.f32.mrb[0].mxu0
      %v2526 = vadd.f32 0.0, %v2525
      %v2527 = vpop.f32.mrb[0].mxu0
      %2528 = vmatprep.mubr.bf16.mxu0 0
      %2529 = vmatmul.mubr.bf16.gmra.mrb[0].mxu0 %v2443
      %v2530 = vpop.f32.mrb[0].mxu0
      %v2531 = vadd.f32 0.0, %v2530
      %v2532 = vpop.f32.mrb[0].mxu0
      %v2533 = vpop.f32.mrb[0].mxu0
      %v2534 = vadd.f32 0.0, %v2533
      %v2535 = vpop.f32.mrb[0].mxu0
      %2536 = vmatprep.mubr.bf16.mxu0 0
      %2537 = vmatmul.mubr.bf16.gmra.mrb[0].mxu0 %v2446
      %v2538 = vpop.f32.mrb[0].mxu0
      %v2539 = vadd.f32 0.0, %v2538
      %v2540 = vpop.f32.mrb[0].mxu0
      %v2541 = vpop.f32.mrb[0].mxu0
      %v2542 = vadd.f32 0.0, %v2541
      %v2543 = vpop.f32.mrb[0].mxu0
      %2544 = vdwg.mxu0
      %v2545 = vadd.f32 %v2296, %v2483
      %v2546 = vadd.f32 %v2297, %v2486
      %v2547 = vadd.f32 %v2298, %v2491
      %v2548 = vadd.f32 %v2299, %v2494
      %v2549 = vadd.f32 %v2300, %v2499
      %v2550 = vadd.f32 %v2301, %v2502
      %v2551 = vadd.f32 %v2302, %v2507
      %v2552 = vadd.f32 %v2303, %v2510
      %v2553 = vadd.f32 %v2304, %v2515
      %v2554 = vadd.f32 %v2305, %v2518
      %v2555 = vadd.f32 %v2306, %v2523
      %v2556 = vadd.f32 %v2307, %v2526
      %v2557 = vadd.f32 %v2308, %v2531
      %v2558 = vadd.f32 %v2309, %v2534
      %v2559 = vadd.f32 %v2310, %v2539
      %v2560 = vadd.f32 %v2311, %v2542
      %s2561 = scalar_lea.vmem %s227, 480
      %v2562 = vld [vmem:[%s2561] sm:$0xf]
      %v2563 = vld [vmem:[%s2561 + $0x4] sm:$0xf]
      %v2564 = vld [vmem:[%s2561 + $0x8] sm:$0xf]
      %v2565 = vld [vmem:[%s2561 + $0xc] sm:$0xf]
      %v2566 = vld [vmem:[%s2561 + $0x10] sm:$0xf]
      %v2567 = vld [vmem:[%s2561 + $0x14] sm:$0xf]
      %v2568 = vld [vmem:[%s2561 + $0x18] sm:$0xf]
      %v2569 = vld [vmem:[%s2561 + $0x1c] sm:$0xf]
      %v2570 = vld [vmem:[%s2561 + $0x20] sm:$0xf]
      %v2571 = vld [vmem:[%s2561 + $0x24] sm:$0xf]
      %v2572 = vld [vmem:[%s2561 + $0x28] sm:$0xf]
      %v2573 = vld [vmem:[%s2561 + $0x2c] sm:$0xf]
      %v2574 = vrot.slane %v2131, 1
      %v2575 = vrot.slane %v2132, 1
      %v2576 = vsel %vm726, %v2574, %v2575
      %v2577 = vrot.slane %v2133, 1
      %v2578 = vsel %vm726, %v2575, %v2577
      %v2579 = vrot.slane %v2134, 1
      %v2580 = vsel %vm726, %v2577, %v2579
      %v2581 = vrot.slane %v2135, 1
      %v2582 = vsel %vm726, %v2579, %v2581
      %v2583 = vrot.slane %v2136, 1
      %v2584 = vsel %vm726, %v2581, %v2583
      %v2585 = vrot.slane %v2137, 1
      %v2586 = vsel %vm726, %v2583, %v2585
      %v2587 = vrot.slane %v2138, 1
      %v2588 = vsel %vm726, %v2585, %v2587
      %v2589 = vrot.slane %v2327, 1
      %v2590 = vsel %vm726, %v2587, %v2589
      %v2603 = vunpack.c.l.b16 %v2562
      %v2604 = vunpack.c.l.b16 %v2563
      %v2605 = vunpack.c.l.b16 %v2564
      %v2606 = vunpack.c.l.b16 %v2565
      %v2607 = vunpack.c.l.b16 %v2566
      %v2608 = vunpack.c.l.b16 %v2567
      %v2609 = vunpack.c.l.b16 %v2568
      %v2610 = vunpack.c.l.b16 %v2569
      %v2611 = vunpack.c.l.b16 %v2570
      %v2612 = vunpack.c.l.b16 %v2571
      %v2613 = vunpack.c.l.b16 %v2572
      %v2614 = vunpack.c.l.b16 %v2573
      %v2615 = vpack.c.b16 %v2604, %v2603
      %v2616 = vpack.c.b16 %v2606, %v2605
      %v2617 = vpack.c.b16 %v2608, %v2607
      %v2618 = vpack.c.b16 %v2610, %v2609
      %v2619 = vpack.c.b16 %v2612, %v2611
      %v2620 = vpack.c.b16 %v2614, %v2613
      %v2628 = vsel %vm442, %v2576, 0
      %v2631 = vsel %vm442, %v2578, 0
      %v2634 = vsel %vm442, %v2580, 0
      %v2637 = vsel %vm442, %v2582, 0
      %v2640 = vsel %vm442, %v2584, 0
      %v2643 = vsel %vm442, %v2586, 0
      %v2646 = vsel %vm442, %v2588, 0
      %v2649 = vsel %vm442, %v2590, 0
      %2651 = vmatprep.subr.bf16.mxu0 0
      %2652 = vmatpush1.bf16.msra.mxu0 %v2615
      %2653 = vmatprep.subr.bf16.mxu0 0
      %2654 = vmatpush1.bf16.msra.mxu0 %v2616
      %2655 = vmatprep.subr.bf16.mxu0 0
      %2656 = vmatpush1.bf16.msra.mxu0 %v2617
      %2657 = vmatprep.subr.bf16.mxu0 0
      %2658 = vmatpush1.bf16.msra.mxu0 %v2618
      %2659 = vmatprep.subr.bf16.mxu0 0
      %2660 = vmatpush1.bf16.msra.mxu0 %v2619
      %2661 = vmatprep.subr.bf16.mxu0 0
      %2662 = vmatpush1.bf16.msra.mxu0 %v2620
      %2663 = vmatprep.subr.bf16.mxu0 0
      %2664 = vmatpush1.bf16.msra.mxu0 0
      %2665 = vmatprep.subr.bf16.mxu0 0
      %2666 = vmatpush1.bf16.msra.mxu0 0
      %2667 = vmatprep.subr.bf16.mxu0 0
      %2668 = vmatpush1.bf16.msra.mxu0 0
      %2669 = vmatprep.subr.bf16.mxu0 0
      %2670 = vmatpush1.bf16.msra.mxu0 0
      %2671 = vmatprep.subr.bf16.mxu0 0
      %2672 = vmatpush1.bf16.msra.mxu0 0
      %2673 = vmatprep.subr.bf16.mxu0 0
      %2674 = vmatpush1.bf16.msra.mxu0 0
      %2675 = vmatprep.subr.bf16.mxu0 0
      %2676 = vmatpush1.bf16.msra.mxu0 0
      %2677 = vmatprep.subr.bf16.mxu0 0
      %2678 = vmatpush1.bf16.msra.mxu0 0
      %2679 = vmatprep.subr.bf16.mxu0 0
      %2680 = vmatpush1.bf16.msra.mxu0 0
      %2681 = vmatprep.subr.bf16.mxu0 0
      %2682 = vmatpush1.bf16.msra.mxu0 0
      %2683 = vmatprep.mubr.bf16.mxu0 0
      %2684 = vmatmul.mubr.bf16.gmra.mrb[0].mxu0 %v2628
      %v2685 = vpop.f32.mrb[0].mxu0
      %v2686 = vadd.f32 0.0, %v2685
      %v2687 = vpop.f32.mrb[0].mxu0
      %v2688 = vpop.f32.mrb[0].mxu0
      %v2689 = vadd.f32 0.0, %v2688
      %v2690 = vpop.f32.mrb[0].mxu0
      %2691 = vmatprep.mubr.bf16.mxu0 0
      %2692 = vmatmul.mubr.bf16.gmra.mrb[0].mxu0 %v2631
      %v2693 = vpop.f32.mrb[0].mxu0
      %v2694 = vadd.f32 0.0, %v2693
      %v2695 = vpop.f32.mrb[0].mxu0
      %v2696 = vpop.f32.mrb[0].mxu0
      %v2697 = vadd.f32 0.0, %v2696
      %v2698 = vpop.f32.mrb[0].mxu0
      %2699 = vmatprep.mubr.bf16.mxu0 0
      %2700 = vmatmul.mubr.bf16.gmra.mrb[0].mxu0 %v2634
      %v2701 = vpop.f32.mrb[0].mxu0
      %v2702 = vadd.f32 0.0, %v2701
      %v2703 = vpop.f32.mrb[0].mxu0
      %v2704 = vpop.f32.mrb[0].mxu0
      %v2705 = vadd.f32 0.0, %v2704
      %v2706 = vpop.f32.mrb[0].mxu0
      %2707 = vmatprep.mubr.bf16.mxu0 0
      %2708 = vmatmul.mubr.bf16.gmra.mrb[0].mxu0 %v2637
      %v2709 = vpop.f32.mrb[0].mxu0
      %v2710 = vadd.f32 0.0, %v2709
      %v2711 = vpop.f32.mrb[0].mxu0
      %v2712 = vpop.f32.mrb[0].mxu0
      %v2713 = vadd.f32 0.0, %v2712
      %v2714 = vpop.f32.mrb[0].mxu0
      %2715 = vmatprep.mubr.bf16.mxu0 0
      %2716 = vmatmul.mubr.bf16.gmra.mrb[0].mxu0 %v2640
      %v2717 = vpop.f32.mrb[0].mxu0
      %v2718 = vadd.f32 0.0, %v2717
      %v2719 = vpop.f32.mrb[0].mxu0
      %v2720 = vpop.f32.mrb[0].mxu0
      %v2721 = vadd.f32 0.0, %v2720
      %v2722 = vpop.f32.mrb[0].mxu0
      %2723 = vmatprep.mubr.bf16.mxu0 0
      %2724 = vmatmul.mubr.bf16.gmra.mrb[0].mxu0 %v2643
      %v2725 = vpop.f32.mrb[0].mxu0
      %v2726 = vadd.f32 0.0, %v2725
      %v2727 = vpop.f32.mrb[0].mxu0
      %v2728 = vpop.f32.mrb[0].mxu0
      %v2729 = vadd.f32 0.0, %v2728
      %v2730 = vpop.f32.mrb[0].mxu0
      %2731 = vmatprep.mubr.bf16.mxu0 0
      %2732 = vmatmul.mubr.bf16.gmra.mrb[0].mxu0 %v2646
      %v2733 = vpop.f32.mrb[0].mxu0
      %v2734 = vadd.f32 0.0, %v2733
      %v2735 = vpop.f32.mrb[0].mxu0
      %v2736 = vpop.f32.mrb[0].mxu0
      %v2737 = vadd.f32 0.0, %v2736
      %v2738 = vpop.f32.mrb[0].mxu0
      %2739 = vmatprep.mubr.bf16.mxu0 0
      %2740 = vmatmul.mubr.bf16.gmra.mrb[0].mxu0 %v2649
      %v2741 = vpop.f32.mrb[0].mxu0
      %v2742 = vadd.f32 0.0, %v2741
      %v2743 = vpop.f32.mrb[0].mxu0
      %v2744 = vpop.f32.mrb[0].mxu0
      %v2745 = vadd.f32 0.0, %v2744
      %v2746 = vpop.f32.mrb[0].mxu0
      %2747 = vdwg.mxu0
      %v2748 = vadd.f32 %v2545, %v2686
      %v2749 = vadd.f32 %v2546, %v2689
      %v2750 = vadd.f32 %v2547, %v2694
      %v2751 = vadd.f32 %v2548, %v2697
      %v2752 = vadd.f32 %v2549, %v2702
      %v2753 = vadd.f32 %v2550, %v2705
      %v2754 = vadd.f32 %v2551, %v2710
      %v2755 = vadd.f32 %v2552, %v2713
      %v2756 = vadd.f32 %v2553, %v2718
      %v2757 = vadd.f32 %v2554, %v2721
      %v2758 = vadd.f32 %v2555, %v2726
      %v2759 = vadd.f32 %v2556, %v2729
      %v2760 = vadd.f32 %v2557, %v2734
      %v2761 = vadd.f32 %v2558, %v2737
      %v2762 = vadd.f32 %v2559, %v2742
      %v2763 = vadd.f32 %v2560, %v2745
      %s2764 = scalar_lea.vmem %s227, 528
      %v2765 = vld [vmem:[%s2764] sm:$0xf]
      %v2766 = vld [vmem:[%s2764 + $0x4] sm:$0xf]
      %v2767 = vld [vmem:[%s2764 + $0x8] sm:$0xf]
      %v2768 = vld [vmem:[%s2764 + $0xc] sm:$0xf]
      %v2769 = vld [vmem:[%s2764 + $0x10] sm:$0xf]
      %v2770 = vld [vmem:[%s2764 + $0x14] sm:$0xf]
      %v2771 = vld [vmem:[%s2764 + $0x18] sm:$0xf]
      %v2772 = vld [vmem:[%s2764 + $0x1c] sm:$0xf]
      %v2773 = vld [vmem:[%s2764 + $0x20] sm:$0xf]
      %v2774 = vld [vmem:[%s2764 + $0x24] sm:$0xf]
      %v2775 = vld [vmem:[%s2764 + $0x28] sm:$0xf]
      %v2776 = vld [vmem:[%s2764 + $0x2c] sm:$0xf]
      %v2777 = vrot.slane %v2328, 1
      %v2778 = vrot.slane %v2330, 2
      %v2779 = vor.u32 %v2777, %v2778
      %v2780 = vrot.slane %v2338, 1
      %v2781 = vrot.slane %v2334, 2
      %v2782 = vor.u32 %v2780, %v2781
      %v2783 = vsel %vm930, %v2779, %v2782
      %v2784 = vrot.slane %v2345, 1
      %v2785 = vrot.slane %v2341, 2
      %v2786 = vor.u32 %v2784, %v2785
      %v2787 = vsel %vm930, %v2782, %v2786
      %v2788 = vrot.slane %v2352, 1
      %v2789 = vrot.slane %v2348, 2
      %v2790 = vor.u32 %v2788, %v2789
      %v2791 = vsel %vm930, %v2786, %v2790
      %v2792 = vrot.slane %v2359, 1
      %v2793 = vrot.slane %v2355, 2
      %v2794 = vor.u32 %v2792, %v2793
      %v2795 = vsel %vm930, %v2790, %v2794
      %v2796 = vrot.slane %v2366, 1
      %v2797 = vrot.slane %v2362, 2
      %v2798 = vor.u32 %v2796, %v2797
      %v2799 = vsel %vm930, %v2794, %v2798
      %v2800 = vrot.slane %v2373, 1
      %v2801 = vrot.slane %v2369, 2
      %v2802 = vor.u32 %v2800, %v2801
      %v2803 = vsel %vm930, %v2798, %v2802
      %v2804 = vrot.slane %v2380, 1
      %v2805 = vrot.slane %v2376, 2
      %v2806 = vor.u32 %v2804, %v2805
      %v2807 = vsel %vm930, %v2802, %v2806
      %v2808 = vshrl.u32 %v2327, 16
      %v2810 = vrot.slane %v2808, 1
      %v2811 = vrot.slane %v2384, 2
      %v2812 = vor.u32 %v2810, %v2811
      %v2813 = vsel %vm930, %v2806, %v2812
      %v2826 = vunpack.c.l.b16 %v2765
      %v2827 = vunpack.c.l.b16 %v2766
      %v2828 = vunpack.c.l.b16 %v2767
      %v2829 = vunpack.c.l.b16 %v2768
      %v2830 = vunpack.c.l.b16 %v2769
      %v2831 = vunpack.c.l.b16 %v2770
      %v2832 = vunpack.c.l.b16 %v2771
      %v2833 = vunpack.c.l.b16 %v2772
      %v2834 = vunpack.c.l.b16 %v2773
      %v2835 = vunpack.c.l.b16 %v2774
      %v2836 = vunpack.c.l.b16 %v2775
      %v2837 = vunpack.c.l.b16 %v2776
      %v2838 = vpack.c.b16 %v2827, %v2826
      %v2839 = vpack.c.b16 %v2829, %v2828
      %v2840 = vpack.c.b16 %v2831, %v2830
      %v2841 = vpack.c.b16 %v2833, %v2832
      %v2842 = vpack.c.b16 %v2835, %v2834
      %v2843 = vpack.c.b16 %v2837, %v2836
      %v2851 = vsel %vm442, %v2783, 0
      %v2854 = vsel %vm442, %v2787, 0
      %v2857 = vsel %vm442, %v2791, 0
      %v2860 = vsel %vm442, %v2795, 0
      %v2863 = vsel %vm442, %v2799, 0
      %v2866 = vsel %vm442, %v2803, 0
      %v2869 = vsel %vm442, %v2807, 0
      %v2872 = vsel %vm442, %v2813, 0
      %2874 = vmatprep.subr.bf16.mxu0 0
      %2875 = vmatpush1.bf16.msra.mxu0 %v2838
      %2876 = vmatprep.subr.bf16.mxu0 0
      %2877 = vmatpush1.bf16.msra.mxu0 %v2839
      %2878 = vmatprep.subr.bf16.mxu0 0
      %2879 = vmatpush1.bf16.msra.mxu0 %v2840
      %2880 = vmatprep.subr.bf16.mxu0 0
      %2881 = vmatpush1.bf16.msra.mxu0 %v2841
      %2882 = vmatprep.subr.bf16.mxu0 0
      %2883 = vmatpush1.bf16.msra.mxu0 %v2842
      %2884 = vmatprep.subr.bf16.mxu0 0
      %2885 = vmatpush1.bf16.msra.mxu0 %v2843
      %2886 = vmatprep.subr.bf16.mxu0 0
      %2887 = vmatpush1.bf16.msra.mxu0 0
      %2888 = vmatprep.subr.bf16.mxu0 0
      %2889 = vmatpush1.bf16.msra.mxu0 0
      %2890 = vmatprep.subr.bf16.mxu0 0
      %2891 = vmatpush1.bf16.msra.mxu0 0
      %2892 = vmatprep.subr.bf16.mxu0 0
      %2893 = vmatpush1.bf16.msra.mxu0 0
      %2894 = vmatprep.subr.bf16.mxu0 0
      %2895 = vmatpush1.bf16.msra.mxu0 0
      %2896 = vmatprep.subr.bf16.mxu0 0
      %2897 = vmatpush1.bf16.msra.mxu0 0
      %2898 = vmatprep.subr.bf16.mxu0 0
      %2899 = vmatpush1.bf16.msra.mxu0 0
      %2900 = vmatprep.subr.bf16.mxu0 0
      %2901 = vmatpush1.bf16.msra.mxu0 0
      %2902 = vmatprep.subr.bf16.mxu0 0
      %2903 = vmatpush1.bf16.msra.mxu0 0
      %2904 = vmatprep.subr.bf16.mxu0 0
      %2905 = vmatpush1.bf16.msra.mxu0 0
      %2906 = vmatprep.mubr.bf16.mxu0 0
      %2907 = vmatmul.mubr.bf16.gmra.mrb[0].mxu0 %v2851
      %v2908 = vpop.f32.mrb[0].mxu0
      %v2909 = vadd.f32 0.0, %v2908
      %v2910 = vpop.f32.mrb[0].mxu0
      %v2911 = vpop.f32.mrb[0].mxu0
      %v2912 = vadd.f32 0.0, %v2911
      %v2913 = vpop.f32.mrb[0].mxu0
      %2914 = vmatprep.mubr.bf16.mxu0 0
      %2915 = vmatmul.mubr.bf16.gmra.mrb[0].mxu0 %v2854
      %v2916 = vpop.f32.mrb[0].mxu0
      %v2917 = vadd.f32 0.0, %v2916
      %v2918 = vpop.f32.mrb[0].mxu0
      %v2919 = vpop.f32.mrb[0].mxu0
      %v2920 = vadd.f32 0.0, %v2919
      %v2921 = vpop.f32.mrb[0].mxu0
      %2922 = vmatprep.mubr.bf16.mxu0 0
      %2923 = vmatmul.mubr.bf16.gmra.mrb[0].mxu0 %v2857
      %v2924 = vpop.f32.mrb[0].mxu0
      %v2925 = vadd.f32 0.0, %v2924
      %v2926 = vpop.f32.mrb[0].mxu0
      %v2927 = vpop.f32.mrb[0].mxu0
      %v2928 = vadd.f32 0.0, %v2927
      %v2929 = vpop.f32.mrb[0].mxu0
      %2930 = vmatprep.mubr.bf16.mxu0 0
      %2931 = vmatmul.mubr.bf16.gmra.mrb[0].mxu0 %v2860
      %v2932 = vpop.f32.mrb[0].mxu0
      %v2933 = vadd.f32 0.0, %v2932
      %v2934 = vpop.f32.mrb[0].mxu0
      %v2935 = vpop.f32.mrb[0].mxu0
      %v2936 = vadd.f32 0.0, %v2935
      %v2937 = vpop.f32.mrb[0].mxu0
      %2938 = vmatprep.mubr.bf16.mxu0 0
      %2939 = vmatmul.mubr.bf16.gmra.mrb[0].mxu0 %v2863
      %v2940 = vpop.f32.mrb[0].mxu0
      %v2941 = vadd.f32 0.0, %v2940
      %v2942 = vpop.f32.mrb[0].mxu0
      %v2943 = vpop.f32.mrb[0].mxu0
      %v2944 = vadd.f32 0.0, %v2943
      %v2945 = vpop.f32.mrb[0].mxu0
      %2946 = vmatprep.mubr.bf16.mxu0 0
      %2947 = vmatmul.mubr.bf16.gmra.mrb[0].mxu0 %v2866
      %v2948 = vpop.f32.mrb[0].mxu0
      %v2949 = vadd.f32 0.0, %v2948
      %v2950 = vpop.f32.mrb[0].mxu0
      %v2951 = vpop.f32.mrb[0].mxu0
      %v2952 = vadd.f32 0.0, %v2951
      %v2953 = vpop.f32.mrb[0].mxu0
      %2954 = vmatprep.mubr.bf16.mxu0 0
      %2955 = vmatmul.mubr.bf16.gmra.mrb[0].mxu0 %v2869
      %v2956 = vpop.f32.mrb[0].mxu0
      %v2957 = vadd.f32 0.0, %v2956
      %v2958 = vpop.f32.mrb[0].mxu0
      %v2959 = vpop.f32.mrb[0].mxu0
      %v2960 = vadd.f32 0.0, %v2959
      %v2961 = vpop.f32.mrb[0].mxu0
      %2962 = vmatprep.mubr.bf16.mxu0 0
      %2963 = vmatmul.mubr.bf16.gmra.mrb[0].mxu0 %v2872
      %v2964 = vpop.f32.mrb[0].mxu0
      %v2965 = vadd.f32 0.0, %v2964
      %v2966 = vpop.f32.mrb[0].mxu0
      %v2967 = vpop.f32.mrb[0].mxu0
      %v2968 = vadd.f32 0.0, %v2967
      %v2969 = vpop.f32.mrb[0].mxu0
      %2970 = vdwg.mxu0
      %v2971 = vadd.f32 %v2748, %v2909
      %v2972 = vadd.f32 %v2749, %v2912
      %v2973 = vadd.f32 %v2750, %v2917
      %v2974 = vadd.f32 %v2751, %v2920
      %v2975 = vadd.f32 %v2752, %v2925
      %v2976 = vadd.f32 %v2753, %v2928
      %v2977 = vadd.f32 %v2754, %v2933
      %v2978 = vadd.f32 %v2755, %v2936
      %v2979 = vadd.f32 %v2756, %v2941
      %v2980 = vadd.f32 %v2757, %v2944
      %v2981 = vadd.f32 %v2758, %v2949
      %v2982 = vadd.f32 %v2759, %v2952
      %v2983 = vadd.f32 %v2760, %v2957
      %v2984 = vadd.f32 %v2761, %v2960
      %v2985 = vadd.f32 %v2762, %v2965
      %v2986 = vadd.f32 %v2763, %v2968
      %s2987 = sadd.s32 %s247, 48
      %s2988 = sshra.s32 %s2987, 3
      %s2989 = sand.u32 %s2987, 7
      %s2990 = smul.addr %s2988, 4
      %s2991 = scalar_lea.vmem %s219, %s2990
      %v2992 = vld [vmem:[%s2991] sm:$0xf]
      %v2993 = vld [vmem:[%s2991 + $0x4] sm:$0xf]
      %v2994 = vld [vmem:[%s2991 + $0x8] sm:$0xf]
      %v2995 = vld [vmem:[%s2991 + $0xc] sm:$0xf]
      %v2996 = vld [vmem:[%s2991 + $0x10] sm:$0xf]
      %v2997 = vld [vmem:[%s2991 + $0x14] sm:$0xf]
      %v2998 = vld [vmem:[%s2991 + $0x18] sm:$0xf]
      %v2999 = vld [vmem:[%s2991 + $0x1c] sm:$0xf]
      %v3000 = vld [vmem:[%s2991 + $0x20] sm:$0xf]
      %v3001 = vld [vmem:[%s2991 + $0x24] sm:$0xf]
      %v3002 = vld [vmem:[%s2991 + $0x28] sm:$0xf]
      %v3003 = vld [vmem:[%s2991 + $0x2c] sm:$0xf]
      %v3004 = vld [vmem:[%s2991 + $0x30] sm:$0xf]
      %v3005 = vld [vmem:[%s2991 + $0x34] sm:$0xf]
      %v3006 = vld [vmem:[%s2991 + $0x38] sm:$0xf]
      %v3007 = vld [vmem:[%s2991 + $0x3c] sm:$0xf]
      %v3008 = vld [vmem:[%s2991 + $0x40] sm:$0x3]
      %s3009 = scalar_lea.vmem %s227, 576
      %v3010 = vld [vmem:[%s3009] sm:$0xf]
      %v3011 = vld [vmem:[%s3009 + $0x4] sm:$0xf]
      %v3012 = vld [vmem:[%s3009 + $0x8] sm:$0xf]
      %v3013 = vld [vmem:[%s3009 + $0xc] sm:$0xf]
      %v3014 = vld [vmem:[%s3009 + $0x10] sm:$0xf]
      %v3015 = vld [vmem:[%s3009 + $0x14] sm:$0xf]
      %v3016 = vld [vmem:[%s3009 + $0x18] sm:$0xf]
      %v3017 = vld [vmem:[%s3009 + $0x1c] sm:$0xf]
      %v3018 = vld [vmem:[%s3009 + $0x20] sm:$0xf]
      %v3019 = vld [vmem:[%s3009 + $0x24] sm:$0xf]
      %v3020 = vld [vmem:[%s3009 + $0x28] sm:$0xf]
      %v3021 = vld [vmem:[%s3009 + $0x2c] sm:$0xf]
      %v3038 = vunpack.c.l.b16 %v2992
      %v3039 = vunpack.c.l.b16 %v2993
      %v3040 = vunpack.c.l.b16 %v2994
      %v3041 = vunpack.c.l.b16 %v2995
      %v3042 = vunpack.c.l.b16 %v2996
      %v3043 = vunpack.c.l.b16 %v2997
      %v3044 = vunpack.c.l.b16 %v2998
      %v3045 = vunpack.c.l.b16 %v2999
      %v3046 = vunpack.c.l.b16 %v3000
      %v3047 = vunpack.c.l.b16 %v3001
      %v3048 = vunpack.c.l.b16 %v3002
      %v3049 = vunpack.c.l.b16 %v3003
      %v3050 = vunpack.c.l.b16 %v3004
      %v3051 = vunpack.c.l.b16 %v3005
      %v3052 = vunpack.c.l.b16 %v3006
      %v3053 = vunpack.c.l.b16 %v3007
      %v3054 = vpack.c.b16 %v3039, %v3038
      %v3055 = vpack.c.b16 %v3041, %v3040
      %v3056 = vpack.c.b16 %v3043, %v3042
      %v3057 = vpack.c.b16 %v3045, %v3044
      %v3058 = vpack.c.b16 %v3047, %v3046
      %v3059 = vpack.c.b16 %v3049, %v3048
      %v3060 = vpack.c.b16 %v3051, %v3050
      %v3061 = vpack.c.b16 %v3053, %v3052
      %v3074 = vunpack.c.l.b16 %v3010
      %v3075 = vunpack.c.l.b16 %v3011
      %v3076 = vunpack.c.l.b16 %v3012
      %v3077 = vunpack.c.l.b16 %v3013
      %v3078 = vunpack.c.l.b16 %v3014
      %v3079 = vunpack.c.l.b16 %v3015
      %v3080 = vunpack.c.l.b16 %v3016
      %v3081 = vunpack.c.l.b16 %v3017
      %v3082 = vunpack.c.l.b16 %v3018
      %v3083 = vunpack.c.l.b16 %v3019
      %v3084 = vunpack.c.l.b16 %v3020
      %v3085 = vunpack.c.l.b16 %v3021
      %v3086 = vpack.c.b16 %v3075, %v3074
      %v3087 = vpack.c.b16 %v3077, %v3076
      %v3088 = vpack.c.b16 %v3079, %v3078
      %v3089 = vpack.c.b16 %v3081, %v3080
      %v3090 = vpack.c.b16 %v3083, %v3082
      %v3091 = vpack.c.b16 %v3085, %v3084
      %v3099 = vsel %vm442, %v3054, 0
      %v3102 = vsel %vm442, %v3055, 0
      %v3105 = vsel %vm442, %v3056, 0
      %v3108 = vsel %vm442, %v3057, 0
      %v3111 = vsel %vm442, %v3058, 0
      %v3114 = vsel %vm442, %v3059, 0
      %v3117 = vsel %vm442, %v3060, 0
      %v3120 = vsel %vm442, %v3061, 0
      %3122 = vmatprep.subr.bf16.mxu0 0
      %3123 = vmatpush1.bf16.msra.mxu0 %v3086
      %3124 = vmatprep.subr.bf16.mxu0 0
      %3125 = vmatpush1.bf16.msra.mxu0 %v3087
      %3126 = vmatprep.subr.bf16.mxu0 0
      %3127 = vmatpush1.bf16.msra.mxu0 %v3088
      %3128 = vmatprep.subr.bf16.mxu0 0
      %3129 = vmatpush1.bf16.msra.mxu0 %v3089
      %3130 = vmatprep.subr.bf16.mxu0 0
      %3131 = vmatpush1.bf16.msra.mxu0 %v3090
      %3132 = vmatprep.subr.bf16.mxu0 0
      %3133 = vmatpush1.bf16.msra.mxu0 %v3091
      %3134 = vmatprep.subr.bf16.mxu0 0
      %3135 = vmatpush1.bf16.msra.mxu0 0
      %3136 = vmatprep.subr.bf16.mxu0 0
      %3137 = vmatpush1.bf16.msra.mxu0 0
      %3138 = vmatprep.subr.bf16.mxu0 0
      %3139 = vmatpush1.bf16.msra.mxu0 0
      %3140 = vmatprep.subr.bf16.mxu0 0
      %3141 = vmatpush1.bf16.msra.mxu0 0
      %3142 = vmatprep.subr.bf16.mxu0 0
      %3143 = vmatpush1.bf16.msra.mxu0 0
      %3144 = vmatprep.subr.bf16.mxu0 0
      %3145 = vmatpush1.bf16.msra.mxu0 0
      %3146 = vmatprep.subr.bf16.mxu0 0
      %3147 = vmatpush1.bf16.msra.mxu0 0
      %3148 = vmatprep.subr.bf16.mxu0 0
      %3149 = vmatpush1.bf16.msra.mxu0 0
      %3150 = vmatprep.subr.bf16.mxu0 0
      %3151 = vmatpush1.bf16.msra.mxu0 0
      %3152 = vmatprep.subr.bf16.mxu0 0
      %3153 = vmatpush1.bf16.msra.mxu0 0
      %3154 = vmatprep.mubr.bf16.mxu0 0
      %3155 = vmatmul.mubr.bf16.gmra.mrb[0].mxu0 %v3099
      %v3156 = vpop.f32.mrb[0].mxu0
      %v3157 = vadd.f32 0.0, %v3156
      %v3158 = vpop.f32.mrb[0].mxu0
      %v3159 = vpop.f32.mrb[0].mxu0
      %v3160 = vadd.f32 0.0, %v3159
      %v3161 = vpop.f32.mrb[0].mxu0
      %3162 = vmatprep.mubr.bf16.mxu0 0
      %3163 = vmatmul.mubr.bf16.gmra.mrb[0].mxu0 %v3102
      %v3164 = vpop.f32.mrb[0].mxu0
      %v3165 = vadd.f32 0.0, %v3164
      %v3166 = vpop.f32.mrb[0].mxu0
      %v3167 = vpop.f32.mrb[0].mxu0
      %v3168 = vadd.f32 0.0, %v3167
      %v3169 = vpop.f32.mrb[0].mxu0
      %3170 = vmatprep.mubr.bf16.mxu0 0
      %3171 = vmatmul.mubr.bf16.gmra.mrb[0].mxu0 %v3105
      %v3172 = vpop.f32.mrb[0].mxu0
      %v3173 = vadd.f32 0.0, %v3172
      %v3174 = vpop.f32.mrb[0].mxu0
      %v3175 = vpop.f32.mrb[0].mxu0
      %v3176 = vadd.f32 0.0, %v3175
      %v3177 = vpop.f32.mrb[0].mxu0
      %3178 = vmatprep.mubr.bf16.mxu0 0
      %3179 = vmatmul.mubr.bf16.gmra.mrb[0].mxu0 %v3108
      %v3180 = vpop.f32.mrb[0].mxu0
      %v3181 = vadd.f32 0.0, %v3180
      %v3182 = vpop.f32.mrb[0].mxu0
      %v3183 = vpop.f32.mrb[0].mxu0
      %v3184 = vadd.f32 0.0, %v3183
      %v3185 = vpop.f32.mrb[0].mxu0
      %3186 = vmatprep.mubr.bf16.mxu0 0
      %3187 = vmatmul.mubr.bf16.gmra.mrb[0].mxu0 %v3111
      %v3188 = vpop.f32.mrb[0].mxu0
      %v3189 = vadd.f32 0.0, %v3188
      %v3190 = vpop.f32.mrb[0].mxu0
      %v3191 = vpop.f32.mrb[0].mxu0
      %v3192 = vadd.f32 0.0, %v3191
      %v3193 = vpop.f32.mrb[0].mxu0
      %3194 = vmatprep.mubr.bf16.mxu0 0
      %3195 = vmatmul.mubr.bf16.gmra.mrb[0].mxu0 %v3114
      %v3196 = vpop.f32.mrb[0].mxu0
      %v3197 = vadd.f32 0.0, %v3196
      %v3198 = vpop.f32.mrb[0].mxu0
      %v3199 = vpop.f32.mrb[0].mxu0
      %v3200 = vadd.f32 0.0, %v3199
      %v3201 = vpop.f32.mrb[0].mxu0
      %3202 = vmatprep.mubr.bf16.mxu0 0
      %3203 = vmatmul.mubr.bf16.gmra.mrb[0].mxu0 %v3117
      %v3204 = vpop.f32.mrb[0].mxu0
      %v3205 = vadd.f32 0.0, %v3204
      %v3206 = vpop.f32.mrb[0].mxu0
      %v3207 = vpop.f32.mrb[0].mxu0
      %v3208 = vadd.f32 0.0, %v3207
      %v3209 = vpop.f32.mrb[0].mxu0
      %3210 = vmatprep.mubr.bf16.mxu0 0
      %3211 = vmatmul.mubr.bf16.gmra.mrb[0].mxu0 %v3120
      %v3212 = vpop.f32.mrb[0].mxu0
      %v3213 = vadd.f32 0.0, %v3212
      %v3214 = vpop.f32.mrb[0].mxu0
      %v3215 = vpop.f32.mrb[0].mxu0
      %v3216 = vadd.f32 0.0, %v3215
      %v3217 = vpop.f32.mrb[0].mxu0
      %3218 = vdwg.mxu0
      %v3219 = vadd.f32 %v2971, %v3157
      %v3220 = vadd.f32 %v2972, %v3160
      %v3221 = vadd.f32 %v2973, %v3165
      %v3222 = vadd.f32 %v2974, %v3168
      %v3223 = vadd.f32 %v2975, %v3173
      %v3224 = vadd.f32 %v2976, %v3176
      %v3225 = vadd.f32 %v2977, %v3181
      %v3226 = vadd.f32 %v2978, %v3184
      %v3227 = vadd.f32 %v2979, %v3189
      %v3228 = vadd.f32 %v2980, %v3192
      %v3229 = vadd.f32 %v2981, %v3197
      %v3230 = vadd.f32 %v2982, %v3200
      %v3231 = vadd.f32 %v2983, %v3205
      %v3232 = vadd.f32 %v2984, %v3208
      %v3233 = vadd.f32 %v2985, %v3213
      %v3234 = vadd.f32 %v2986, %v3216
      %s3235 = scalar_lea.vmem %s227, 624
      %v3236 = vld [vmem:[%s3235] sm:$0xf]
      %v3237 = vld [vmem:[%s3235 + $0x4] sm:$0xf]
      %v3238 = vld [vmem:[%s3235 + $0x8] sm:$0xf]
      %v3239 = vld [vmem:[%s3235 + $0xc] sm:$0xf]
      %v3240 = vld [vmem:[%s3235 + $0x10] sm:$0xf]
      %v3241 = vld [vmem:[%s3235 + $0x14] sm:$0xf]
      %v3242 = vld [vmem:[%s3235 + $0x18] sm:$0xf]
      %v3243 = vld [vmem:[%s3235 + $0x1c] sm:$0xf]
      %v3244 = vld [vmem:[%s3235 + $0x20] sm:$0xf]
      %v3245 = vld [vmem:[%s3235 + $0x24] sm:$0xf]
      %v3246 = vld [vmem:[%s3235 + $0x28] sm:$0xf]
      %v3247 = vld [vmem:[%s3235 + $0x2c] sm:$0xf]
      %v3249 = vunpack.c.l.b16 %v3008
      %v3250 = vpack.c.b16 %v3249, %v3249
      %v3251 = vshrl.u32 %v3054, 16
      %v3253 = vshll.u32 %v3054, 16
      %v3255 = vrot.slane %v3253, 1
      %v3256 = vor.u32 %v3251, %v3255
      %v3257 = vshll.u32 %v3055, 16
      %v3259 = vrot.slane %v3257, 1
      %v3260 = vsel %vm337, %v3256, %v3259
      %v3261 = vshrl.u32 %v3055, 16
      %v3263 = vor.u32 %v3261, %v3259
      %v3264 = vshll.u32 %v3056, 16
      %v3266 = vrot.slane %v3264, 1
      %v3267 = vsel %vm337, %v3263, %v3266
      %v3268 = vshrl.u32 %v3056, 16
      %v3270 = vor.u32 %v3268, %v3266
      %v3271 = vshll.u32 %v3057, 16
      %v3273 = vrot.slane %v3271, 1
      %v3274 = vsel %vm337, %v3270, %v3273
      %v3275 = vshrl.u32 %v3057, 16
      %v3277 = vor.u32 %v3275, %v3273
      %v3278 = vshll.u32 %v3058, 16
      %v3280 = vrot.slane %v3278, 1
      %v3281 = vsel %vm337, %v3277, %v3280
      %v3282 = vshrl.u32 %v3058, 16
      %v3284 = vor.u32 %v3282, %v3280
      %v3285 = vshll.u32 %v3059, 16
      %v3287 = vrot.slane %v3285, 1
      %v3288 = vsel %vm337, %v3284, %v3287
      %v3289 = vshrl.u32 %v3059, 16
      %v3291 = vor.u32 %v3289, %v3287
      %v3292 = vshll.u32 %v3060, 16
      %v3294 = vrot.slane %v3292, 1
      %v3295 = vsel %vm337, %v3291, %v3294
      %v3296 = vshrl.u32 %v3060, 16
      %v3298 = vor.u32 %v3296, %v3294
      %v3299 = vshll.u32 %v3061, 16
      %v3301 = vrot.slane %v3299, 1
      %v3302 = vsel %vm337, %v3298, %v3301
      %v3303 = vshrl.u32 %v3061, 16
      %v3305 = vor.u32 %v3303, %v3301
      %v3307 = vshll.u32 %v3250, 16
      %v3309 = vrot.slane %v3307, 1
      %v3310 = vsel %vm337, %v3305, %v3309
      %v3323 = vunpack.c.l.b16 %v3236
      %v3324 = vunpack.c.l.b16 %v3237
      %v3325 = vunpack.c.l.b16 %v3238
      %v3326 = vunpack.c.l.b16 %v3239
      %v3327 = vunpack.c.l.b16 %v3240
      %v3328 = vunpack.c.l.b16 %v3241
      %v3329 = vunpack.c.l.b16 %v3242
      %v3330 = vunpack.c.l.b16 %v3243
      %v3331 = vunpack.c.l.b16 %v3244
      %v3332 = vunpack.c.l.b16 %v3245
      %v3333 = vunpack.c.l.b16 %v3246
      %v3334 = vunpack.c.l.b16 %v3247
      %v3335 = vpack.c.b16 %v3324, %v3323
      %v3336 = vpack.c.b16 %v3326, %v3325
      %v3337 = vpack.c.b16 %v3328, %v3327
      %v3338 = vpack.c.b16 %v3330, %v3329
      %v3339 = vpack.c.b16 %v3332, %v3331
      %v3340 = vpack.c.b16 %v3334, %v3333
      %v3348 = vsel %vm442, %v3260, 0
      %v3351 = vsel %vm442, %v3267, 0
      %v3354 = vsel %vm442, %v3274, 0
      %v3357 = vsel %vm442, %v3281, 0
      %v3360 = vsel %vm442, %v3288, 0
      %v3363 = vsel %vm442, %v3295, 0
      %v3366 = vsel %vm442, %v3302, 0
      %v3369 = vsel %vm442, %v3310, 0
      %3371 = vmatprep.subr.bf16.mxu0 0
      %3372 = vmatpush1.bf16.msra.mxu0 %v3335
      %3373 = vmatprep.subr.bf16.mxu0 0
      %3374 = vmatpush1.bf16.msra.mxu0 %v3336
      %3375 = vmatprep.subr.bf16.mxu0 0
      %3376 = vmatpush1.bf16.msra.mxu0 %v3337
      %3377 = vmatprep.subr.bf16.mxu0 0
      %3378 = vmatpush1.bf16.msra.mxu0 %v3338
      %3379 = vmatprep.subr.bf16.mxu0 0
      %3380 = vmatpush1.bf16.msra.mxu0 %v3339
      %3381 = vmatprep.subr.bf16.mxu0 0
      %3382 = vmatpush1.bf16.msra.mxu0 %v3340
      %3383 = vmatprep.subr.bf16.mxu0 0
      %3384 = vmatpush1.bf16.msra.mxu0 0
      %3385 = vmatprep.subr.bf16.mxu0 0
      %3386 = vmatpush1.bf16.msra.mxu0 0
      %3387 = vmatprep.subr.bf16.mxu0 0
      %3388 = vmatpush1.bf16.msra.mxu0 0
      %3389 = vmatprep.subr.bf16.mxu0 0
      %3390 = vmatpush1.bf16.msra.mxu0 0
      %3391 = vmatprep.subr.bf16.mxu0 0
      %3392 = vmatpush1.bf16.msra.mxu0 0
      %3393 = vmatprep.subr.bf16.mxu0 0
      %3394 = vmatpush1.bf16.msra.mxu0 0
      %3395 = vmatprep.subr.bf16.mxu0 0
      %3396 = vmatpush1.bf16.msra.mxu0 0
      %3397 = vmatprep.subr.bf16.mxu0 0
      %3398 = vmatpush1.bf16.msra.mxu0 0
      %3399 = vmatprep.subr.bf16.mxu0 0
      %3400 = vmatpush1.bf16.msra.mxu0 0
      %3401 = vmatprep.subr.bf16.mxu0 0
      %3402 = vmatpush1.bf16.msra.mxu0 0
      %3403 = vmatprep.mubr.bf16.mxu0 0
      %3404 = vmatmul.mubr.bf16.gmra.mrb[0].mxu0 %v3348
      %v3405 = vpop.f32.mrb[0].mxu0
      %v3406 = vadd.f32 0.0, %v3405
      %v3407 = vpop.f32.mrb[0].mxu0
      %v3408 = vpop.f32.mrb[0].mxu0
      %v3409 = vadd.f32 0.0, %v3408
      %v3410 = vpop.f32.mrb[0].mxu0
      %3411 = vmatprep.mubr.bf16.mxu0 0
      %3412 = vmatmul.mubr.bf16.gmra.mrb[0].mxu0 %v3351
      %v3413 = vpop.f32.mrb[0].mxu0
      %v3414 = vadd.f32 0.0, %v3413
      %v3415 = vpop.f32.mrb[0].mxu0
      %v3416 = vpop.f32.mrb[0].mxu0
      %v3417 = vadd.f32 0.0, %v3416
      %v3418 = vpop.f32.mrb[0].mxu0
      %3419 = vmatprep.mubr.bf16.mxu0 0
      %3420 = vmatmul.mubr.bf16.gmra.mrb[0].mxu0 %v3354
      %v3421 = vpop.f32.mrb[0].mxu0
      %v3422 = vadd.f32 0.0, %v3421
      %v3423 = vpop.f32.mrb[0].mxu0
      %v3424 = vpop.f32.mrb[0].mxu0
      %v3425 = vadd.f32 0.0, %v3424
      %v3426 = vpop.f32.mrb[0].mxu0
      %3427 = vmatprep.mubr.bf16.mxu0 0
      %3428 = vmatmul.mubr.bf16.gmra.mrb[0].mxu0 %v3357
      %v3429 = vpop.f32.mrb[0].mxu0
      %v3430 = vadd.f32 0.0, %v3429
      %v3431 = vpop.f32.mrb[0].mxu0
      %v3432 = vpop.f32.mrb[0].mxu0
      %v3433 = vadd.f32 0.0, %v3432
      %v3434 = vpop.f32.mrb[0].mxu0
      %3435 = vmatprep.mubr.bf16.mxu0 0
      %3436 = vmatmul.mubr.bf16.gmra.mrb[0].mxu0 %v3360
      %v3437 = vpop.f32.mrb[0].mxu0
      %v3438 = vadd.f32 0.0, %v3437
      %v3439 = vpop.f32.mrb[0].mxu0
      %v3440 = vpop.f32.mrb[0].mxu0
      %v3441 = vadd.f32 0.0, %v3440
      %v3442 = vpop.f32.mrb[0].mxu0
      %3443 = vmatprep.mubr.bf16.mxu0 0
      %3444 = vmatmul.mubr.bf16.gmra.mrb[0].mxu0 %v3363
      %v3445 = vpop.f32.mrb[0].mxu0
      %v3446 = vadd.f32 0.0, %v3445
      %v3447 = vpop.f32.mrb[0].mxu0
      %v3448 = vpop.f32.mrb[0].mxu0
      %v3449 = vadd.f32 0.0, %v3448
      %v3450 = vpop.f32.mrb[0].mxu0
      %3451 = vmatprep.mubr.bf16.mxu0 0
      %3452 = vmatmul.mubr.bf16.gmra.mrb[0].mxu0 %v3366
      %v3453 = vpop.f32.mrb[0].mxu0
      %v3454 = vadd.f32 0.0, %v3453
      %v3455 = vpop.f32.mrb[0].mxu0
      %v3456 = vpop.f32.mrb[0].mxu0
      %v3457 = vadd.f32 0.0, %v3456
      %v3458 = vpop.f32.mrb[0].mxu0
      %3459 = vmatprep.mubr.bf16.mxu0 0
      %3460 = vmatmul.mubr.bf16.gmra.mrb[0].mxu0 %v3369
      %v3461 = vpop.f32.mrb[0].mxu0
      %v3462 = vadd.f32 0.0, %v3461
      %v3463 = vpop.f32.mrb[0].mxu0
      %v3464 = vpop.f32.mrb[0].mxu0
      %v3465 = vadd.f32 0.0, %v3464
      %v3466 = vpop.f32.mrb[0].mxu0
      %3467 = vdwg.mxu0
      %v3468 = vadd.f32 %v3219, %v3406
      %v3469 = vadd.f32 %v3220, %v3409
      %v3470 = vadd.f32 %v3221, %v3414
      %v3471 = vadd.f32 %v3222, %v3417
      %v3472 = vadd.f32 %v3223, %v3422
      %v3473 = vadd.f32 %v3224, %v3425
      %v3474 = vadd.f32 %v3225, %v3430
      %v3475 = vadd.f32 %v3226, %v3433
      %v3476 = vadd.f32 %v3227, %v3438
      %v3477 = vadd.f32 %v3228, %v3441
      %v3478 = vadd.f32 %v3229, %v3446
      %v3479 = vadd.f32 %v3230, %v3449
      %v3480 = vadd.f32 %v3231, %v3454
      %v3481 = vadd.f32 %v3232, %v3457
      %v3482 = vadd.f32 %v3233, %v3462
      %v3483 = vadd.f32 %v3234, %v3465
      %s3484 = scalar_lea.vmem %s227, 672
      %v3485 = vld [vmem:[%s3484] sm:$0xf]
      %v3486 = vld [vmem:[%s3484 + $0x4] sm:$0xf]
      %v3487 = vld [vmem:[%s3484 + $0x8] sm:$0xf]
      %v3488 = vld [vmem:[%s3484 + $0xc] sm:$0xf]
      %v3489 = vld [vmem:[%s3484 + $0x10] sm:$0xf]
      %v3490 = vld [vmem:[%s3484 + $0x14] sm:$0xf]
      %v3491 = vld [vmem:[%s3484 + $0x18] sm:$0xf]
      %v3492 = vld [vmem:[%s3484 + $0x1c] sm:$0xf]
      %v3493 = vld [vmem:[%s3484 + $0x20] sm:$0xf]
      %v3494 = vld [vmem:[%s3484 + $0x24] sm:$0xf]
      %v3495 = vld [vmem:[%s3484 + $0x28] sm:$0xf]
      %v3496 = vld [vmem:[%s3484 + $0x2c] sm:$0xf]
      %v3497 = vrot.slane %v3054, 1
      %v3498 = vrot.slane %v3055, 1
      %v3499 = vsel %vm726, %v3497, %v3498
      %v3500 = vrot.slane %v3056, 1
      %v3501 = vsel %vm726, %v3498, %v3500
      %v3502 = vrot.slane %v3057, 1
      %v3503 = vsel %vm726, %v3500, %v3502
      %v3504 = vrot.slane %v3058, 1
      %v3505 = vsel %vm726, %v3502, %v3504
      %v3506 = vrot.slane %v3059, 1
      %v3507 = vsel %vm726, %v3504, %v3506
      %v3508 = vrot.slane %v3060, 1
      %v3509 = vsel %vm726, %v3506, %v3508
      %v3510 = vrot.slane %v3061, 1
      %v3511 = vsel %vm726, %v3508, %v3510
      %v3512 = vrot.slane %v3250, 1
      %v3513 = vsel %vm726, %v3510, %v3512
      %v3526 = vunpack.c.l.b16 %v3485
      %v3527 = vunpack.c.l.b16 %v3486
      %v3528 = vunpack.c.l.b16 %v3487
      %v3529 = vunpack.c.l.b16 %v3488
      %v3530 = vunpack.c.l.b16 %v3489
      %v3531 = vunpack.c.l.b16 %v3490
      %v3532 = vunpack.c.l.b16 %v3491
      %v3533 = vunpack.c.l.b16 %v3492
      %v3534 = vunpack.c.l.b16 %v3493
      %v3535 = vunpack.c.l.b16 %v3494
      %v3536 = vunpack.c.l.b16 %v3495
      %v3537 = vunpack.c.l.b16 %v3496
      %v3538 = vpack.c.b16 %v3527, %v3526
      %v3539 = vpack.c.b16 %v3529, %v3528
      %v3540 = vpack.c.b16 %v3531, %v3530
      %v3541 = vpack.c.b16 %v3533, %v3532
      %v3542 = vpack.c.b16 %v3535, %v3534
      %v3543 = vpack.c.b16 %v3537, %v3536
      %v3551 = vsel %vm442, %v3499, 0
      %v3554 = vsel %vm442, %v3501, 0
      %v3557 = vsel %vm442, %v3503, 0
      %v3560 = vsel %vm442, %v3505, 0
      %v3563 = vsel %vm442, %v3507, 0
      %v3566 = vsel %vm442, %v3509, 0
      %v3569 = vsel %vm442, %v3511, 0
      %v3572 = vsel %vm442, %v3513, 0
      %3574 = vmatprep.subr.bf16.mxu0 0
      %3575 = vmatpush1.bf16.msra.mxu0 %v3538
      %3576 = vmatprep.subr.bf16.mxu0 0
      %3577 = vmatpush1.bf16.msra.mxu0 %v3539
      %3578 = vmatprep.subr.bf16.mxu0 0
      %3579 = vmatpush1.bf16.msra.mxu0 %v3540
      %3580 = vmatprep.subr.bf16.mxu0 0
      %3581 = vmatpush1.bf16.msra.mxu0 %v3541
      %3582 = vmatprep.subr.bf16.mxu0 0
      %3583 = vmatpush1.bf16.msra.mxu0 %v3542
      %3584 = vmatprep.subr.bf16.mxu0 0
      %3585 = vmatpush1.bf16.msra.mxu0 %v3543
      %3586 = vmatprep.subr.bf16.mxu0 0
      %3587 = vmatpush1.bf16.msra.mxu0 0
      %3588 = vmatprep.subr.bf16.mxu0 0
      %3589 = vmatpush1.bf16.msra.mxu0 0
      %3590 = vmatprep.subr.bf16.mxu0 0
      %3591 = vmatpush1.bf16.msra.mxu0 0
      %3592 = vmatprep.subr.bf16.mxu0 0
      %3593 = vmatpush1.bf16.msra.mxu0 0
      %3594 = vmatprep.subr.bf16.mxu0 0
      %3595 = vmatpush1.bf16.msra.mxu0 0
      %3596 = vmatprep.subr.bf16.mxu0 0
      %3597 = vmatpush1.bf16.msra.mxu0 0
      %3598 = vmatprep.subr.bf16.mxu0 0
      %3599 = vmatpush1.bf16.msra.mxu0 0
      %3600 = vmatprep.subr.bf16.mxu0 0
      %3601 = vmatpush1.bf16.msra.mxu0 0
      %3602 = vmatprep.subr.bf16.mxu0 0
      %3603 = vmatpush1.bf16.msra.mxu0 0
      %3604 = vmatprep.subr.bf16.mxu0 0
      %3605 = vmatpush1.bf16.msra.mxu0 0
      %3606 = vmatprep.mubr.bf16.mxu0 0
      %3607 = vmatmul.mubr.bf16.gmra.mrb[0].mxu0 %v3551
      %v3608 = vpop.f32.mrb[0].mxu0
      %v3609 = vadd.f32 0.0, %v3608
      %v3610 = vpop.f32.mrb[0].mxu0
      %v3611 = vpop.f32.mrb[0].mxu0
      %v3612 = vadd.f32 0.0, %v3611
      %v3613 = vpop.f32.mrb[0].mxu0
      %3614 = vmatprep.mubr.bf16.mxu0 0
      %3615 = vmatmul.mubr.bf16.gmra.mrb[0].mxu0 %v3554
      %v3616 = vpop.f32.mrb[0].mxu0
      %v3617 = vadd.f32 0.0, %v3616
      %v3618 = vpop.f32.mrb[0].mxu0
      %v3619 = vpop.f32.mrb[0].mxu0
      %v3620 = vadd.f32 0.0, %v3619
      %v3621 = vpop.f32.mrb[0].mxu0
      %3622 = vmatprep.mubr.bf16.mxu0 0
      %3623 = vmatmul.mubr.bf16.gmra.mrb[0].mxu0 %v3557
      %v3624 = vpop.f32.mrb[0].mxu0
      %v3625 = vadd.f32 0.0, %v3624
      %v3626 = vpop.f32.mrb[0].mxu0
      %v3627 = vpop.f32.mrb[0].mxu0
      %v3628 = vadd.f32 0.0, %v3627
      %v3629 = vpop.f32.mrb[0].mxu0
      %3630 = vmatprep.mubr.bf16.mxu0 0
      %3631 = vmatmul.mubr.bf16.gmra.mrb[0].mxu0 %v3560
      %v3632 = vpop.f32.mrb[0].mxu0
      %v3633 = vadd.f32 0.0, %v3632
      %v3634 = vpop.f32.mrb[0].mxu0
      %v3635 = vpop.f32.mrb[0].mxu0
      %v3636 = vadd.f32 0.0, %v3635
      %v3637 = vpop.f32.mrb[0].mxu0
      %3638 = vmatprep.mubr.bf16.mxu0 0
      %3639 = vmatmul.mubr.bf16.gmra.mrb[0].mxu0 %v3563
      %v3640 = vpop.f32.mrb[0].mxu0
      %v3641 = vadd.f32 0.0, %v3640
      %v3642 = vpop.f32.mrb[0].mxu0
      %v3643 = vpop.f32.mrb[0].mxu0
      %v3644 = vadd.f32 0.0, %v3643
      %v3645 = vpop.f32.mrb[0].mxu0
      %3646 = vmatprep.mubr.bf16.mxu0 0
      %3647 = vmatmul.mubr.bf16.gmra.mrb[0].mxu0 %v3566
      %v3648 = vpop.f32.mrb[0].mxu0
      %v3649 = vadd.f32 0.0, %v3648
      %v3650 = vpop.f32.mrb[0].mxu0
      %v3651 = vpop.f32.mrb[0].mxu0
      %v3652 = vadd.f32 0.0, %v3651
      %v3653 = vpop.f32.mrb[0].mxu0
      %3654 = vmatprep.mubr.bf16.mxu0 0
      %3655 = vmatmul.mubr.bf16.gmra.mrb[0].mxu0 %v3569
      %v3656 = vpop.f32.mrb[0].mxu0
      %v3657 = vadd.f32 0.0, %v3656
      %v3658 = vpop.f32.mrb[0].mxu0
      %v3659 = vpop.f32.mrb[0].mxu0
      %v3660 = vadd.f32 0.0, %v3659
      %v3661 = vpop.f32.mrb[0].mxu0
      %3662 = vmatprep.mubr.bf16.mxu0 0
      %3663 = vmatmul.mubr.bf16.gmra.mrb[0].mxu0 %v3572
      %v3664 = vpop.f32.mrb[0].mxu0
      %v3665 = vadd.f32 0.0, %v3664
      %v3666 = vpop.f32.mrb[0].mxu0
      %v3667 = vpop.f32.mrb[0].mxu0
      %v3668 = vadd.f32 0.0, %v3667
      %v3669 = vpop.f32.mrb[0].mxu0
      %3670 = vdwg.mxu0
      %v3671 = vadd.f32 %v3468, %v3609
      %v3672 = vadd.f32 %v3469, %v3612
      %v3673 = vadd.f32 %v3470, %v3617
      %v3674 = vadd.f32 %v3471, %v3620
      %v3675 = vadd.f32 %v3472, %v3625
      %v3676 = vadd.f32 %v3473, %v3628
      %v3677 = vadd.f32 %v3474, %v3633
      %v3678 = vadd.f32 %v3475, %v3636
      %v3679 = vadd.f32 %v3476, %v3641
      %v3680 = vadd.f32 %v3477, %v3644
      %v3681 = vadd.f32 %v3478, %v3649
      %v3682 = vadd.f32 %v3479, %v3652
      %v3683 = vadd.f32 %v3480, %v3657
      %v3684 = vadd.f32 %v3481, %v3660
      %v3685 = vadd.f32 %v3482, %v3665
      %v3686 = vadd.f32 %v3483, %v3668
      %s3687 = scalar_lea.vmem %s227, 720
      %v3688 = vld [vmem:[%s3687] sm:$0xf]
      %v3689 = vld [vmem:[%s3687 + $0x4] sm:$0xf]
      %v3690 = vld [vmem:[%s3687 + $0x8] sm:$0xf]
      %v3691 = vld [vmem:[%s3687 + $0xc] sm:$0xf]
      %v3692 = vld [vmem:[%s3687 + $0x10] sm:$0xf]
      %v3693 = vld [vmem:[%s3687 + $0x14] sm:$0xf]
      %v3694 = vld [vmem:[%s3687 + $0x18] sm:$0xf]
      %v3695 = vld [vmem:[%s3687 + $0x1c] sm:$0xf]
      %v3696 = vld [vmem:[%s3687 + $0x20] sm:$0xf]
      %v3697 = vld [vmem:[%s3687 + $0x24] sm:$0xf]
      %v3698 = vld [vmem:[%s3687 + $0x28] sm:$0xf]
      %v3699 = vld [vmem:[%s3687 + $0x2c] sm:$0xf]
      %v3700 = vrot.slane %v3251, 1
      %v3701 = vrot.slane %v3253, 2
      %v3702 = vor.u32 %v3700, %v3701
      %v3703 = vrot.slane %v3261, 1
      %v3704 = vrot.slane %v3257, 2
      %v3705 = vor.u32 %v3703, %v3704
      %v3706 = vsel %vm930, %v3702, %v3705
      %v3707 = vrot.slane %v3268, 1
      %v3708 = vrot.slane %v3264, 2
      %v3709 = vor.u32 %v3707, %v3708
      %v3710 = vsel %vm930, %v3705, %v3709
      %v3711 = vrot.slane %v3275, 1
      %v3712 = vrot.slane %v3271, 2
      %v3713 = vor.u32 %v3711, %v3712
      %v3714 = vsel %vm930, %v3709, %v3713
      %v3715 = vrot.slane %v3282, 1
      %v3716 = vrot.slane %v3278, 2
      %v3717 = vor.u32 %v3715, %v3716
      %v3718 = vsel %vm930, %v3713, %v3717
      %v3719 = vrot.slane %v3289, 1
      %v3720 = vrot.slane %v3285, 2
      %v3721 = vor.u32 %v3719, %v3720
      %v3722 = vsel %vm930, %v3717, %v3721
      %v3723 = vrot.slane %v3296, 1
      %v3724 = vrot.slane %v3292, 2
      %v3725 = vor.u32 %v3723, %v3724
      %v3726 = vsel %vm930, %v3721, %v3725
      %v3727 = vrot.slane %v3303, 1
      %v3728 = vrot.slane %v3299, 2
      %v3729 = vor.u32 %v3727, %v3728
      %v3730 = vsel %vm930, %v3725, %v3729
      %v3731 = vshrl.u32 %v3250, 16
      %v3733 = vrot.slane %v3731, 1
      %v3734 = vrot.slane %v3307, 2
      %v3735 = vor.u32 %v3733, %v3734
      %v3736 = vsel %vm930, %v3729, %v3735
      %v3749 = vunpack.c.l.b16 %v3688
      %v3750 = vunpack.c.l.b16 %v3689
      %v3751 = vunpack.c.l.b16 %v3690
      %v3752 = vunpack.c.l.b16 %v3691
      %v3753 = vunpack.c.l.b16 %v3692
      %v3754 = vunpack.c.l.b16 %v3693
      %v3755 = vunpack.c.l.b16 %v3694
      %v3756 = vunpack.c.l.b16 %v3695
      %v3757 = vunpack.c.l.b16 %v3696
      %v3758 = vunpack.c.l.b16 %v3697
      %v3759 = vunpack.c.l.b16 %v3698
      %v3760 = vunpack.c.l.b16 %v3699
      %v3761 = vpack.c.b16 %v3750, %v3749
      %v3762 = vpack.c.b16 %v3752, %v3751
      %v3763 = vpack.c.b16 %v3754, %v3753
      %v3764 = vpack.c.b16 %v3756, %v3755
      %v3765 = vpack.c.b16 %v3758, %v3757
      %v3766 = vpack.c.b16 %v3760, %v3759
      %v3774 = vsel %vm442, %v3706, 0
      %v3777 = vsel %vm442, %v3710, 0
      %v3780 = vsel %vm442, %v3714, 0
      %v3783 = vsel %vm442, %v3718, 0
      %v3786 = vsel %vm442, %v3722, 0
      %v3789 = vsel %vm442, %v3726, 0
      %v3792 = vsel %vm442, %v3730, 0
      %v3795 = vsel %vm442, %v3736, 0
      %3797 = vmatprep.subr.bf16.mxu0 0
      %3798 = vmatpush1.bf16.msra.mxu0 %v3761
      %3799 = vmatprep.subr.bf16.mxu0 0
      %3800 = vmatpush1.bf16.msra.mxu0 %v3762
      %3801 = vmatprep.subr.bf16.mxu0 0
      %3802 = vmatpush1.bf16.msra.mxu0 %v3763
      %3803 = vmatprep.subr.bf16.mxu0 0
      %3804 = vmatpush1.bf16.msra.mxu0 %v3764
      %3805 = vmatprep.subr.bf16.mxu0 0
      %3806 = vmatpush1.bf16.msra.mxu0 %v3765
      %3807 = vmatprep.subr.bf16.mxu0 0
      %3808 = vmatpush1.bf16.msra.mxu0 %v3766
      %3809 = vmatprep.subr.bf16.mxu0 0
      %3810 = vmatpush1.bf16.msra.mxu0 0
      %3811 = vmatprep.subr.bf16.mxu0 0
      %3812 = vmatpush1.bf16.msra.mxu0 0
      %3813 = vmatprep.subr.bf16.mxu0 0
      %3814 = vmatpush1.bf16.msra.mxu0 0
      %3815 = vmatprep.subr.bf16.mxu0 0
      %3816 = vmatpush1.bf16.msra.mxu0 0
      %3817 = vmatprep.subr.bf16.mxu0 0
      %3818 = vmatpush1.bf16.msra.mxu0 0
      %3819 = vmatprep.subr.bf16.mxu0 0
      %3820 = vmatpush1.bf16.msra.mxu0 0
      %3821 = vmatprep.subr.bf16.mxu0 0
      %3822 = vmatpush1.bf16.msra.mxu0 0
      %3823 = vmatprep.subr.bf16.mxu0 0
      %3824 = vmatpush1.bf16.msra.mxu0 0
      %3825 = vmatprep.subr.bf16.mxu0 0
      %3826 = vmatpush1.bf16.msra.mxu0 0
      %3827 = vmatprep.subr.bf16.mxu0 0
      %3828 = vmatpush1.bf16.msra.mxu0 0
      %3829 = vmatprep.mubr.bf16.mxu0 0
      %3830 = vmatmul.mubr.bf16.gmra.mrb[0].mxu0 %v3774
      %v3831 = vpop.f32.mrb[0].mxu0
      %v3832 = vadd.f32 0.0, %v3831
      %v3833 = vpop.f32.mrb[0].mxu0
      %v3834 = vpop.f32.mrb[0].mxu0
      %v3835 = vadd.f32 0.0, %v3834
      %v3836 = vpop.f32.mrb[0].mxu0
      %3837 = vmatprep.mubr.bf16.mxu0 0
      %3838 = vmatmul.mubr.bf16.gmra.mrb[0].mxu0 %v3777
      %v3839 = vpop.f32.mrb[0].mxu0
      %v3840 = vadd.f32 0.0, %v3839
      %v3841 = vpop.f32.mrb[0].mxu0
      %v3842 = vpop.f32.mrb[0].mxu0
      %v3843 = vadd.f32 0.0, %v3842
      %v3844 = vpop.f32.mrb[0].mxu0
      %3845 = vmatprep.mubr.bf16.mxu0 0
      %3846 = vmatmul.mubr.bf16.gmra.mrb[0].mxu0 %v3780
      %v3847 = vpop.f32.mrb[0].mxu0
      %v3848 = vadd.f32 0.0, %v3847
      %v3849 = vpop.f32.mrb[0].mxu0
      %v3850 = vpop.f32.mrb[0].mxu0
      %v3851 = vadd.f32 0.0, %v3850
      %v3852 = vpop.f32.mrb[0].mxu0
      %3853 = vmatprep.mubr.bf16.mxu0 0
      %3854 = vmatmul.mubr.bf16.gmra.mrb[0].mxu0 %v3783
      %v3855 = vpop.f32.mrb[0].mxu0
      %v3856 = vadd.f32 0.0, %v3855
      %v3857 = vpop.f32.mrb[0].mxu0
      %v3858 = vpop.f32.mrb[0].mxu0
      %v3859 = vadd.f32 0.0, %v3858
      %v3860 = vpop.f32.mrb[0].mxu0
      %3861 = vmatprep.mubr.bf16.mxu0 0
      %3862 = vmatmul.mubr.bf16.gmra.mrb[0].mxu0 %v3786
      %v3863 = vpop.f32.mrb[0].mxu0
      %v3864 = vadd.f32 0.0, %v3863
      %v3865 = vpop.f32.mrb[0].mxu0
      %v3866 = vpop.f32.mrb[0].mxu0
      %v3867 = vadd.f32 0.0, %v3866
      %v3868 = vpop.f32.mrb[0].mxu0
      %3869 = vmatprep.mubr.bf16.mxu0 0
      %3870 = vmatmul.mubr.bf16.gmra.mrb[0].mxu0 %v3789
      %v3871 = vpop.f32.mrb[0].mxu0
      %v3872 = vadd.f32 0.0, %v3871
      %v3873 = vpop.f32.mrb[0].mxu0
      %v3874 = vpop.f32.mrb[0].mxu0
      %v3875 = vadd.f32 0.0, %v3874
      %v3876 = vpop.f32.mrb[0].mxu0
      %3877 = vmatprep.mubr.bf16.mxu0 0
      %3878 = vmatmul.mubr.bf16.gmra.mrb[0].mxu0 %v3792
      %v3879 = vpop.f32.mrb[0].mxu0
      %v3880 = vadd.f32 0.0, %v3879
      %v3881 = vpop.f32.mrb[0].mxu0
      %v3882 = vpop.f32.mrb[0].mxu0
      %v3883 = vadd.f32 0.0, %v3882
      %v3884 = vpop.f32.mrb[0].mxu0
      %3885 = vmatprep.mubr.bf16.mxu0 0
      %3886 = vmatmul.mubr.bf16.gmra.mrb[0].mxu0 %v3795
      %v3887 = vpop.f32.mrb[0].mxu0
      %v3888 = vadd.f32 0.0, %v3887
      %v3889 = vpop.f32.mrb[0].mxu0
      %v3890 = vpop.f32.mrb[0].mxu0
      %v3891 = vadd.f32 0.0, %v3890
      %v3892 = vpop.f32.mrb[0].mxu0
      %3893 = vdwg.mxu0
      %v3894 = vadd.f32 %v3671, %v3832
      %v3895 = vadd.f32 %v3672, %v3835
      %v3896 = vadd.f32 %v3673, %v3840
      %v3897 = vadd.f32 %v3674, %v3843
      %v3898 = vadd.f32 %v3675, %v3848
      %v3899 = vadd.f32 %v3676, %v3851
      %v3900 = vadd.f32 %v3677, %v3856
      %v3901 = vadd.f32 %v3678, %v3859
      %v3902 = vadd.f32 %v3679, %v3864
      %v3903 = vadd.f32 %v3680, %v3867
      %v3904 = vadd.f32 %v3681, %v3872
      %v3905 = vadd.f32 %v3682, %v3875
      %v3906 = vadd.f32 %v3683, %v3880
      %v3907 = vadd.f32 %v3684, %v3883
      %v3908 = vadd.f32 %v3685, %v3888
      %v3909 = vadd.f32 %v3686, %v3891
      %3910 = vst [vmem:[%s244] sm:$0xff] %v3894
      %3911 = vst [vmem:[%s244 + $0x8] sm:$0xff] %v3895
      %3912 = vst [vmem:[%s244 + $0x10] sm:$0xff] %v3896
      %3913 = vst [vmem:[%s244 + $0x18] sm:$0xff] %v3897
      %3914 = vst [vmem:[%s244 + $0x20] sm:$0xff] %v3898
      %3915 = vst [vmem:[%s244 + $0x28] sm:$0xff] %v3899
      %3916 = vst [vmem:[%s244 + $0x30] sm:$0xff] %v3900
      %3917 = vst [vmem:[%s244 + $0x38] sm:$0xff] %v3901
      %3918 = vst [vmem:[%s244 + $0x40] sm:$0xff] %v3902
      %3919 = vst [vmem:[%s244 + $0x48] sm:$0xff] %v3903
      %3920 = vst [vmem:[%s244 + $0x50] sm:$0xff] %v3904
      %3921 = vst [vmem:[%s244 + $0x58] sm:$0xff] %v3905
      %3922 = vst [vmem:[%s244 + $0x60] sm:$0xff] %v3906
      %3923 = vst [vmem:[%s244 + $0x68] sm:$0xff] %v3907
      %3924 = vst [vmem:[%s244 + $0x70] sm:$0xff] %v3908
      %3925 = vst [vmem:[%s244 + $0x78] sm:$0xff] %v3909
      %s3926 = smul.u32 16, %s22
      %p3927 = scmp.lt.s32.totalorder %s19, 1
      %s3928 = scalar_select %p3927, %s19, 1
      %p3929 = scmp.lt.s32.totalorder %s20, 3
      %s3930 = scalar_select %p3929, %s20, 3
      %p3931 = scmp.lt.s32.totalorder %s21, 0
      %s3932 = scalar_select %p3931, %s21, 0
      %p3933 = scmp.lt.s32.totalorder %s3926, 31
      %s3934 = scalar_select %p3933, %s3926, 31
      %s3935 = smul.addr %s3932, 32
      %s3936 = sadd.s32 %s3934, %s3935
      %s3937 = smul.addr %s3930, 32
      %s3938 = sadd.s32 %s3936, %s3937
      %s3939 = smul.addr %s3928, 128
      %s3940 = sadd.s32 %s3938, %s3939
      %s3941 = smul.addr %s3940, 8
      %s3942 = scalar_lea.vmem %s2, %s3941
      // Predicated region
      $region29: #{d_zfnet_forward.1} parent=27 // pred_check
        %p3943 = pneg %p119
      $region30: #{d_zfnet_forward.1} parent=27 // pred_check_branch
        %3945 = sbr.rel (%p3943) target = $region32
      $region31: #{d_zfnet_forward.1} parent=27 // pred_region
        %s3946 = smul.u32 16, %s22
      $region32: #{d_zfnet_forward.1} parent=27 // pred_fallthru
        _
    $region28: #{d_zfnet_forward.1} parent=5 // pred_fallthru
      _
    %p3947 = scmp.le.s32.totalorder 2, %s8
    // Predicated region
    $region33: #{d_zfnet_forward.1} parent=5 // pred_check
      %p3948 = pneg %p3947
    $region34: #{d_zfnet_forward.1} parent=5 // pred_check_branch
      %3950 = sbr.rel (%p3948) target = $region36
    $region35: #{d_zfnet_forward.1} parent=5 // pred_region
      %s3951 = ssub.s32 %s8, 2
      // Predicated region
      $region37: #{d_zfnet_forward.1} parent=35 // pred_check
        %p3952 = pneg %p125
      $region38: #{d_zfnet_forward.1} parent=35 // pred_check_branch
        %3954 = sbr.rel (%p3952) target = $region40
      $region39: #{d_zfnet_forward.1} parent=35 // pred_region
        %s3955 = smul.u32 16, %s26
        %p3956 = scmp.lt.s32.totalorder %s23, 1
        %s3957 = scalar_select %p3956, %s23, 1
        %p3958 = scmp.lt.s32.totalorder %s24, 3
        %s3959 = scalar_select %p3958, %s24, 3
        %p3960 = scmp.lt.s32.totalorder %s25, 0
        %s3961 = scalar_select %p3960, %s25, 0
        %p3962 = scmp.lt.s32.totalorder %s3955, 31
        %s3963 = scalar_select %p3962, %s3955, 31
        %s3964 = smul.addr %s3961, 32
        %s3965 = sadd.s32 %s3963, %s3964
        %s3966 = smul.addr %s3959, 32
        %s3967 = sadd.s32 %s3965, %s3966
        %s3968 = smul.addr %s3957, 128
        %s3969 = sadd.s32 %s3967, %s3968
        %s3970 = smul.addr %s3969, 8
        %s3971 = scalar_lea.vmem %s2, %s3970
      $region40: #{d_zfnet_forward.1} parent=35 // pred_fallthru
        _
    $region36: #{d_zfnet_forward.1} parent=5 // pred_fallthru
      _
  $region6: #{d_zfnet_forward.1} parent=0 // loop_footer
    %s12 = sadd.s32 1, %s8
  $region7: #{d_zfnet_forward.1} parent=0 // loop_footer_branch
    %7 = sbr.rel target = $region3
  $region8: #{d_zfnet_forward.1} parent=0 // loop_exit
    _

</llo_original>
